<compile_context>
chip_gen: v5e
topology: v5e:2x2
jax: 0.10.0
libtpu: 0.0.40
codegen_flags: <defaults>
</compile_context>

<pallas_src>
import functools
import math

import jax
import jax.numpy as jnp
from jax.experimental import pallas as pl
from jax.experimental.pallas import tpu as pltpu

NEG_SLOPE = 0.05
BN_EPS = 1e-5
LANE = 128


def _round_up(n, m):
    return ((n + m - 1) // m) * m


# ---------------------------------------------------------------------------
# Feature probe + per-generation budgets
# ---------------------------------------------------------------------------
_BUFFERED1_OK = None


def _probe_kernel(x_ref, o_ref):
    o_ref[...] = x_ref[...] + 1.0


def _buffered_one_supported():
    """True iff pl.BlockSpec(..., pipeline_mode=pl.Buffered(1)) compiles & runs."""
    global _BUFFERED1_OK
    if _BUFFERED1_OK is None:
        try:
            with jax.ensure_compile_time_eval():
                spec = pl.BlockSpec((8, LANE), lambda i: (0, 0),
                                    pipeline_mode=pl.Buffered(1))
                out = pl.pallas_call(
                    _probe_kernel,
                    grid=(1,),
                    in_specs=[spec],
                    out_specs=pl.BlockSpec((8, LANE), lambda i: (0, 0)),
                    out_shape=jax.ShapeDtypeStruct((8, LANE), jnp.float32),
                )(jnp.zeros((8, LANE), jnp.float32))
                jax.block_until_ready(out)
            _BUFFERED1_OK = True
        except Exception:
            _BUFFERED1_OK = False
    return _BUFFERED1_OK


def _const_spec(shape):
    """BlockSpec for a grid-invariant operand (weights/bias/mask/stats).

    Single-buffered when supported: default double-buffering of operands whose
    index_map never changes is pure VMEM waste (matters at production mid_dim
    and on v7x's 64 MiB VMEM).
    """
    nd = len(shape)
    index_map = lambda b: (0,) * nd
    if _buffered_one_supported():
        return pl.BlockSpec(shape, index_map, pipeline_mode=pl.Buffered(1))
    return pl.BlockSpec(shape, index_map)


def _vmem_limit_bytes():
    """Generation-aware VMEM budget (v5e/v6e: 128 MiB physical, v7x: 64 MiB)."""
    try:
        cap = int(getattr(pltpu.get_tpu_info(), "vmem_capacity_bytes",
                          128 * 1024 * 1024))
    except Exception:
        return 32 * 1024 * 1024
    if cap <= 64 * 1024 * 1024:
        return 48 * 1024 * 1024       # v7x-class: leave headroom under 64 MiB
    return 100 * 1024 * 1024          # v5e / v6e: use the 128 MiB generously


# ---------------------------------------------------------------------------
# Kernels (one pallas_call per Linear layer + a coupling epilogue)
# ---------------------------------------------------------------------------
def _bn_from_partial_stats(stats, inv_b):
    """Full-batch mean / rsqrt(var+eps) from per-block (sum, sumsq) partials."""
    tot = jnp.sum(stats, axis=0)                  # [2, W]
    mean = tot[0:1, :] * inv_b                    # [1, W]
    var = tot[1:2, :] * inv_b - mean * mean       # one-pass biased variance
    return mean, jax.lax.rsqrt(var + BN_EPS)


def _store_partial_stats(stats_ref, h, bb, b_real, need_row_mask):
    """Per-block partial sum / sum-of-squares over the *valid* batch rows."""
    if need_row_mask:
        row = jax.lax.broadcasted_iota(jnp.int32, h.shape, 0) + pl.program_id(0) * bb
        hm = jnp.where(row < b_real, h, 0.0)
    else:
        hm = h
    part = jnp.concatenate(
        [jnp.sum(hm, axis=0, keepdims=True),
         jnp.sum(h * hm, axis=0, keepdims=True)], axis=0)     # [2, W]
    stats_ref[...] = part[None, :, :]


def _first_layer_kernel(x_ref, mask_ref, w1_ref, b1_ref, h_ref):
    """x1 = mask*x; h = LeakyReLU(x1 @ W1 + b1) for the fused s|t first layer."""
    x1 = mask_ref[...] * x_ref[...]
    h = jnp.dot(x1.astype(jnp.bfloat16), w1_ref[...],
                preferred_element_type=jnp.float32) + b1_ref[...]
    h_ref[...] = jnp.where(h >= 0, h, NEG_SLOPE * h)


def _hidden_layer_kernel(in_bn, mp, inv_b, bb, b_real, need_row_mask, *refs):
    """(optional BN of previous hidden layer) -> Linear -> LeakyReLU -> stats."""
    if in_bn:
        (h_ref, stats_in_ref, gamma_ref, beta_ref,
         ws_ref, wt_ref, b_ref, g_ref, stats_out_ref) = refs
    else:
        h_ref, ws_ref, wt_ref, b_ref, g_ref, stats_out_ref = refs
    h = h_ref[...]
    if in_bn:
        mean, rstd = _bn_from_partial_stats(stats_in_ref[...], inv_b)
        h = (h - mean) * rstd * gamma_ref[...] + beta_ref[...]
    hb = h.astype(jnp.bfloat16)
    # Un-fused s/t dots on lane-aligned halves (no structural-zero MXU work).
    gs = jnp.dot(hb[:, :mp], ws_ref[...], preferred_element_type=jnp.float32)
    gt = jnp.dot(hb[:, mp:], wt_ref[...], preferred_element_type=jnp.float32)
    g = jnp.concatenate([gs, gt], axis=1) + b_ref[...]
    g = jnp.where(g >= 0, g, NEG_SLOPE * g)
    g_ref[...] = g
    _store_partial_stats(stats_out_ref, g, bb, b_real, need_row_mask)


def _final_layer_kernel(in_bn, mp, inv_b, bb, b_real, need_row_mask, *refs):
    """(optional BN of last hidden) -> final Linear (bias dropped) -> stats."""
    if in_bn:
        (h_ref, stats_in_ref, gamma_ref, beta_ref,
         ws_ref, wt_ref, f_ref, stats_out_ref) = refs
    else:
        h_ref, ws_ref, wt_ref, f_ref, stats_out_ref = refs
    h = h_ref[...]
    if in_bn:
        mean, rstd = _bn_from_partial_stats(stats_in_ref[...], inv_b)
        h = (h - mean) * rstd * gamma_ref[...] + beta_ref[...]
    hb = h.astype(jnp.bfloat16)
    fs = jnp.dot(hb[:, :mp], ws_ref[...], preferred_element_type=jnp.float32)
    ft = jnp.dot(hb[:, mp:], wt_ref[...], preferred_element_type=jnp.float32)
    f = jnp.concatenate([fs, ft], axis=1)   # final bias dropped: no-op before BN
    f_ref[...] = f
    _store_partial_stats(stats_out_ref, f, bb, b_real, need_row_mask)


def _coupling_kernel(reverse, dp, inv_b, *refs):
    """Final BatchNorm (+ Tanh on the s-head) and the affine-coupling epilogue."""
    if reverse:
        x_ref, mask_ref, f_ref, stats_ref, gamma_ref, beta_ref, y_ref = refs
    else:
        (x_ref, ld_ref, mask_ref, f_ref, stats_ref, gamma_ref, beta_ref,
         y_ref, ld_out_ref) = refs
    mean, rstd = _bn_from_partial_stats(stats_ref[...], inv_b)
    f = (f_ref[...] - mean) * rstd * gamma_ref[...] + beta_ref[...]
    s = jnp.tanh(f[:, :dp])                 # s-head (Tanh)
    t = f[:, dp:]                           # t-head (no Tanh)
    mask = mask_ref[...]
    inv_mask = 1.0 - mask
    x = x_ref[...]
    x1 = mask * x
    x2 = inv_mask * x
    if not reverse:
        y_ref[...] = x1 + x2 * jnp.exp(s) + t * inv_mask
        # padded lanes of s are exactly tanh(0)=0, so the unmasked sum over Dp
        # lanes equals the PyTorch sum over the D real features.
        ld_out_ref[...] = ld_ref[...] - jnp.sum(s, axis=1, keepdims=True)
    else:
        b1 = s * inv_mask
        b2 = t * inv_mask
        x2r = (x2 - b2) * jnp.exp(-b1)
        x2r = jnp.where(jnp.isnan(x2r), 0.0, x2r)
        y_ref[...] = x1 + x2r


# ---------------------------------------------------------------------------
# One-time parameter packing (padding, s|t layout, bf16 cast)
# ---------------------------------------------------------------------------
def pack_params(params, in_out_dim, mid_dim, hidden):
    """Pack the per-net (s then t) params into padded tensors, ONCE at init.

    NOTE (relied upon by the kernels): every padded lane of every bias / gamma
    / beta is exactly 0 and every padded row/col of every weight is exactly 0,
    so padded feature lanes stay identically zero through Linear / LeakyReLU /
    BatchNorm / Tanh and never leak into y or log_det_J.
    """
    _buffered_one_supported()       # prime the feature probe eagerly (not in jit)
    n_per_net = 4 * hidden + 6
    assert len(params) == 2 * n_per_net
    s_p, t_p = params[:n_per_net], params[n_per_net:]
    D, M = in_out_dim, mid_dim
    Dp, Mp = _round_up(D, LANE), _round_up(M, LANE)

    def cat_vec(vs, vt, w):
        out = jnp.zeros((1, 2 * w), jnp.float32)
        out = out.at[:, :vs.shape[1]].set(vs.astype(jnp.float32))
        out = out.at[:, w:w + vt.shape[1]].set(vt.astype(jnp.float32))
        return out

    def pad_w(a, rows, cols):
        a = a.astype(jnp.float32)
        a = jnp.pad(a, ((0, rows - a.shape[0]), (0, cols - a.shape[1])))
        return a.astype(jnp.bfloat16)

    # First Linear: both heads share x1 -> keep fused [Dp, 2*Mp] (FLOP-neutral).
    w1 = jnp.zeros((Dp, 2 * Mp), jnp.float32)
    w1 = w1.at[:D, :M].set(s_p[0].astype(jnp.float32))
    w1 = w1.at[:D, Mp:Mp + M].set(t_p[0].astype(jnp.float32))
    packed = {"w1": w1.astype(jnp.bfloat16),
              "b1": cat_vec(s_p[1], t_p[1], Mp),
              "hid": []}
    i = 2
    for _ in range(hidden):
        packed["hid"].append({
            # Un-fused hidden weights (block-diagonal fusion = 50% zeros).
            "ws": pad_w(s_p[i], Mp, Mp),
            "wt": pad_w(t_p[i], Mp, Mp),
            "b": cat_vec(s_p[i + 1], t_p[i + 1], Mp),
            "gamma": cat_vec(s_p[i + 2], t_p[i + 2], Mp),
            "beta": cat_vec(s_p[i + 3], t_p[i + 3], Mp),
        })
        i += 4
    # Final Linear (+ BN).  Final bias dropped: constant shift followed by
    # BatchNorm mean subtraction is a mathematical no-op.
    packed["wsf"] = pad_w(s_p[i], Mp, Dp)
    packed["wtf"] = pad_w(t_p[i], Mp, Dp)
    packed["gammaf"] = cat_vec(s_p[i + 2], t_p[i + 2], Dp)
    packed["betaf"] = cat_vec(s_p[i + 3], t_p[i + 3], Dp)
    # TODO(synk): on v7x, optionally ship weights as fp8 (e4m3 with per-channel
    # scale folded into the following bias/gamma) to halve weight VMEM/DMA.
    return packed


# ---------------------------------------------------------------------------
# Wrapper: batch-tiled pallas_call chain
# ---------------------------------------------------------------------------
@functools.partial(jax.jit, static_argnames=("hidden", "reverse", "block_b"))
def affine_coupling(x, log_det_J, packed, mask, *, hidden, reverse=False,
                    block_b=256):
    """AffineCoupling.forward.  Returns (y, log_det_J)."""
    assert hidden >= 0
    assert block_b > 0 and block_b % 16 == 0     # bf16 sublane packing
    B, D = x.shape
    Dp, two_mp = packed["w1"].shape
    Mp = two_mp // 2

    # Batch tiling: >=128/256 rows keeps the MXU busy at production batch
    # sizes; the demo passes a smaller block to exercise a multi-block grid.
    bb = min(block_b, _round_up(B, 16))
    Bp = _round_up(B, bb)
    nb = Bp // bb
    need_row_mask = Bp != B         # padded rows must not pollute BN statistics
    inv_b = 1.0 / B                 # BN statistics divide by the REAL batch

    x_p = jnp.pad(x.astype(jnp.float32), ((0, Bp - B), (0, Dp - D)))
    mask_p = jnp.pad(mask.reshape(1, -1).astype(jnp.float32),
                     ((0, 0), (0, Dp - D)))

    cparams = pltpu.CompilerParams(
        dimension_semantics=("parallel",),        # batch blocks independent ->
        vmem_limit_bytes=_vmem_limit_bytes(),     # both v7x TensorCores get work
    )

    def batch_spec(w):
        return pl.BlockSpec((bb, w), lambda b: (b, 0))

    def stats_spec(w):
        return pl.BlockSpec((1, 2, w), lambda b: (b, 0, 0))

    # ---- layer 0: fused-first Linear + LeakyReLU ----------------------------
    h = pl.pallas_call(
        _first_layer_kernel,
        grid=(nb,),
        in_specs=[batch_spec(Dp), _const_spec((1, Dp)),
                  _const_spec((Dp, 2 * Mp)), _const_spec((1, 2 * Mp))],
        out_specs=batch_spec(2 * Mp),
        out_shape=jax.ShapeDtypeStruct((Bp, 2 * Mp), jnp.float32),
        compiler_params=cparams,
    )(x_p, mask_p, packed["w1"], packed["b1"])

    # ---- hidden layers -------------------------------------------------------
    # Exact full-batch BN under batch tiling = two passes: partial stats are
    # emitted here, the normalize is fused into the NEXT layer's kernel.
    stats, gamma, beta = None, None, None
    for layer in packed["hid"]:
        in_bn = stats is not None
        kernel = functools.partial(_hidden_layer_kernel, in_bn, Mp, inv_b,
                                   bb, B, need_row_mask)
        ins, in_specs = [h], [batch_spec(2 * Mp)]
        if in_bn:
            ins += [stats, gamma, beta]
            in_specs += [_const_spec((nb, 2, 2 * Mp)),
                         _const_spec((1, 2 * Mp)), _const_spec((1, 2 * Mp))]
        ins += [layer["ws"], layer["wt"], layer["b"]]
        in_specs += [_const_spec((Mp, Mp)), _const_spec((Mp, Mp)),
                     _const_spec((1, 2 * Mp))]
        h, stats = pl.pallas_call(
            kernel,
            grid=(nb,),
            in_specs=in_specs,
            out_specs=(batch_spec(2 * Mp), stats_spec(2 * Mp)),
            out_shape=(jax.ShapeDtypeStruct((Bp, 2 * Mp), jnp.float32),
                       jax.ShapeDtypeStruct((nb, 2, 2 * Mp), jnp.float32)),
            compiler_params=cparams,
        )(*ins)
        gamma, beta = layer["gamma"], layer["beta"]

    # ---- final Linear (+ BN of last hidden layer at its input) --------------
    in_bn = stats is not None
    kernel = functools.partial(_final_layer_kernel, in_bn, Mp, inv_b,
                               bb, B, need_row_mask)
    ins, in_specs = [h], [batch_spec(2 * Mp)]
    if in_bn:
        ins += [stats, gamma, beta]
        in_specs += [_const_spec((nb, 2, 2 * Mp)),
                     _const_spec((1, 2 * Mp)), _const_spec((1, 2 * Mp))]
    ins += [packed["wsf"], packed["wtf"]]
    in_specs += [_const_spec((Mp, Dp)), _const_spec((Mp, Dp))]
    f, fstats = pl.pallas_call(
        kernel,
        grid=(nb,),
        in_specs=in_specs,
        out_specs=(batch_spec(2 * Dp), stats_spec(2 * Dp)),
        out_shape=(jax.ShapeDtypeStruct((Bp, 2 * Dp), jnp.float32),
                   jax.ShapeDtypeStruct((nb, 2, 2 * Dp), jnp.float32)),
        compiler_params=cparams,
    )(*ins)

    # ---- coupling epilogue: final BN, Tanh(s), affine coupling, logdet ------
    if not reverse:
        ld = jnp.pad(log_det_J.reshape(B, 1).astype(jnp.float32),
                     ((0, Bp - B), (0, 0)))
        kernel = functools.partial(_coupling_kernel, False, Dp, inv_b)
        y_p, ld_p = pl.pallas_call(
            kernel,
            grid=(nb,),
            in_specs=[batch_spec(Dp), batch_spec(1), _const_spec((1, Dp)),
                      batch_spec(2 * Dp), _const_spec((nb, 2, 2 * Dp)),
                      _const_spec((1, 2 * Dp)), _const_spec((1, 2 * Dp))],
            out_specs=(batch_spec(Dp), batch_spec(1)),
            out_shape=(jax.ShapeDtypeStruct((Bp, Dp), jnp.float32),
                       jax.ShapeDtypeStruct((Bp, 1), jnp.float32)),
            compiler_params=cparams,
        )(x_p, ld, mask_p, f, fstats, packed["gammaf"], packed["betaf"])
        return y_p[:B, :D], ld_p[:B, 0]

    kernel = functools.partial(_coupling_kernel, True, Dp, inv_b)
    y_p = pl.pallas_call(
        kernel,
        grid=(nb,),
        in_specs=[batch_spec(Dp), _const_spec((1, Dp)),
                  batch_spec(2 * Dp), _const_spec((nb, 2, 2 * Dp)),
                  _const_spec((1, 2 * Dp)), _const_spec((1, 2 * Dp))],
        out_specs=batch_spec(Dp),
        out_shape=jax.ShapeDtypeStruct((Bp, Dp), jnp.float32),
        compiler_params=cparams,
    )(x_p, mask_p, f, fstats, packed["gammaf"], packed["betaf"])
    # reverse leaves log_det_J unchanged -> no kernel round-trip for it
    return y_p[:B, :D], log_det_J


# ---------------------------------------------------------------------------
# Synthetic parameters / mask (PyTorch-style init)
# ---------------------------------------------------------------------------
def _linear_init(key, fan_in, fan_out):
    k1, k2 = jax.random.split(key)
    bound = 1.0 / math.sqrt(fan_in)
    W = jax.random.uniform(k1, (fan_in, fan_out), jnp.float32, -bound, bound)
    b = jax.random.uniform(k2, (1, fan_out), jnp.float32, -bound, bound)
    return W, b


def init_params(key, in_out_dim, mid_dim, hidden):
    params = []
    for _ in range(2):  # s-net, then t-net
        key, k = jax.random.split(key)
        W, b = _linear_init(k, in_out_dim, mid_dim)
        params += [W, b]
        for _ in range(hidden):
            key, k = jax.random.split(key)
            W, b = _linear_init(k, mid_dim, mid_dim)
            params += [W, b,
                       jnp.ones((1, mid_dim), jnp.float32),     # BN gamma
                       jnp.zeros((1, mid_dim), jnp.float32)]    # BN beta
        key, k = jax.random.split(key)
        W, b = _linear_init(k, mid_dim, in_out_dim)
        params += [W, b,
                   jnp.ones((1, in_out_dim), jnp.float32),
                   jnp.zeros((1, in_out_dim), jnp.float32)]
    return params


def make_mask(in_out_dim, mask_config):
    assert mask_config in (0, 1)
    mask = jnp.full((in_out_dim,), float(mask_config), jnp.float32)
    mask = mask.at[::2].set(1.0 - mask_config)
    return mask


# ---------------------------------------------------------------------------
# Pure-JAX reference (PyTorch structure; bf16 at dot boundaries like the kernel)
# ---------------------------------------------------------------------------
def _ref_mlp(h, p, hidden, final_tanh):
    def dot(a, w):
        return jnp.dot(a.astype(jnp.bfloat16), w.astype(jnp.bfloat16),
                       preferred_element_type=jnp.float32)

    def bn(h, gamma, beta):
        mean = jnp.mean(h, axis=0, keepdims=True)
        var = jnp.mean((h - mean) ** 2, axis=0, keepdims=True)
        return (h - mean) * jax.lax.rsqrt(var + BN_EPS) * gamma + beta

    i = 0
    h = dot(h, p[i]) + p[i + 1]; i += 2
    h = jnp.where(h >= 0, h, NEG_SLOPE * h)
    for _ in range(hidden):
        h = dot(h, p[i]) + p[i + 1]; i += 2
        h = jnp.where(h >= 0, h, NEG_SLOPE * h)
        h = bn(h, p[i], p[i + 1]); i += 2
    h = dot(h, p[i]) + p[i + 1]; i += 2
    h = bn(h, p[i], p[i + 1]); i += 2
    return jnp.tanh(h) if final_tanh else h


def _ref_coupling(x, log_det_J, params, mask, hidden, reverse):
    n = 4 * hidden + 6
    s_p, t_p = params[:n], params[n:]
    mask = mask.reshape(1, -1)
    x1, x2 = mask * x, (1.0 - mask) * x
    if not reverse:
        b1 = _ref_mlp(x1, s_p, hidden, True)
        b2 = _ref_mlp(x1, t_p, hidden, False) * (1.0 - mask)
        return x1 + x2 * jnp.exp(b1) + b2, log_det_J - jnp.sum(b1, axis=1)
    b1 = _ref_mlp(x1, s_p, hidden, True) * (1.0 - mask)
    b2 = _ref_mlp(x1, t_p, hidden, False) * (1.0 - mask)
    x2r = (x2 - b2) * jnp.exp(-b1)
    x2r = jnp.where(jnp.isnan(x2r), 0.0, x2r)
    return x1 + x2r, log_det_J


if __name__ == "__main__":
    # Small demo shapes.  B=40 is deliberately NOT a multiple of the batch
    # block so padded-row statistics masking is exercised; block_b=16 keeps the
    # demo tiny while still producing a 3-block batch grid.
    B, D, M, H = 40, 16, 32, 2   # batch, in_out_dim, mid_dim, hidden layers
    key = jax.random.PRNGKey(0)
    kx, kp = jax.random.split(key)

    x = jax.random.normal(kx, (B, D), jnp.float32)
    log_det_J = jnp.zeros((B,), jnp.float32)
    params = init_params(kp, D, M, H)
    mask = make_mask(D, mask_config=0)
    packed = pack_params(params, D, M, H)   # one-time packing, NOT per call

    # forward (sampling) branch
    y, ld = affine_coupling(x, log_det_J, packed, mask,
                            hidden=H, reverse=False, block_b=16)
    jax.block_until_ready((y, ld))
    assert y.shape == (B, D) and ld.shape == (B,)
    y_ref, ld_ref = _ref_coupling(x, log_det_J, params, mask, H, False)
    assert jnp.allclose(y, y_ref, atol=5e-3, rtol=5e-3), \
        float(jnp.max(jnp.abs(y - y_ref)))
    assert jnp.allclose(ld, ld_ref, atol=5e-3, rtol=5e-3), \
        float(jnp.max(jnp.abs(ld - ld_ref)))

    # reverse (inference) branch
    yr, ldr = affine_coupling(x, log_det_J, packed, mask,
                              hidden=H, reverse=True, block_b=16)
    jax.block_until_ready((yr, ldr))
    yr_ref, _ = _ref_coupling(x, log_det_J, params, mask, H, True)
    assert jnp.allclose(yr, yr_ref, atol=5e-3, rtol=5e-3), \
        float(jnp.max(jnp.abs(yr - yr_ref)))
    assert jnp.allclose(ldr, log_det_J)

    print("KERNEL_OK")
</pallas_src>

<mosaic_0001>
module attributes {stable_mosaic.version = 11 : i64} {
  func.func @_probe_kernel(%arg0: i32, %arg1: memref<8x128xf32, #tpu.memory_space<vmem>>, %arg2: memref<8x128xf32, #tpu.memory_space<vmem>>) attributes {dimension_semantics = [#tpu.dimension_semantics<arbitrary>], iteration_bounds = array<i64: 1>, scalar_prefetch = 0 : i64, scratch_operands = 0 : i64, tpu.core_type = #tpu.core_type<tc>, window_params = [{pipeline_mode = #tpu.pipeline_mode<synchronous>, transform_indices = @transform_0, window_bounds = array<i64: 8, 128>}, {pipeline_mode = #tpu.pipeline_mode<synchronous>, transform_indices = @transform_1, window_bounds = array<i64: 8, 128>}]} {
    %c0 = arith.constant 0 : index
    %c0_0 = arith.constant 0 : index
    %0 = vector.load %arg1[%c0, %c0_0] : memref<8x128xf32, #tpu.memory_space<vmem>>, vector<8x128xf32>
    %cst = arith.constant 1.000000e+00 : f32
    %1 = vector.broadcast %cst : f32 to vector<8x128xf32>
    %2 = arith.addf %0, %1 : vector<8x128xf32>
    %c0_1 = arith.constant 0 : index
    %c0_2 = arith.constant 0 : index
    %3 = vector.load %arg2[%c0_1, %c0_2] : memref<8x128xf32, #tpu.memory_space<vmem>>, vector<8x128xf32>
    tpu.vector_store %arg2[%c0_1, %c0_2], %2 {strides = array<i32>} : memref<8x128xf32, #tpu.memory_space<vmem>>, vector<8x128xf32>,
    return
  }
  func.func @transform_0(%arg0: i32) -> (i32, i32) {
    %c0_i32 = arith.constant 0 : i32
    %c0_i32_0 = arith.constant 0 : i32
    %c0_i32_1 = arith.constant 0 : i32
    return %c0_i32, %c0_i32_0 : i32, i32
  }
  func.func @transform_1(%arg0: i32) -> (i32, i32) {
    %c0_i32 = arith.constant 0 : i32
    %c0_i32_0 = arith.constant 0 : i32
    %c0_i32_1 = arith.constant 0 : i32
    return %c0_i32, %c0_i32_0 : i32, i32
  }
}

module attributes {stable_mosaic.version = 11 : i64} {
  func.func @_first_layer_kernel(%arg0: i32, %arg1: memref<16x128xf32, #tpu.memory_space<vmem>>, %arg2: memref<1x128xf32, #tpu.memory_space<vmem>>, %arg3: memref<128x256xbf16, #tpu.memory_space<vmem>>, %arg4: memref<1x256xf32, #tpu.memory_space<vmem>>, %arg5: memref<16x256xf32, #tpu.memory_space<vmem>>) attributes {dimension_semantics = [#tpu.dimension_semantics<parallel>], iteration_bounds = array<i64: 3>, scalar_prefetch = 0 : i64, scratch_operands = 0 : i64, tpu.core_type = #tpu.core_type<tc>, window_params = [{transform_indices = @transform_0, window_bounds = array<i64: 16, 128>}, {pipeline_mode = #tpu.pipeline_mode<synchronous>, transform_indices = @transform_1, window_bounds = array<i64: 1, 128>}, {pipeline_mode = #tpu.pipeline_mode<synchronous>, transform_indices = @transform_2, window_bounds = array<i64: 128, 256>}, {pipeline_mode = #tpu.pipeline_mode<synchronous>, transform_indices = @transform_3, window_bounds = array<i64: 1, 256>}, {transform_indices = @transform_4, window_bounds = array<i64: 16, 256>}]} {
    %c0 = arith.constant 0 : index
    %c0_0 = arith.constant 0 : index
    %0 = vector.load %arg2[%c0, %c0_0] : memref<1x128xf32, #tpu.memory_space<vmem>>, vector<1x128xf32>
    %c0_1 = arith.constant 0 : index
    %c0_2 = arith.constant 0 : index
    %1 = vector.load %arg1[%c0_1, %c0_2] : memref<16x128xf32, #tpu.memory_space<vmem>>, vector<16x128xf32>
    %2 = vector.broadcast %0 : vector<1x128xf32> to vector<16x128xf32>
    %3 = arith.mulf %2, %1 : vector<16x128xf32>
    %4 = arith.truncf %3 : vector<16x128xf32> to vector<16x128xbf16>
    %c0_3 = arith.constant 0 : index
    %c0_4 = arith.constant 0 : index
    %5 = vector.load %arg3[%c0_3, %c0_4] : memref<128x256xbf16, #tpu.memory_space<vmem>>, vector<128x256xbf16>
    %cst = arith.constant dense<0.000000e+00> : vector<16x256xf32>
    %6 = tpu.matmul %4, %5, %cst {dimension_numbers = #tpu.dot_dimension_numbers<[1], [0], [0], [1], [0, 0, 1, 1], [], []>} : vector<16x128xbf16>, vector<128x256xbf16>, vector<16x256xf32> -> vector<16x256xf32>
    %c0_5 = arith.constant 0 : index
    %c0_6 = arith.constant 0 : index
    %7 = vector.load %arg4[%c0_5, %c0_6] : memref<1x256xf32, #tpu.memory_space<vmem>>, vector<1x256xf32>
    %8 = vector.broadcast %7 : vector<1x256xf32> to vector<16x256xf32>
    %9 = arith.addf %6, %8 : vector<16x256xf32>
    %cst_7 = arith.constant 0.000000e+00 : f32
    %10 = vector.broadcast %cst_7 : f32 to vector<16x256xf32>
    %11 = arith.cmpf oge, %9, %10 : vector<16x256xf32>
    %cst_8 = arith.constant 5.000000e-02 : f32
    %12 = vector.broadcast %cst_8 : f32 to vector<16x256xf32>
    %13 = arith.mulf %12, %9 : vector<16x256xf32>
    %14 = arith.select %11, %9, %13 : vector<16x256xi1>, vector<16x256xf32>
    %c0_9 = arith.constant 0 : index
    %c0_10 = arith.constant 0 : index
    %15 = vector.load %arg5[%c0_9, %c0_10] : memref<16x256xf32, #tpu.memory_space<vmem>>, vector<16x256xf32>
    tpu.vector_store %arg5[%c0_9, %c0_10], %14 {strides = array<i32>} : memref<16x256xf32, #tpu.memory_space<vmem>>, vector<16x256xf32>,
    return
  }
  func.func @transform_0(%arg0: i32) -> (i32, i32) {
    %c0_i32 = arith.constant 0 : i32
    %c0_i32_0 = arith.constant 0 : i32
    return %arg0, %c0_i32 : i32, i32
  }
  func.func @transform_1(%arg0: i32) -> (i32, i32) {
    %c0_i32 = arith.constant 0 : i32
    %c0_i32_0 = arith.constant 0 : i32
    %c0_i32_1 = arith.constant 0 : i32
    return %c0_i32, %c0_i32_0 : i32, i32
  }
  func.func @transform_2(%arg0: i32) -> (i32, i32) {
    %c0_i32 = arith.constant 0 : i32
    %c0_i32_0 = arith.constant 0 : i32
    %c0_i32_1 = arith.constant 0 : i32
    return %c0_i32, %c0_i32_0 : i32, i32
  }
  func.func @transform_3(%arg0: i32) -> (i32, i32) {
    %c0_i32 = arith.constant 0 : i32
    %c0_i32_0 = arith.constant 0 : i32
    %c0_i32_1 = arith.constant 0 : i32
    return %c0_i32, %c0_i32_0 : i32, i32
  }
  func.func @transform_4(%arg0: i32) -> (i32, i32) {
    %c0_i32 = arith.constant 0 : i32
    %c0_i32_0 = arith.constant 0 : i32
    return %arg0, %c0_i32 : i32, i32
  }
}

module attributes {stable_mosaic.version = 11 : i64} {
  func.func @_hidden_layer_kernel(%arg0: i32, %arg1: memref<16x256xf32, #tpu.memory_space<vmem>>, %arg2: memref<3x2x256xf32, #tpu.memory_space<vmem>>, %arg3: memref<1x256xf32, #tpu.memory_space<vmem>>, %arg4: memref<1x256xf32, #tpu.memory_space<vmem>>, %arg5: memref<128x128xbf16, #tpu.memory_space<vmem>>, %arg6: memref<128x128xbf16, #tpu.memory_space<vmem>>, %arg7: memref<1x256xf32, #tpu.memory_space<vmem>>, %arg8: memref<16x256xf32, #tpu.memory_space<vmem>>, %arg9: memref<1x2x256xf32, #tpu.memory_space<vmem>>) attributes {dimension_semantics = [#tpu.dimension_semantics<parallel>], iteration_bounds = array<i64: 3>, scalar_prefetch = 0 : i64, scratch_operands = 0 : i64, tpu.core_type = #tpu.core_type<tc>, window_params = [{transform_indices = @transform_0, window_bounds = array<i64: 16, 256>}, {pipeline_mode = #tpu.pipeline_mode<synchronous>, transform_indices = @transform_1, window_bounds = array<i64: 3, 2, 256>}, {pipeline_mode = #tpu.pipeline_mode<synchronous>, transform_indices = @transform_2, window_bounds = array<i64: 1, 256>}, {pipeline_mode = #tpu.pipeline_mode<synchronous>, transform_indices = @transform_3, window_bounds = array<i64: 1, 256>}, {pipeline_mode = #tpu.pipeline_mode<synchronous>, transform_indices = @transform_4, window_bounds = array<i64: 128, 128>}, {pipeline_mode = #tpu.pipeline_mode<synchronous>, transform_indices = @transform_5, window_bounds = array<i64: 128, 128>}, {pipeline_mode = #tpu.pipeline_mode<synchronous>, transform_indices = @transform_6, window_bounds = array<i64: 1, 256>}, {transform_indices = @transform_7, window_bounds = array<i64: 16, 256>}, {transform_indices = @transform_8, window_bounds = array<i64: 1, 2, 256>}]} {
    %c0 = arith.constant 0 : index
    %c0_0 = arith.constant 0 : index
    %0 = vector.load %arg1[%c0, %c0_0] : memref<16x256xf32, #tpu.memory_space<vmem>>, vector<16x256xf32>
    %c0_1 = arith.constant 0 : index
    %c0_2 = arith.constant 0 : index
    %c0_3 = arith.constant 0 : index
    %1 = vector.load %arg2[%c0_1, %c0_2, %c0_3] : memref<3x2x256xf32, #tpu.memory_space<vmem>>, vector<3x2x256xf32>
    %cst = arith.constant dense<0.000000e+00> : vector<2x256xf32>
    %2 = vector.multi_reduction <add>, %1, %cst [0] : vector<3x2x256xf32> to vector<2x256xf32>
    %3 = vector.extract_strided_slice %2 {offsets = [0, 0], sizes = [1, 256], strides = [1, 1]} : vector<2x256xf32> to vector<1x256xf32>
    %cst_4 = arith.constant 2.500000e-02 : f32
    %4 = vector.broadcast %cst_4 : f32 to vector<1x256xf32>
    %5 = arith.mulf %3, %4 : vector<1x256xf32>
    %6 = vector.extract_strided_slice %2 {offsets = [1, 0], sizes = [1, 256], strides = [1, 1]} : vector<2x256xf32> to vector<1x256xf32>
    %cst_5 = arith.constant 2.500000e-02 : f32
    %7 = vector.broadcast %cst_5 : f32 to vector<1x256xf32>
    %8 = arith.mulf %6, %7 : vector<1x256xf32>
    %9 = arith.mulf %5, %5 : vector<1x256xf32>
    %10 = arith.subf %8, %9 : vector<1x256xf32>
    %cst_6 = arith.constant 9.99999974E-6 : f32
    %11 = vector.broadcast %cst_6 : f32 to vector<1x256xf32>
    %12 = arith.addf %10, %11 : vector<1x256xf32>
    %13 = math.rsqrt %12 : vector<1x256xf32>
    %14 = vector.broadcast %5 : vector<1x256xf32> to vector<16x256xf32>
    %15 = arith.subf %0, %14 : vector<16x256xf32>
    %16 = vector.broadcast %13 : vector<1x256xf32> to vector<16x256xf32>
    %17 = arith.mulf %15, %16 : vector<16x256xf32>
    %c0_7 = arith.constant 0 : index
    %c0_8 = arith.constant 0 : index
    %18 = vector.load %arg3[%c0_7, %c0_8] : memref<1x256xf32, #tpu.memory_space<vmem>>, vector<1x256xf32>
    %19 = vector.broadcast %18 : vector<1x256xf32> to vector<16x256xf32>
    %20 = arith.mulf %17, %19 : vector<16x256xf32>
    %c0_9 = arith.constant 0 : index
    %c0_10 = arith.constant 0 : index
    %21 = vector.load %arg4[%c0_9, %c0_10] : memref<1x256xf32, #tpu.memory_space<vmem>>, vector<1x256xf32>
    %22 = vector.broadcast %21 : vector<1x256xf32> to vector<16x256xf32>
    %23 = arith.addf %20, %22 : vector<16x256xf32>
    %24 = arith.truncf %23 : vector<16x256xf32> to vector<16x256xbf16>
    %25 = vector.extract_strided_slice %24 {offsets = [0, 0], sizes = [16, 128], strides = [1, 1]} : vector<16x256xbf16> to vector<16x128xbf16>
    %c0_11 = arith.constant 0 : index
    %c0_12 = arith.constant 0 : index
    %26 = vector.load %arg5[%c0_11, %c0_12] : memref<128x128xbf16, #tpu.memory_space<vmem>>, vector<128x128xbf16>
    %cst_13 = arith.constant dense<0.000000e+00> : vector<16x128xf32>
    %27 = tpu.matmul %25, %26, %cst_13 {dimension_numbers = #tpu.dot_dimension_numbers<[1], [0], [0], [1], [0, 0, 1, 1], [], []>} : vector<16x128xbf16>, vector<128x128xbf16>, vector<16x128xf32> -> vector<16x128xf32>
    %28 = vector.extract_strided_slice %24 {offsets = [0, 128], sizes = [16, 128], strides = [1, 1]} : vector<16x256xbf16> to vector<16x128xbf16>
    %c0_14 = arith.constant 0 : index
    %c0_15 = arith.constant 0 : index
    %29 = vector.load %arg6[%c0_14, %c0_15] : memref<128x128xbf16, #tpu.memory_space<vmem>>, vector<128x128xbf16>
    %cst_16 = arith.constant dense<0.000000e+00> : vector<16x128xf32>
    %30 = tpu.matmul %28, %29, %cst_16 {dimension_numbers = #tpu.dot_dimension_numbers<[1], [0], [0], [1], [0, 0, 1, 1], [], []>} : vector<16x128xbf16>, vector<128x128xbf16>, vector<16x128xf32> -> vector<16x128xf32>
    %31 = tpu.concatenate %27, %30 in 1 : vector<16x128xf32>, vector<16x128xf32> -> vector<16x256xf32>
    %c0_17 = arith.constant 0 : index
    %c0_18 = arith.constant 0 : index
    %32 = vector.load %arg7[%c0_17, %c0_18] : memref<1x256xf32, #tpu.memory_space<vmem>>, vector<1x256xf32>
    %33 = vector.broadcast %32 : vector<1x256xf32> to vector<16x256xf32>
    %34 = arith.addf %31, %33 : vector<16x256xf32>
    %cst_19 = arith.constant 0.000000e+00 : f32
    %35 = vector.broadcast %cst_19 : f32 to vector<16x256xf32>
    %36 = arith.cmpf oge, %34, %35 : vector<16x256xf32>
    %cst_20 = arith.constant 5.000000e-02 : f32
    %37 = vector.broadcast %cst_20 : f32 to vector<16x256xf32>
    %38 = arith.mulf %37, %34 : vector<16x256xf32>
    %39 = arith.select %36, %34, %38 : vector<16x256xi1>, vector<16x256xf32>
    %c0_21 = arith.constant 0 : index
    %c0_22 = arith.constant 0 : index
    %40 = vector.load %arg8[%c0_21, %c0_22] : memref<16x256xf32, #tpu.memory_space<vmem>>, vector<16x256xf32>
    tpu.vector_store %arg8[%c0_21, %c0_22], %39 {strides = array<i32>} : memref<16x256xf32, #tpu.memory_space<vmem>>, vector<16x256xf32>,
    %41 = tpu.iota {dimensions = array<i32: 0>} : vector<16x256xi32>
    %c16_i32 = arith.constant 16 : i32
    %42 = arith.muli %arg0, %c16_i32 : i32
    %43 = vector.broadcast %42 : i32 to vector<16x256xi32>
    %44 = arith.addi %41, %43 : vector<16x256xi32>
    %c40_i32 = arith.constant 40 : i32
    %45 = vector.broadcast %c40_i32 : i32 to vector<16x256xi32>
    %46 = arith.cmpi slt, %44, %45 : vector<16x256xi32>
    %cst_23 = arith.constant 0.000000e+00 : f32
    %47 = vector.broadcast %cst_23 : f32 to vector<16x256xf32>
    %48 = arith.select %46, %39, %47 : vector<16x256xi1>, vector<16x256xf32>
    %cst_24 = arith.constant dense<0.000000e+00> : vector<256xf32>
    %49 = vector.multi_reduction <add>, %48, %cst_24 [0] : vector<16x256xf32> to vector<256xf32>
    %50 = vector.shape_cast %49 : vector<256xf32> to vector<1x256xf32>
    %51 = arith.mulf %39, %48 : vector<16x256xf32>
    %cst_25 = arith.constant dense<0.000000e+00> : vector<256xf32>
    %52 = vector.multi_reduction <add>, %51, %cst_25 [0] : vector<16x256xf32> to vector<256xf32>
    %53 = vector.shape_cast %52 : vector<256xf32> to vector<1x256xf32>
    %54 = tpu.concatenate %50, %53 in 0 : vector<1x256xf32>, vector<1x256xf32> -> vector<2x256xf32>
    %55 = vector.shape_cast %54 : vector<2x256xf32> to vector<1x2x256xf32>
    %c0_26 = arith.constant 0 : index
    %c0_27 = arith.constant 0 : index
    %c0_28 = arith.constant 0 : index
    %56 = vector.load %arg9[%c0_26, %c0_27, %c0_28] : memref<1x2x256xf32, #tpu.memory_space<vmem>>, vector<1x2x256xf32>
    tpu.vector_store %arg9[%c0_26, %c0_27, %c0_28], %55 {strides = array<i32>} : memref<1x2x256xf32, #tpu.memory_space<vmem>>, vector<1x2x256xf32>,
    return
  }
  func.func @transform_0(%arg0: i32) -> (i32, i32) {
    %c0_i32 = arith.constant 0 : i32
    %c0_i32_0 = arith.constant 0 : i32
    return %arg0, %c0_i32 : i32, i32
  }
  func.func @transform_1(%arg0: i32) -> (i32, i32, i32) {
    %c0_i32 = arith.constant 0 : i32
    %c0_i32_0 = arith.constant 0 : i32
    %c0_i32_1 = arith.constant 0 : i32
    %c0_i32_2 = arith.constant 0 : i32
    return %c0_i32, %c0_i32_0, %c0_i32_1 : i32, i32, i32
  }
  func.func @transform_2(%arg0: i32) -> (i32, i32) {
    %c0_i32 = arith.constant 0 : i32
    %c0_i32_0 = arith.constant 0 : i32
    %c0_i32_1 = arith.constant 0 : i32
    return %c0_i32, %c0_i32_0 : i32, i32
  }
  func.func @transform_3(%arg0: i32) -> (i32, i32) {
    %c0_i32 = arith.constant 0 : i32
    %c0_i32_0 = arith.constant 0 : i32
    %c0_i32_1 = arith.constant 0 : i32
    return %c0_i32, %c0_i32_0 : i32, i32
  }
  func.func @transform_4(%arg0: i32) -> (i32, i32) {
    %c0_i32 = arith.constant 0 : i32
    %c0_i32_0 = arith.constant 0 : i32
    %c0_i32_1 = arith.constant 0 : i32
    return %c0_i32, %c0_i32_0 : i32, i32
  }
  func.func @transform_5(%arg0: i32) -> (i32, i32) {
    %c0_i32 = arith.constant 0 : i32
    %c0_i32_0 = arith.constant 0 : i32
    %c0_i32_1 = arith.constant 0 : i32
    return %c0_i32, %c0_i32_0 : i32, i32
  }
  func.func @transform_6(%arg0: i32) -> (i32, i32) {
    %c0_i32 = arith.constant 0 : i32
    %c0_i32_0 = arith.constant 0 : i32
    %c0_i32_1 = arith.constant 0 : i32
    return %c0_i32, %c0_i32_0 : i32, i32
  }
  func.func @transform_7(%arg0: i32) -> (i32, i32) {
    %c0_i32 = arith.constant 0 : i32
    %c0_i32_0 = arith.constant 0 : i32
    return %arg0, %c0_i32 : i32, i32
  }
  func.func @transform_8(%arg0: i32) -> (i32, i32, i32) {
    %c0_i32 = arith.constant 0 : i32
    %c0_i32_0 = arith.constant 0 : i32
    %c0_i32_1 = arith.constant 0 : i32
    return %arg0, %c0_i32, %c0_i32_0 : i32, i32, i32
  }
}

module attributes {stable_mosaic.version = 11 : i64} {
  func.func @_hidden_layer_kernel(%arg0: i32, %arg1: memref<16x256xf32, #tpu.memory_space<vmem>>, %arg2: memref<128x128xbf16, #tpu.memory_space<vmem>>, %arg3: memref<128x128xbf16, #tpu.memory_space<vmem>>, %arg4: memref<1x256xf32, #tpu.memory_space<vmem>>, %arg5: memref<16x256xf32, #tpu.memory_space<vmem>>, %arg6: memref<1x2x256xf32, #tpu.memory_space<vmem>>) attributes {dimension_semantics = [#tpu.dimension_semantics<parallel>], iteration_bounds = array<i64: 3>, scalar_prefetch = 0 : i64, scratch_operands = 0 : i64, tpu.core_type = #tpu.core_type<tc>, window_params = [{transform_indices = @transform_0, window_bounds = array<i64: 16, 256>}, {pipeline_mode = #tpu.pipeline_mode<synchronous>, transform_indices = @transform_1, window_bounds = array<i64: 128, 128>}, {pipeline_mode = #tpu.pipeline_mode<synchronous>, transform_indices = @transform_2, window_bounds = array<i64: 128, 128>}, {pipeline_mode = #tpu.pipeline_mode<synchronous>, transform_indices = @transform_3, window_bounds = array<i64: 1, 256>}, {transform_indices = @transform_4, window_bounds = array<i64: 16, 256>}, {transform_indices = @transform_5, window_bounds = array<i64: 1, 2, 256>}]} {
    %c0 = arith.constant 0 : index
    %c0_0 = arith.constant 0 : index
    %0 = vector.load %arg1[%c0, %c0_0] : memref<16x256xf32, #tpu.memory_space<vmem>>, vector<16x256xf32>
    %1 = arith.truncf %0 : vector<16x256xf32> to vector<16x256xbf16>
    %2 = vector.extract_strided_slice %1 {offsets = [0, 0], sizes = [16, 128], strides = [1, 1]} : vector<16x256xbf16> to vector<16x128xbf16>
    %c0_1 = arith.constant 0 : index
    %c0_2 = arith.constant 0 : index
    %3 = vector.load %arg2[%c0_1, %c0_2] : memref<128x128xbf16, #tpu.memory_space<vmem>>, vector<128x128xbf16>
    %cst = arith.constant dense<0.000000e+00> : vector<16x128xf32>
    %4 = tpu.matmul %2, %3, %cst {dimension_numbers = #tpu.dot_dimension_numbers<[1], [0], [0], [1], [0, 0, 1, 1], [], []>} : vector<16x128xbf16>, vector<128x128xbf16>, vector<16x128xf32> -> vector<16x128xf32>
    %5 = vector.extract_strided_slice %1 {offsets = [0, 128], sizes = [16, 128], strides = [1, 1]} : vector<16x256xbf16> to vector<16x128xbf16>
    %c0_3 = arith.constant 0 : index
    %c0_4 = arith.constant 0 : index
    %6 = vector.load %arg3[%c0_3, %c0_4] : memref<128x128xbf16, #tpu.memory_space<vmem>>, vector<128x128xbf16>
    %cst_5 = arith.constant dense<0.000000e+00> : vector<16x128xf32>
    %7 = tpu.matmul %5, %6, %cst_5 {dimension_numbers = #tpu.dot_dimension_numbers<[1], [0], [0], [1], [0, 0, 1, 1], [], []>} : vector<16x128xbf16>, vector<128x128xbf16>, vector<16x128xf32> -> vector<16x128xf32>
    %8 = tpu.concatenate %4, %7 in 1 : vector<16x128xf32>, vector<16x128xf32> -> vector<16x256xf32>
    %c0_6 = arith.constant 0 : index
    %c0_7 = arith.constant 0 : index
    %9 = vector.load %arg4[%c0_6, %c0_7] : memref<1x256xf32, #tpu.memory_space<vmem>>, vector<1x256xf32>
    %10 = vector.broadcast %9 : vector<1x256xf32> to vector<16x256xf32>
    %11 = arith.addf %8, %10 : vector<16x256xf32>
    %cst_8 = arith.constant 0.000000e+00 : f32
    %12 = vector.broadcast %cst_8 : f32 to vector<16x256xf32>
    %13 = arith.cmpf oge, %11, %12 : vector<16x256xf32>
    %cst_9 = arith.constant 5.000000e-02 : f32
    %14 = vector.broadcast %cst_9 : f32 to vector<16x256xf32>
    %15 = arith.mulf %14, %11 : vector<16x256xf32>
    %16 = arith.select %13, %11, %15 : vector<16x256xi1>, vector<16x256xf32>
    %c0_10 = arith.constant 0 : index
    %c0_11 = arith.constant 0 : index
    %17 = vector.load %arg5[%c0_10, %c0_11] : memref<16x256xf32, #tpu.memory_space<vmem>>, vector<16x256xf32>
    tpu.vector_store %arg5[%c0_10, %c0_11], %16 {strides = array<i32>} : memref<16x256xf32, #tpu.memory_space<vmem>>, vector<16x256xf32>,
    %18 = tpu.iota {dimensions = array<i32: 0>} : vector<16x256xi32>
    %c16_i32 = arith.constant 16 : i32
    %19 = arith.muli %arg0, %c16_i32 : i32
    %20 = vector.broadcast %19 : i32 to vector<16x256xi32>
    %21 = arith.addi %18, %20 : vector<16x256xi32>
    %c40_i32 = arith.constant 40 : i32
    %22 = vector.broadcast %c40_i32 : i32 to vector<16x256xi32>
    %23 = arith.cmpi slt, %21, %22 : vector<16x256xi32>
    %cst_12 = arith.constant 0.000000e+00 : f32
    %24 = vector.broadcast %cst_12 : f32 to vector<16x256xf32>
    %25 = arith.select %23, %16, %24 : vector<16x256xi1>, vector<16x256xf32>
    %cst_13 = arith.constant dense<0.000000e+00> : vector<256xf32>
    %26 = vector.multi_reduction <add>, %25, %cst_13 [0] : vector<16x256xf32> to vector<256xf32>
    %27 = vector.shape_cast %26 : vector<256xf32> to vector<1x256xf32>
    %28 = arith.mulf %16, %25 : vector<16x256xf32>
    %cst_14 = arith.constant dense<0.000000e+00> : vector<256xf32>
    %29 = vector.multi_reduction <add>, %28, %cst_14 [0] : vector<16x256xf32> to vector<256xf32>
    %30 = vector.shape_cast %29 : vector<256xf32> to vector<1x256xf32>
    %31 = tpu.concatenate %27, %30 in 0 : vector<1x256xf32>, vector<1x256xf32> -> vector<2x256xf32>
    %32 = vector.shape_cast %31 : vector<2x256xf32> to vector<1x2x256xf32>
    %c0_15 = arith.constant 0 : index
    %c0_16 = arith.constant 0 : index
    %c0_17 = arith.constant 0 : index
    %33 = vector.load %arg6[%c0_15, %c0_16, %c0_17] : memref<1x2x256xf32, #tpu.memory_space<vmem>>, vector<1x2x256xf32>
    tpu.vector_store %arg6[%c0_15, %c0_16, %c0_17], %32 {strides = array<i32>} : memref<1x2x256xf32, #tpu.memory_space<vmem>>, vector<1x2x256xf32>,
    return
  }
  func.func @transform_0(%arg0: i32) -> (i32, i32) {
    %c0_i32 = arith.constant 0 : i32
    %c0_i32_0 = arith.constant 0 : i32
    return %arg0, %c0_i32 : i32, i32
  }
  func.func @transform_1(%arg0: i32) -> (i32, i32) {
    %c0_i32 = arith.constant 0 : i32
    %c0_i32_0 = arith.constant 0 : i32
    %c0_i32_1 = arith.constant 0 : i32
    return %c0_i32, %c0_i32_0 : i32, i32
  }
  func.func @transform_2(%arg0: i32) -> (i32, i32) {
    %c0_i32 = arith.constant 0 : i32
    %c0_i32_0 = arith.constant 0 : i32
    %c0_i32_1 = arith.constant 0 : i32
    return %c0_i32, %c0_i32_0 : i32, i32
  }
  func.func @transform_3(%arg0: i32) -> (i32, i32) {
    %c0_i32 = arith.constant 0 : i32
    %c0_i32_0 = arith.constant 0 : i32
    %c0_i32_1 = arith.constant 0 : i32
    return %c0_i32, %c0_i32_0 : i32, i32
  }
  func.func @transform_4(%arg0: i32) -> (i32, i32) {
    %c0_i32 = arith.constant 0 : i32
    %c0_i32_0 = arith.constant 0 : i32
    return %arg0, %c0_i32 : i32, i32
  }
  func.func @transform_5(%arg0: i32) -> (i32, i32, i32) {
    %c0_i32 = arith.constant 0 : i32
    %c0_i32_0 = arith.constant 0 : i32
    %c0_i32_1 = arith.constant 0 : i32
    return %arg0, %c0_i32, %c0_i32_0 : i32, i32, i32
  }
}

module attributes {stable_mosaic.version = 11 : i64} {
  func.func @_final_layer_kernel(%arg0: i32, %arg1: memref<16x256xf32, #tpu.memory_space<vmem>>, %arg2: memref<3x2x256xf32, #tpu.memory_space<vmem>>, %arg3: memref<1x256xf32, #tpu.memory_space<vmem>>, %arg4: memref<1x256xf32, #tpu.memory_space<vmem>>, %arg5: memref<128x128xbf16, #tpu.memory_space<vmem>>, %arg6: memref<128x128xbf16, #tpu.memory_space<vmem>>, %arg7: memref<16x256xf32, #tpu.memory_space<vmem>>, %arg8: memref<1x2x256xf32, #tpu.memory_space<vmem>>) attributes {dimension_semantics = [#tpu.dimension_semantics<parallel>], iteration_bounds = array<i64: 3>, scalar_prefetch = 0 : i64, scratch_operands = 0 : i64, tpu.core_type = #tpu.core_type<tc>, window_params = [{transform_indices = @transform_0, window_bounds = array<i64: 16, 256>}, {pipeline_mode = #tpu.pipeline_mode<synchronous>, transform_indices = @transform_1, window_bounds = array<i64: 3, 2, 256>}, {pipeline_mode = #tpu.pipeline_mode<synchronous>, transform_indices = @transform_2, window_bounds = array<i64: 1, 256>}, {pipeline_mode = #tpu.pipeline_mode<synchronous>, transform_indices = @transform_3, window_bounds = array<i64: 1, 256>}, {pipeline_mode = #tpu.pipeline_mode<synchronous>, transform_indices = @transform_4, window_bounds = array<i64: 128, 128>}, {pipeline_mode = #tpu.pipeline_mode<synchronous>, transform_indices = @transform_5, window_bounds = array<i64: 128, 128>}, {transform_indices = @transform_6, window_bounds = array<i64: 16, 256>}, {transform_indices = @transform_7, window_bounds = array<i64: 1, 2, 256>}]} {
    %c0 = arith.constant 0 : index
    %c0_0 = arith.constant 0 : index
    %0 = vector.load %arg1[%c0, %c0_0] : memref<16x256xf32, #tpu.memory_space<vmem>>, vector<16x256xf32>
    %c0_1 = arith.constant 0 : index
    %c0_2 = arith.constant 0 : index
    %c0_3 = arith.constant 0 : index
    %1 = vector.load %arg2[%c0_1, %c0_2, %c0_3] : memref<3x2x256xf32, #tpu.memory_space<vmem>>, vector<3x2x256xf32>
    %cst = arith.constant dense<0.000000e+00> : vector<2x256xf32>
    %2 = vector.multi_reduction <add>, %1, %cst [0] : vector<3x2x256xf32> to vector<2x256xf32>
    %3 = vector.extract_strided_slice %2 {offsets = [0, 0], sizes = [1, 256], strides = [1, 1]} : vector<2x256xf32> to vector<1x256xf32>
    %cst_4 = arith.constant 2.500000e-02 : f32
    %4 = vector.broadcast %cst_4 : f32 to vector<1x256xf32>
    %5 = arith.mulf %3, %4 : vector<1x256xf32>
    %6 = vector.extract_strided_slice %2 {offsets = [1, 0], sizes = [1, 256], strides = [1, 1]} : vector<2x256xf32> to vector<1x256xf32>
    %cst_5 = arith.constant 2.500000e-02 : f32
    %7 = vector.broadcast %cst_5 : f32 to vector<1x256xf32>
    %8 = arith.mulf %6, %7 : vector<1x256xf32>
    %9 = arith.mulf %5, %5 : vector<1x256xf32>
    %10 = arith.subf %8, %9 : vector<1x256xf32>
    %cst_6 = arith.constant 9.99999974E-6 : f32
    %11 = vector.broadcast %cst_6 : f32 to vector<1x256xf32>
    %12 = arith.addf %10, %11 : vector<1x256xf32>
    %13 = math.rsqrt %12 : vector<1x256xf32>
    %14 = vector.broadcast %5 : vector<1x256xf32> to vector<16x256xf32>
    %15 = arith.subf %0, %14 : vector<16x256xf32>
    %16 = vector.broadcast %13 : vector<1x256xf32> to vector<16x256xf32>
    %17 = arith.mulf %15, %16 : vector<16x256xf32>
    %c0_7 = arith.constant 0 : index
    %c0_8 = arith.constant 0 : index
    %18 = vector.load %arg3[%c0_7, %c0_8] : memref<1x256xf32, #tpu.memory_space<vmem>>, vector<1x256xf32>
    %19 = vector.broadcast %18 : vector<1x256xf32> to vector<16x256xf32>
    %20 = arith.mulf %17, %19 : vector<16x256xf32>
    %c0_9 = arith.constant 0 : index
    %c0_10 = arith.constant 0 : index
    %21 = vector.load %arg4[%c0_9, %c0_10] : memref<1x256xf32, #tpu.memory_space<vmem>>, vector<1x256xf32>
    %22 = vector.broadcast %21 : vector<1x256xf32> to vector<16x256xf32>
    %23 = arith.addf %20, %22 : vector<16x256xf32>
    %24 = arith.truncf %23 : vector<16x256xf32> to vector<16x256xbf16>
    %25 = vector.extract_strided_slice %24 {offsets = [0, 0], sizes = [16, 128], strides = [1, 1]} : vector<16x256xbf16> to vector<16x128xbf16>
    %c0_11 = arith.constant 0 : index
    %c0_12 = arith.constant 0 : index
    %26 = vector.load %arg5[%c0_11, %c0_12] : memref<128x128xbf16, #tpu.memory_space<vmem>>, vector<128x128xbf16>
    %cst_13 = arith.constant dense<0.000000e+00> : vector<16x128xf32>
    %27 = tpu.matmul %25, %26, %cst_13 {dimension_numbers = #tpu.dot_dimension_numbers<[1], [0], [0], [1], [0, 0, 1, 1], [], []>} : vector<16x128xbf16>, vector<128x128xbf16>, vector<16x128xf32> -> vector<16x128xf32>
    %28 = vector.extract_strided_slice %24 {offsets = [0, 128], sizes = [16, 128], strides = [1, 1]} : vector<16x256xbf16> to vector<16x128xbf16>
    %c0_14 = arith.constant 0 : index
    %c0_15 = arith.constant 0 : index
    %29 = vector.load %arg6[%c0_14, %c0_15] : memref<128x128xbf16, #tpu.memory_space<vmem>>, vector<128x128xbf16>
    %cst_16 = arith.constant dense<0.000000e+00> : vector<16x128xf32>
    %30 = tpu.matmul %28, %29, %cst_16 {dimension_numbers = #tpu.dot_dimension_numbers<[1], [0], [0], [1], [0, 0, 1, 1], [], []>} : vector<16x128xbf16>, vector<128x128xbf16>, vector<16x128xf32> -> vector<16x128xf32>
    %31 = tpu.concatenate %27, %30 in 1 : vector<16x128xf32>, vector<16x128xf32> -> vector<16x256xf32>
    %c0_17 = arith.constant 0 : index
    %c0_18 = arith.constant 0 : index
    %32 = vector.load %arg7[%c0_17, %c0_18] : memref<16x256xf32, #tpu.memory_space<vmem>>, vector<16x256xf32>
    tpu.vector_store %arg7[%c0_17, %c0_18], %31 {strides = array<i32>} : memref<16x256xf32, #tpu.memory_space<vmem>>, vector<16x256xf32>,
    %33 = tpu.iota {dimensions = array<i32: 0>} : vector<16x256xi32>
    %c16_i32 = arith.constant 16 : i32
    %34 = arith.muli %arg0, %c16_i32 : i32
    %35 = vector.broadcast %34 : i32 to vector<16x256xi32>
    %36 = arith.addi %33, %35 : vector<16x256xi32>
    %c40_i32 = arith.constant 40 : i32
    %37 = vector.broadcast %c40_i32 : i32 to vector<16x256xi32>
    %38 = arith.cmpi slt, %36, %37 : vector<16x256xi32>
    %cst_19 = arith.constant 0.000000e+00 : f32
    %39 = vector.broadcast %cst_19 : f32 to vector<16x256xf32>
    %40 = arith.select %38, %31, %39 : vector<16x256xi1>, vector<16x256xf32>
    %cst_20 = arith.constant dense<0.000000e+00> : vector<256xf32>
    %41 = vector.multi_reduction <add>, %40, %cst_20 [0] : vector<16x256xf32> to vector<256xf32>
    %42 = vector.shape_cast %41 : vector<256xf32> to vector<1x256xf32>
    %43 = arith.mulf %31, %40 : vector<16x256xf32>
    %cst_21 = arith.constant dense<0.000000e+00> : vector<256xf32>
    %44 = vector.multi_reduction <add>, %43, %cst_21 [0] : vector<16x256xf32> to vector<256xf32>
    %45 = vector.shape_cast %44 : vector<256xf32> to vector<1x256xf32>
    %46 = tpu.concatenate %42, %45 in 0 : vector<1x256xf32>, vector<1x256xf32> -> vector<2x256xf32>
    %47 = vector.shape_cast %46 : vector<2x256xf32> to vector<1x2x256xf32>
    %c0_22 = arith.constant 0 : index
    %c0_23 = arith.constant 0 : index
    %c0_24 = arith.constant 0 : index
    %48 = vector.load %arg8[%c0_22, %c0_23, %c0_24] : memref<1x2x256xf32, #tpu.memory_space<vmem>>, vector<1x2x256xf32>
    tpu.vector_store %arg8[%c0_22, %c0_23, %c0_24], %47 {strides = array<i32>} : memref<1x2x256xf32, #tpu.memory_space<vmem>>, vector<1x2x256xf32>,
    return
  }
  func.func @transform_0(%arg0: i32) -> (i32, i32) {
    %c0_i32 = arith.constant 0 : i32
    %c0_i32_0 = arith.constant 0 : i32
    return %arg0, %c0_i32 : i32, i32
  }
  func.func @transform_1(%arg0: i32) -> (i32, i32, i32) {
    %c0_i32 = arith.constant 0 : i32
    %c0_i32_0 = arith.constant 0 : i32
    %c0_i32_1 = arith.constant 0 : i32
    %c0_i32_2 = arith.constant 0 : i32
    return %c0_i32, %c0_i32_0, %c0_i32_1 : i32, i32, i32
  }
  func.func @transform_2(%arg0: i32) -> (i32, i32) {
    %c0_i32 = arith.constant 0 : i32
    %c0_i32_0 = arith.constant 0 : i32
    %c0_i32_1 = arith.constant 0 : i32
    return %c0_i32, %c0_i32_0 : i32, i32
  }
  func.func @transform_3(%arg0: i32) -> (i32, i32) {
    %c0_i32 = arith.constant 0 : i32
    %c0_i32_0 = arith.constant 0 : i32
    %c0_i32_1 = arith.constant 0 : i32
    return %c0_i32, %c0_i32_0 : i32, i32
  }
  func.func @transform_4(%arg0: i32) -> (i32, i32) {
    %c0_i32 = arith.constant 0 : i32
    %c0_i32_0 = arith.constant 0 : i32
    %c0_i32_1 = arith.constant 0 : i32
    return %c0_i32, %c0_i32_0 : i32, i32
  }
  func.func @transform_5(%arg0: i32) -> (i32, i32) {
    %c0_i32 = arith.constant 0 : i32
    %c0_i32_0 = arith.constant 0 : i32
    %c0_i32_1 = arith.constant 0 : i32
    return %c0_i32, %c0_i32_0 : i32, i32
  }
  func.func @transform_6(%arg0: i32) -> (i32, i32) {
    %c0_i32 = arith.constant 0 : i32
    %c0_i32_0 = arith.constant 0 : i32
    return %arg0, %c0_i32 : i32, i32
  }
  func.func @transform_7(%arg0: i32) -> (i32, i32, i32) {
    %c0_i32 = arith.constant 0 : i32
    %c0_i32_0 = arith.constant 0 : i32
    %c0_i32_1 = arith.constant 0 : i32
    return %arg0, %c0_i32, %c0_i32_0 : i32, i32, i32
  }
}

module attributes {stable_mosaic.version = 11 : i64} {
  func.func @_coupling_kernel(%arg0: i32, %arg1: memref<16x128xf32, #tpu.memory_space<vmem>>, %arg2: memref<16x1xf32, #tpu.memory_space<vmem>>, %arg3: memref<1x128xf32, #tpu.memory_space<vmem>>, %arg4: memref<16x256xf32, #tpu.memory_space<vmem>>, %arg5: memref<3x2x256xf32, #tpu.memory_space<vmem>>, %arg6: memref<1x256xf32, #tpu.memory_space<vmem>>, %arg7: memref<1x256xf32, #tpu.memory_space<vmem>>, %arg8: memref<16x128xf32, #tpu.memory_space<vmem>>, %arg9: memref<16x1xf32, #tpu.memory_space<vmem>>) attributes {dimension_semantics = [#tpu.dimension_semantics<parallel>], iteration_bounds = array<i64: 3>, scalar_prefetch = 0 : i64, scratch_operands = 0 : i64, tpu.core_type = #tpu.core_type<tc>, window_params = [{transform_indices = @transform_0, window_bounds = array<i64: 16, 128>}, {transform_indices = @transform_1, window_bounds = array<i64: 16, 1>}, {pipeline_mode = #tpu.pipeline_mode<synchronous>, transform_indices = @transform_2, window_bounds = array<i64: 1, 128>}, {transform_indices = @transform_3, window_bounds = array<i64: 16, 256>}, {pipeline_mode = #tpu.pipeline_mode<synchronous>, transform_indices = @transform_4, window_bounds = array<i64: 3, 2, 256>}, {pipeline_mode = #tpu.pipeline_mode<synchronous>, transform_indices = @transform_5, window_bounds = array<i64: 1, 256>}, {pipeline_mode = #tpu.pipeline_mode<synchronous>, transform_indices = @transform_6, window_bounds = array<i64: 1, 256>}, {transform_indices = @transform_7, window_bounds = array<i64: 16, 128>}, {transform_indices = @transform_8, window_bounds = array<i64: 16, 1>}]} {
    %c0 = arith.constant 0 : index
    %c0_0 = arith.constant 0 : index
    %c0_1 = arith.constant 0 : index
    %0 = vector.load %arg5[%c0, %c0_0, %c0_1] : memref<3x2x256xf32, #tpu.memory_space<vmem>>, vector<3x2x256xf32>
    %cst = arith.constant dense<0.000000e+00> : vector<2x256xf32>
    %1 = vector.multi_reduction <add>, %0, %cst [0] : vector<3x2x256xf32> to vector<2x256xf32>
    %2 = vector.extract_strided_slice %1 {offsets = [0, 0], sizes = [1, 256], strides = [1, 1]} : vector<2x256xf32> to vector<1x256xf32>
    %cst_2 = arith.constant 2.500000e-02 : f32
    %3 = vector.broadcast %cst_2 : f32 to vector<1x256xf32>
    %4 = arith.mulf %2, %3 : vector<1x256xf32>
    %5 = vector.extract_strided_slice %1 {offsets = [1, 0], sizes = [1, 256], strides = [1, 1]} : vector<2x256xf32> to vector<1x256xf32>
    %cst_3 = arith.constant 2.500000e-02 : f32
    %6 = vector.broadcast %cst_3 : f32 to vector<1x256xf32>
    %7 = arith.mulf %5, %6 : vector<1x256xf32>
    %8 = arith.mulf %4, %4 : vector<1x256xf32>
    %9 = arith.subf %7, %8 : vector<1x256xf32>
    %cst_4 = arith.constant 9.99999974E-6 : f32
    %10 = vector.broadcast %cst_4 : f32 to vector<1x256xf32>
    %11 = arith.addf %9, %10 : vector<1x256xf32>
    %12 = math.rsqrt %11 : vector<1x256xf32>
    %c0_5 = arith.constant 0 : index
    %c0_6 = arith.constant 0 : index
    %13 = vector.load %arg4[%c0_5, %c0_6] : memref<16x256xf32, #tpu.memory_space<vmem>>, vector<16x256xf32>
    %14 = vector.broadcast %4 : vector<1x256xf32> to vector<16x256xf32>
    %15 = arith.subf %13, %14 : vector<16x256xf32>
    %16 = vector.broadcast %12 : vector<1x256xf32> to vector<16x256xf32>
    %17 = arith.mulf %15, %16 : vector<16x256xf32>
    %c0_7 = arith.constant 0 : index
    %c0_8 = arith.constant 0 : index
    %18 = vector.load %arg6[%c0_7, %c0_8] : memref<1x256xf32, #tpu.memory_space<vmem>>, vector<1x256xf32>
    %19 = vector.broadcast %18 : vector<1x256xf32> to vector<16x256xf32>
    %20 = arith.mulf %17, %19 : vector<16x256xf32>
    %c0_9 = arith.constant 0 : index
    %c0_10 = arith.constant 0 : index
    %21 = vector.load %arg7[%c0_9, %c0_10] : memref<1x256xf32, #tpu.memory_space<vmem>>, vector<1x256xf32>
    %22 = vector.broadcast %21 : vector<1x256xf32> to vector<16x256xf32>
    %23 = arith.addf %20, %22 : vector<16x256xf32>
    %24 = vector.extract_strided_slice %23 {offsets = [0, 0], sizes = [16, 128], strides = [1, 1]} : vector<16x256xf32> to vector<16x128xf32>
    %25 = math.tanh %24 : vector<16x128xf32>
    %26 = vector.extract_strided_slice %23 {offsets = [0, 128], sizes = [16, 128], strides = [1, 1]} : vector<16x256xf32> to vector<16x128xf32>
    %c0_11 = arith.constant 0 : index
    %c0_12 = arith.constant 0 : index
    %27 = vector.load %arg3[%c0_11, %c0_12] : memref<1x128xf32, #tpu.memory_space<vmem>>, vector<1x128xf32>
    %cst_13 = arith.constant 1.000000e+00 : f32
    %28 = vector.broadcast %cst_13 : f32 to vector<1x128xf32>
    %29 = arith.subf %28, %27 : vector<1x128xf32>
    %c0_14 = arith.constant 0 : index
    %c0_15 = arith.constant 0 : index
    %30 = vector.load %arg1[%c0_14, %c0_15] : memref<16x128xf32, #tpu.memory_space<vmem>>, vector<16x128xf32>
    %31 = vector.broadcast %27 : vector<1x128xf32> to vector<16x128xf32>
    %32 = arith.mulf %31, %30 : vector<16x128xf32>
    %33 = vector.broadcast %29 : vector<1x128xf32> to vector<16x128xf32>
    %34 = arith.mulf %33, %30 : vector<16x128xf32>
    %35 = math.exp %25 : vector<16x128xf32>
    %36 = arith.mulf %34, %35 : vector<16x128xf32>
    %37 = arith.addf %32, %36 : vector<16x128xf32>
    %38 = vector.broadcast %29 : vector<1x128xf32> to vector<16x128xf32>
    %39 = arith.mulf %26, %38 : vector<16x128xf32>
    %40 = arith.addf %37, %39 : vector<16x128xf32>
    %c0_16 = arith.constant 0 : index
    %c0_17 = arith.constant 0 : index
    %41 = vector.load %arg8[%c0_16, %c0_17] : memref<16x128xf32, #tpu.memory_space<vmem>>, vector<16x128xf32>
    tpu.vector_store %arg8[%c0_16, %c0_17], %40 {strides = array<i32>} : memref<16x128xf32, #tpu.memory_space<vmem>>, vector<16x128xf32>,
    %c0_18 = arith.constant 0 : index
    %c0_19 = arith.constant 0 : index
    %42 = vector.load %arg2[%c0_18, %c0_19] : memref<16x1xf32, #tpu.memory_space<vmem>>, vector<16x1xf32>
    %cst_20 = arith.constant dense<0.000000e+00> : vector<16xf32>
    %43 = vector.multi_reduction <add>, %25, %cst_20 [1] : vector<16x128xf32> to vector<16xf32>
    %44 = vector.shape_cast %43 : vector<16xf32> to vector<16x1xf32>
    %45 = arith.subf %42, %44 : vector<16x1xf32>
    %c0_21 = arith.constant 0 : index
    %c0_22 = arith.constant 0 : index
    %46 = vector.load %arg9[%c0_21, %c0_22] : memref<16x1xf32, #tpu.memory_space<vmem>>, vector<16x1xf32>
    tpu.vector_store %arg9[%c0_21, %c0_22], %45 {strides = array<i32>} : memref<16x1xf32, #tpu.memory_space<vmem>>, vector<16x1xf32>,
    return
  }
  func.func @transform_0(%arg0: i32) -> (i32, i32) {
    %c0_i32 = arith.constant 0 : i32
    %c0_i32_0 = arith.constant 0 : i32
    return %arg0, %c0_i32 : i32, i32
  }
  func.func @transform_1(%arg0: i32) -> (i32, i32) {
    %c0_i32 = arith.constant 0 : i32
    %c0_i32_0 = arith.constant 0 : i32
    return %arg0, %c0_i32 : i32, i32
  }
  func.func @transform_2(%arg0: i32) -> (i32, i32) {
    %c0_i32 = arith.constant 0 : i32
    %c0_i32_0 = arith.constant 0 : i32
    %c0_i32_1 = arith.constant 0 : i32
    return %c0_i32, %c0_i32_0 : i32, i32
  }
  func.func @transform_3(%arg0: i32) -> (i32, i32) {
    %c0_i32 = arith.constant 0 : i32
    %c0_i32_0 = arith.constant 0 : i32
    return %arg0, %c0_i32 : i32, i32
  }
  func.func @transform_4(%arg0: i32) -> (i32, i32, i32) {
    %c0_i32 = arith.constant 0 : i32
    %c0_i32_0 = arith.constant 0 : i32
    %c0_i32_1 = arith.constant 0 : i32
    %c0_i32_2 = arith.constant 0 : i32
    return %c0_i32, %c0_i32_0, %c0_i32_1 : i32, i32, i32
  }
  func.func @transform_5(%arg0: i32) -> (i32, i32) {
    %c0_i32 = arith.constant 0 : i32
    %c0_i32_0 = arith.constant 0 : i32
    %c0_i32_1 = arith.constant 0 : i32
    return %c0_i32, %c0_i32_0 : i32, i32
  }
  func.func @transform_6(%arg0: i32) -> (i32, i32) {
    %c0_i32 = arith.constant 0 : i32
    %c0_i32_0 = arith.constant 0 : i32
    %c0_i32_1 = arith.constant 0 : i32
    return %c0_i32, %c0_i32_0 : i32, i32
  }
  func.func @transform_7(%arg0: i32) -> (i32, i32) {
    %c0_i32 = arith.constant 0 : i32
    %c0_i32_0 = arith.constant 0 : i32
    return %arg0, %c0_i32 : i32, i32
  }
  func.func @transform_8(%arg0: i32) -> (i32, i32) {
    %c0_i32 = arith.constant 0 : i32
    %c0_i32_0 = arith.constant 0 : i32
    return %arg0, %c0_i32 : i32, i32
  }
}

</mosaic_0001>

<llo_original>
// kernel: tpu_custom_call.1
$region0: #{tpu_custom_call.1}
  #allocation0 [shape = 'u32[]', space=smem, size = 0x4, offset = 0x4, fixed_abs, tag = 'smem constant byte address 0x4 - core index']
  #allocation1 [shape = 'u32[72,128]{1,0:T(1,128)}', space=vmem, size = 0x9000, scoped, tag = 'internal scratch']
  %s0 = inlined_call_operand.hbm [shape: f32[8,128], index: 0, kind: input, shape index: {}]
  %s1 = inlined_call_operand.hbm [shape: f32[8,128], index: 1, kind: output, shape index: {}]
  %s2 = sld [smem:[#allocation0]]
  $region18: #{tpu_custom_call.1} parent=0
    _
  %s4 = ssub.s32 1, %s2
  %s5 = scalar_select 0, %s4, %s2
  $region1: #{tpu_custom_call.1} parent=0
    #allocation2 [shape = 'u8[4096]{0}', space=vmem, size = 0x1000, scoped, tag = 'input window, operand 0, single buffered']
    #allocation3 [shape = 's32[1]{0}', space=sflag, size = 0x4, scoped, tag = 'scoped memory for tpu_custom_call.1']
    #allocation4 [shape = 's32[1]{0}', space=sflag, size = 0x4, scoped, tag = 'scoped memory for tpu_custom_call.1']
    #allocation5 [shape = 'u8[4096]{0}', space=vmem, size = 0x1000, scoped, tag = 'output window, operand 0, single buffered']
    %6 = vsyncpa [#allocation3], 0
    %7 = vsyncpa [#allocation4], 0
    // Predicated region
    $region2: #{tpu_custom_call.1} parent=1 // pred_check
      _
    $region3: #{tpu_custom_call.1} parent=1 // pred_check_branch
      %9 = sbr.rel (0) target = $region5
    $region4: #{tpu_custom_call.1} parent=1 // pred_region
      %11 = vsyncadd [#allocation3], 0
      %s13 = sshll.u32 %s0, 4
      %s14 = int_to_ptr.hbm [resolvable:$true] %s13
      %s15 = sshll.u32 [#allocation2], 4
      %s16 = int_to_ptr.vmem [resolvable:$true] %s15
      %18 = dma.hbm_to_vmem [thread:$0]  %s14, 128, %s16, [#allocation3]
    $region5: #{tpu_custom_call.1} parent=1 // pred_fallthru
      _
    // Predicated region
    $region6: #{tpu_custom_call.1} parent=1 // pred_check
      _
    $region7: #{tpu_custom_call.1} parent=1 // pred_check_branch
      %20 = sbr.rel (0) target = $region9
    $region8: #{tpu_custom_call.1} parent=1 // pred_region
      %22 = dma.done [#allocation3], 128
    $region9: #{tpu_custom_call.1} parent=1 // pred_fallthru
      _
    %v23 = vld [vmem:[#allocation2] sm:$0xff]
    %v24 = vadd.f32 %v23, 1.0
    %25 = vst [vmem:[#allocation5] sm:$0xff] %v24
    // Predicated region
    $region10: #{tpu_custom_call.1} parent=1 // pred_check
      _
    $region11: #{tpu_custom_call.1} parent=1 // pred_check_branch
      %27 = sbr.rel (0) target = $region13
    $region12: #{tpu_custom_call.1} parent=1 // pred_region
      %29 = vsyncadd [#allocation4], 0
      %s31 = sshll.u32 [#allocation5], 4
      %s32 = int_to_ptr.vmem [resolvable:$true] %s31
      %s33 = sshll.u32 %s1, 4
      %s34 = int_to_ptr.hbm [resolvable:$true] %s33
      %36 = dma.vmem_to_hbm [thread:$0]  %s32, 128, %s34, [#allocation4]
    $region13: #{tpu_custom_call.1} parent=1 // pred_fallthru
      _
    // Predicated region
    $region14: #{tpu_custom_call.1} parent=1 // pred_check
      _
    $region15: #{tpu_custom_call.1} parent=1 // pred_check_branch
      %38 = sbr.rel (0) target = $region17
    $region16: #{tpu_custom_call.1} parent=1 // pred_region
      %40 = dma.done [#allocation4], 128
    $region17: #{tpu_custom_call.1} parent=1 // pred_fallthru
      _
    %41 = vsyncpa [#allocation3], 1
    %42 = vsyncpa [#allocation4], 1

// kernel: affine_coupling.5
$region0: #{affine_coupling.5}
  #allocation0 [shape = 'u32[]', space=smem, size = 0x4, offset = 0x4, fixed_abs, tag = 'smem constant byte address 0x4 - core index']
  #allocation1 [shape = 'u32[72,128]{1,0:T(1,128)}', space=vmem, size = 0x9000, scoped, tag = 'internal scratch']
  %s0 = inlined_call_operand.vmem [shape: f32[48,128], index: 0, kind: input, shape index: {}]
  %s1 = inlined_call_operand.vmem [shape: f32[1,128], index: 1, kind: input, shape index: {}]
  %s2 = inlined_call_operand.vmem [shape: bf16[128,256], index: 2, kind: input, shape index: {}]
  %s3 = inlined_call_operand.vmem [shape: f32[1,256], index: 3, kind: input, shape index: {}]
  %s4 = inlined_call_operand.vmem [shape: f32[48,256], index: 4, kind: output, shape index: {}]
  %s5 = sld [smem:[#allocation0]]
  $region49: #{affine_coupling.5} parent=0
    _
  %s7 = ssub.s32 1, %s5
  %s8 = scalar_select 0, %s7, %s5
  loop: start=0, step=1, limit=5
  $region2: #{affine_coupling.5} parent=0 // loop_pre_header
    _
  $region3: #{affine_coupling.5} parent=0 // loop_header
    %s10 = sphi 0, %s14
    %p11 = scmp.ge.s32.totalorder %s10, 5
    %s20 = sphi 0, %s22
    %s23 = sphi 0, %s20
    %s24 = sphi 0, %s23
    %s40 = sphi 0, %s24
    %s44 = sphi 0, %s44
    %s46 = sphi 0, %s44
    %s47 = sphi 0, %s46
    %s61 = sphi 0, %s47
    %s65 = sphi 0, %s65
    %s67 = sphi 0, %s65
    %s68 = sphi 0, %s67
    %s82 = sphi 0, %s68
    %s86 = sphi 0, %s86
    %s88 = sphi 0, %s86
    %s89 = sphi 0, %s88
    %s103 = sphi 0, %s89
    %s109 = sphi 0, %s111
    %s112 = sphi 0, %s109
    %s113 = sphi 0, %s112
    %s129 = sphi 0, %s113
  $region4: #{affine_coupling.5} parent=0 // loop_header_branch
    %13 = sbr.rel (%p11) target = $region8
  $region5: #{affine_coupling.5} parent=0 // loop_body
    %s15 = ssub.s32 %s10, 1
    %s16 = ssub.s32 %s10, 2
    %s17 = sadd.s32 %s10, 1
    %s18 = ssub.s32 %s10, %s17
    %p19 = scmp.eq.s32.totalorder %s18, 0
    %s21 = sadd.s32 %s20, 1
    %s22 = scalar_select %p19, %s20, %s21
    %p25 = pneg %p19
    %p26 = scmp.eq.s32.totalorder %s10, 2
    %p27 = por %p25, %p26
    %p28 = scmp.ne.s32.totalorder %s20, %s23
    %p29 = scmp.eq.s32.totalorder %s10, 0
    %p30 = por %p28, %p29
    %p31 = scmp.ne.s32.totalorder %s20, %s23
    %p32 = scmp.eq.s32.totalorder %s15, 2
    %p33 = por %p31, %p32
    %p34 = scmp.ne.s32.totalorder %s23, %s24
    %p35 = scmp.eq.s32.totalorder %s15, 0
    %p36 = por %p34, %p35
    %p37 = scmp.ne.s32.totalorder %s23, %s24
    %p38 = scmp.eq.s32.totalorder %s16, 2
    %p39 = por %p37, %p38
    %p41 = scmp.ne.s32.totalorder %s24, %s40
    %p42 = scmp.eq.s32.totalorder %s16, 0
    %p43 = por %p41, %p42
    %s45 = sadd.s32 %s44, 1
    %p48 = scmp.eq.s32.totalorder %s10, 2
    %p49 = scmp.ne.s32.totalorder %s44, %s46
    %p50 = scmp.eq.s32.totalorder %s10, 0
    %p51 = por %p49, %p50
    %p52 = scmp.ne.s32.totalorder %s44, %s46
    %p53 = scmp.eq.s32.totalorder %s15, 2
    %p54 = por %p52, %p53
    %p55 = scmp.ne.s32.totalorder %s46, %s47
    %p56 = scmp.eq.s32.totalorder %s15, 0
    %p57 = por %p55, %p56
    %p58 = scmp.ne.s32.totalorder %s46, %s47
    %p59 = scmp.eq.s32.totalorder %s16, 2
    %p60 = por %p58, %p59
    %p62 = scmp.ne.s32.totalorder %s47, %s61
    %p63 = scmp.eq.s32.totalorder %s16, 0
    %p64 = por %p62, %p63
    %s66 = sadd.s32 %s65, 1
    %p69 = scmp.eq.s32.totalorder %s10, 2
    %p70 = scmp.ne.s32.totalorder %s65, %s67
    %p71 = scmp.eq.s32.totalorder %s10, 0
    %p72 = por %p70, %p71
    %p73 = scmp.ne.s32.totalorder %s65, %s67
    %p74 = scmp.eq.s32.totalorder %s15, 2
    %p75 = por %p73, %p74
    %p76 = scmp.ne.s32.totalorder %s67, %s68
    %p77 = scmp.eq.s32.totalorder %s15, 0
    %p78 = por %p76, %p77
    %p79 = scmp.ne.s32.totalorder %s67, %s68
    %p80 = scmp.eq.s32.totalorder %s16, 2
    %p81 = por %p79, %p80
    %p83 = scmp.ne.s32.totalorder %s68, %s82
    %p84 = scmp.eq.s32.totalorder %s16, 0
    %p85 = por %p83, %p84
    %s87 = sadd.s32 %s86, 1
    %p90 = scmp.eq.s32.totalorder %s10, 2
    %p91 = scmp.ne.s32.totalorder %s86, %s88
    %p92 = scmp.eq.s32.totalorder %s10, 0
    %p93 = por %p91, %p92
    %p94 = scmp.ne.s32.totalorder %s86, %s88
    %p95 = scmp.eq.s32.totalorder %s15, 2
    %p96 = por %p94, %p95
    %p97 = scmp.ne.s32.totalorder %s88, %s89
    %p98 = scmp.eq.s32.totalorder %s15, 0
    %p99 = por %p97, %p98
    %p100 = scmp.ne.s32.totalorder %s88, %s89
    %p101 = scmp.eq.s32.totalorder %s16, 2
    %p102 = por %p100, %p101
    %p104 = scmp.ne.s32.totalorder %s89, %s103
    %p105 = scmp.eq.s32.totalorder %s16, 0
    %p106 = por %p104, %p105
    %s107 = ssub.s32 %s10, %s17
    %p108 = scmp.eq.s32.totalorder %s107, 0
    %s110 = sadd.s32 %s109, 1
    %s111 = scalar_select %p108, %s109, %s110
    %p114 = pneg %p108
    %p115 = scmp.eq.s32.totalorder %s10, 2
    %p116 = por %p114, %p115
    %p117 = scmp.ne.s32.totalorder %s109, %s112
    %p118 = scmp.eq.s32.totalorder %s10, 0
    %p119 = por %p117, %p118
    %p120 = scmp.ne.s32.totalorder %s109, %s112
    %p121 = scmp.eq.s32.totalorder %s15, 2
    %p122 = por %p120, %p121
    %p123 = scmp.ne.s32.totalorder %s112, %s113
    %p124 = scmp.eq.s32.totalorder %s15, 0
    %p125 = por %p123, %p124
    %p126 = scmp.ne.s32.totalorder %s112, %s113
    %p127 = scmp.eq.s32.totalorder %s16, 2
    %p128 = por %p126, %p127
    %p130 = scmp.ne.s32.totalorder %s113, %s129
    %p131 = scmp.eq.s32.totalorder %s16, 0
    %p132 = por %p130, %p131
    %p133 = scmp.le.s32.totalorder 1, %s10
    %p134 = scmp.lt.s32.totalorder %s10, 4
    %p135 = pnand %p133, %p134
    %p136 = pneg %p135
    // Predicated region
    $region9: #{affine_coupling.5} parent=5 // pred_check
      _
    $region10: #{affine_coupling.5} parent=5 // pred_check_branch
      %138 = sbr.rel (%p135) target = $region12
    $region11: #{affine_coupling.5} parent=5 // pred_region
      %s139 = ssub.s32 %s10, 1
      // Predicated region
      $region13: #{affine_coupling.5} parent=11 // pred_check
        %p140 = pneg %p57
      $region14: #{affine_coupling.5} parent=11 // pred_check_branch
        %142 = sbr.rel (%p140) target = $region16
      $region15: #{affine_coupling.5} parent=11 // pred_region
        _
      $region16: #{affine_coupling.5} parent=11 // pred_fallthru
        _
      // Predicated region
      $region17: #{affine_coupling.5} parent=11 // pred_check
        %p143 = pneg %p78
      $region18: #{affine_coupling.5} parent=11 // pred_check_branch
        %145 = sbr.rel (%p143) target = $region20
      $region19: #{affine_coupling.5} parent=11 // pred_region
        _
      $region20: #{affine_coupling.5} parent=11 // pred_fallthru
        _
      // Predicated region
      $region21: #{affine_coupling.5} parent=11 // pred_check
        %p146 = pneg %p99
      $region22: #{affine_coupling.5} parent=11 // pred_check_branch
        %148 = sbr.rel (%p146) target = $region24
      $region23: #{affine_coupling.5} parent=11 // pred_region
        _
      $region24: #{affine_coupling.5} parent=11 // pred_fallthru
        _
    $region12: #{affine_coupling.5} parent=5 // pred_fallthru
      _
    %p149 = scmp.lt.s32.totalorder %s10, 3
    // Predicated region
    $region25: #{affine_coupling.5} parent=5 // pred_check
      %p150 = pneg %p149
    $region26: #{affine_coupling.5} parent=5 // pred_check_branch
      %152 = sbr.rel (%p150) target = $region28
    $region27: #{affine_coupling.5} parent=5 // pred_region
      // Predicated region
      $region29: #{affine_coupling.5} parent=27 // pred_check
        %p153 = pneg %p30
      $region30: #{affine_coupling.5} parent=27 // pred_check_branch
        %155 = sbr.rel (%p153) target = $region32
      $region31: #{affine_coupling.5} parent=27 // pred_region
        %s156 = smul.u32 2, %s10
        %p157 = scmp.lt.s32.totalorder %s156, 5
        %s158 = scalar_select %p157, %s156, 5
        %s159 = smul.addr %s158, 8
        %s160 = scalar_lea.vmem %s0, %s159
        %s161 = smul.u32 2, %s10
      $region32: #{affine_coupling.5} parent=27 // pred_fallthru
        _
    $region28: #{affine_coupling.5} parent=5 // pred_fallthru
      _
    %p162 = scmp.le.s32.totalorder 1, %s10
    %p163 = scmp.lt.s32.totalorder %s10, 4
    %p164 = pnand %p162, %p163
    %p165 = pneg %p164
    // Predicated region
    $region33: #{affine_coupling.5} parent=5 // pred_check
      _
    $region34: #{affine_coupling.5} parent=5 // pred_check_branch
      %167 = sbr.rel (%p164) target = $region36
    $region35: #{affine_coupling.5} parent=5 // pred_region
      %s168 = ssub.s32 %s10, 1
      %s169 = smul.u32 2, %s15
      %p170 = scmp.lt.s32.totalorder %s169, 5
      %s171 = scalar_select %p170, %s169, 5
      %s172 = smul.addr %s171, 8
      %s173 = scalar_lea.vmem %s0, %s172
      %p174 = pneg %p36
      %p175 = pneg %p33
      %p176 = pneg %p57
      %p177 = pneg %p54
      %p178 = pneg %p78
      %p179 = pneg %p75
      %p180 = pneg %p99
      %p181 = pneg %p96
      %p182 = pneg %p125
      %p183 = pneg %p122
      %s184 = smul.u32 2, %s15
      %p185 = scmp.lt.s32.totalorder %s184, 5
      %s186 = scalar_select %p185, %s184, 5
      %s187 = smul.addr %s186, 2
      %s188 = smul.addr %s187, 8
      %s189 = scalar_lea.vmem %s4, %s188
      %s190 = smul.u32 2, %s15
      %p191 = scmp.lt.s32.totalorder %s190, 5
      %s192 = scalar_select %p191, %s190, 5
      %s193 = smul.addr %s192, 8
      %s194 = scalar_lea.vmem %s0, %s193
      %s195 = smul.u32 2, %s15
      %s196 = smul.u32 2, %s15
      %p197 = scmp.lt.s32.totalorder %s196, 5
      %s198 = scalar_select %p197, %s196, 5
      %s199 = smul.addr %s198, 2
      %s200 = smul.addr %s199, 8
      %s201 = scalar_lea.vmem %s4, %s200
      %s202 = smul.u32 2, %s15
      %v203 = vld [vmem:[%s1] sm:$0x1]
      %v204 = vld [vmem:[%s194] sm:$0xff]
      %v205 = vld [vmem:[%s194 + $0x8] sm:$0xff]
      %v207 = vperm.slane %v203, 0
      %v209 = vmul.f32 %v207, %v204
      %v210 = vmul.f32 %v207, %v205
      %v211 = vpack.c.bf16 %v210, %v209
      %v212 = vld [vmem:[%s2] sm:$0xff]
      %v213 = vld [vmem:[%s2 + $0x8] sm:$0xff]
      %v214 = vld [vmem:[%s2 + $0x10] sm:$0xff]
      %v215 = vld [vmem:[%s2 + $0x18] sm:$0xff]
      %v216 = vld [vmem:[%s2 + $0x20] sm:$0xff]
      %v217 = vld [vmem:[%s2 + $0x28] sm:$0xff]
      %v218 = vld [vmem:[%s2 + $0x30] sm:$0xff]
      %v219 = vld [vmem:[%s2 + $0x38] sm:$0xff]
      %v220 = vld [vmem:[%s2 + $0x40] sm:$0xff]
      %v221 = vld [vmem:[%s2 + $0x48] sm:$0xff]
      %v222 = vld [vmem:[%s2 + $0x50] sm:$0xff]
      %v223 = vld [vmem:[%s2 + $0x58] sm:$0xff]
      %v224 = vld [vmem:[%s2 + $0x60] sm:$0xff]
      %v225 = vld [vmem:[%s2 + $0x68] sm:$0xff]
      %v226 = vld [vmem:[%s2 + $0x70] sm:$0xff]
      %v227 = vld [vmem:[%s2 + $0x78] sm:$0xff]
      %v228 = vld [vmem:[%s3] sm:$0x3]
      %v230 = vperm.slane %v228, 0
      %v231 = vperm.slane %v228, 1
      %v250 = vunpack.c.l.b16 %v212
      %v251 = vunpack.c.h.b16 %v212
      %v252 = vunpack.c.l.b16 %v213
      %v253 = vunpack.c.h.b16 %v213
      %v254 = vunpack.c.l.b16 %v214
      %v255 = vunpack.c.h.b16 %v214
      %v256 = vunpack.c.l.b16 %v215
      %v257 = vunpack.c.h.b16 %v215
      %v258 = vunpack.c.l.b16 %v216
      %v259 = vunpack.c.h.b16 %v216
      %v260 = vunpack.c.l.b16 %v217
      %v261 = vunpack.c.h.b16 %v217
      %v262 = vunpack.c.l.b16 %v218
      %v263 = vunpack.c.h.b16 %v218
      %v264 = vunpack.c.l.b16 %v219
      %v265 = vunpack.c.h.b16 %v219
      %v266 = vunpack.c.l.b16 %v220
      %v267 = vunpack.c.h.b16 %v220
      %v268 = vunpack.c.l.b16 %v221
      %v269 = vunpack.c.h.b16 %v221
      %v270 = vunpack.c.l.b16 %v222
      %v271 = vunpack.c.h.b16 %v222
      %v272 = vunpack.c.l.b16 %v223
      %v273 = vunpack.c.h.b16 %v223
      %v274 = vunpack.c.l.b16 %v224
      %v275 = vunpack.c.h.b16 %v224
      %v276 = vunpack.c.l.b16 %v225
      %v277 = vunpack.c.h.b16 %v225
      %v278 = vunpack.c.l.b16 %v226
      %v279 = vunpack.c.h.b16 %v226
      %v280 = vunpack.c.l.b16 %v227
      %v281 = vunpack.c.h.b16 %v227
      %v282 = vpack.c.b16 %v252, %v250
      %v283 = vpack.c.b16 %v253, %v251
      %v284 = vpack.c.b16 %v256, %v254
      %v285 = vpack.c.b16 %v257, %v255
      %v286 = vpack.c.b16 %v260, %v258
      %v287 = vpack.c.b16 %v261, %v259
      %v288 = vpack.c.b16 %v264, %v262
      %v289 = vpack.c.b16 %v265, %v263
      %v290 = vpack.c.b16 %v268, %v266
      %v291 = vpack.c.b16 %v269, %v267
      %v292 = vpack.c.b16 %v272, %v270
      %v293 = vpack.c.b16 %v273, %v271
      %v294 = vpack.c.b16 %v276, %v274
      %v295 = vpack.c.b16 %v277, %v275
      %v296 = vpack.c.b16 %v280, %v278
      %v297 = vpack.c.b16 %v281, %v279
      %314 = vmatpush.bf16.msra.mxu0 %v296
      %315 = vmatpush.bf16.msra.mxu0 %v294
      %316 = vmatpush.bf16.msra.mxu0 %v292
      %317 = vmatpush.bf16.msra.mxu0 %v290
      %318 = vmatpush.bf16.msra.mxu0 %v288
      %319 = vmatpush.bf16.msra.mxu0 %v286
      %320 = vmatpush.bf16.msra.mxu0 %v284
      %321 = vmatpush.bf16.msra.mxu0 %v282
      %322 = vmatmul.bf16.gmra.mxu0 %v211
      %v323 = vpop.f32.mrf.mxu0
      %v324 = vadd.f32 %v230, %v323
      %v325 = vpop.f32.mrf.mxu0
      %v326 = vadd.f32 %v230, %v325
      %327 = vdwg.mxu0
      %328 = vmatpush.bf16.msra.mxu0 %v297
      %329 = vmatpush.bf16.msra.mxu0 %v295
      %330 = vmatpush.bf16.msra.mxu0 %v293
      %331 = vmatpush.bf16.msra.mxu0 %v291
      %332 = vmatpush.bf16.msra.mxu0 %v289
      %333 = vmatpush.bf16.msra.mxu0 %v287
      %334 = vmatpush.bf16.msra.mxu0 %v285
      %335 = vmatpush.bf16.msra.mxu0 %v283
      %336 = vmatmul.bf16.gmra.mxu0 %v211
      %v337 = vpop.f32.mrf.mxu0
      %v338 = vadd.f32 %v231, %v337
      %v339 = vpop.f32.mrf.mxu0
      %v340 = vadd.f32 %v231, %v339
      %341 = vdwg.mxu0
      %vm342 = vcmp.ge.f32.partialorder %v324, 0.0
      %vm343 = vcmp.ge.f32.partialorder %v338, 0.0
      %vm344 = vcmp.ge.f32.partialorder %v326, 0.0
      %vm345 = vcmp.ge.f32.partialorder %v340, 0.0
      %v346 = vmul.f32 %v324, 0.05
      %v347 = vmul.f32 %v338, 0.05
      %v348 = vmul.f32 %v326, 0.05
      %v349 = vmul.f32 %v340, 0.05
      %v350 = vsel %vm342, %v324, %v346
      %v351 = vsel %vm343, %v338, %v347
      %v352 = vsel %vm344, %v326, %v348
      %v353 = vsel %vm345, %v340, %v349
      %354 = vst [vmem:[%s201] sm:$0xff] %v350
      %355 = vst [vmem:[%s201 + $0x8] sm:$0xff] %v351
      %356 = vst [vmem:[%s201 + $0x10] sm:$0xff] %v352
      %357 = vst [vmem:[%s201 + $0x18] sm:$0xff] %v353
      %s358 = smul.u32 2, %s15
      %p359 = scmp.lt.s32.totalorder %s358, 5
      %s360 = scalar_select %p359, %s358, 5
      %s361 = smul.addr %s360, 2
      %s362 = smul.addr %s361, 8
      %s363 = scalar_lea.vmem %s4, %s362
      // Predicated region
      $region37: #{affine_coupling.5} parent=35 // pred_check
        %p364 = pneg %p122
      $region38: #{affine_coupling.5} parent=35 // pred_check_branch
        %366 = sbr.rel (%p364) target = $region40
      $region39: #{affine_coupling.5} parent=35 // pred_region
        %s367 = smul.u32 2, %s15
      $region40: #{affine_coupling.5} parent=35 // pred_fallthru
        _
    $region36: #{affine_coupling.5} parent=5 // pred_fallthru
      _
    %p368 = scmp.le.s32.totalorder 2, %s10
    // Predicated region
    $region41: #{affine_coupling.5} parent=5 // pred_check
      %p369 = pneg %p368
    $region42: #{affine_coupling.5} parent=5 // pred_check_branch
      %371 = sbr.rel (%p369) target = $region44
    $region43: #{affine_coupling.5} parent=5 // pred_region
      %s372 = ssub.s32 %s10, 2
      // Predicated region
      $region45: #{affine_coupling.5} parent=43 // pred_check
        %p373 = pneg %p128
      $region46: #{affine_coupling.5} parent=43 // pred_check_branch
        %375 = sbr.rel (%p373) target = $region48
      $region47: #{affine_coupling.5} parent=43 // pred_region
        %s376 = smul.u32 2, %s16
        %p377 = scmp.lt.s32.totalorder %s376, 5
        %s378 = scalar_select %p377, %s376, 5
        %s379 = smul.addr %s378, 2
        %s380 = smul.addr %s379, 8
        %s381 = scalar_lea.vmem %s4, %s380
      $region48: #{affine_coupling.5} parent=43 // pred_fallthru
        _
    $region44: #{affine_coupling.5} parent=5 // pred_fallthru
      _
  $region6: #{affine_coupling.5} parent=0 // loop_footer
    %s14 = sadd.s32 1, %s10
  $region7: #{affine_coupling.5} parent=0 // loop_footer_branch
    %9 = sbr.rel target = $region3
  $region8: #{affine_coupling.5} parent=0 // loop_exit
    _

// kernel: affine_coupling.6
$region0: #{affine_coupling.6}
  #allocation0 [shape = 'u32[]', space=smem, size = 0x4, offset = 0x4, fixed_abs, tag = 'smem constant byte address 0x4 - core index']
  #allocation1 [shape = 'u32[72,128]{1,0:T(1,128)}', space=vmem, size = 0x9000, scoped, tag = 'internal scratch']
  %s0 = inlined_call_operand.vmem [shape: f32[48,256], index: 0, kind: input, shape index: {}]
  %s1 = inlined_call_operand.hbm [shape: bf16[128,128], index: 1, kind: input, shape index: {}]
  %s2 = inlined_call_operand.hbm [shape: bf16[128,128], index: 2, kind: input, shape index: {}]
  %s3 = inlined_call_operand.vmem [shape: f32[1,256], index: 3, kind: input, shape index: {}]
  %s4 = inlined_call_operand.vmem [shape: f32[48,256], index: 4, kind: output, shape index: {0}]
  %s5 = inlined_call_operand.vmem [shape: f32[3,2,256], index: 5, kind: output, shape index: {1}]
  %6 = xla_tuple %s4, %s5
  %s7 = sld [smem:[#allocation0]]
  $region65: #{affine_coupling.6} parent=0
    _
  %s9 = ssub.s32 1, %s7
  %s10 = scalar_select 0, %s9, %s7
  $region1: #{affine_coupling.6} parent=0
    #allocation2 [shape = 'u8[32768]{0}', space=vmem, size = 0x8000, scoped, tag = 'input window, operand 1, single buffered']
    #allocation3 [shape = 's32[2]{0}', space=sflag, size = 0x8, scoped, tag = 'scoped memory for affine_coupling.6']
    #allocation4 [shape = 'u8[32768]{0}', space=vmem, size = 0x8000, scoped, tag = 'input window, operand 2, single buffered']
    #allocation5 [shape = 's32[1]{0}', space=sflag, size = 0x4, scoped, tag = 'scoped memory for affine_coupling.6']
    %11 = vsyncpa [#allocation3], 0
    %12 = vsyncpa [#allocation5], 0
    loop: start=0, step=1, limit=5
    $region2: #{affine_coupling.6} parent=1 // loop_pre_header
      _
    $region3: #{affine_coupling.6} parent=1 // loop_header
      %s14 = sphi 0, %s18
      %p15 = scmp.ge.s32.totalorder %s14, 5
      %s24 = sphi 0, %s26
      %s27 = sphi 0, %s24
      %s28 = sphi 0, %s27
      %s44 = sphi 0, %s28
      %s48 = sphi 0, %s48
      %s50 = sphi 0, %s48
      %s51 = sphi 0, %s50
      %s65 = sphi 0, %s51
      %s69 = sphi 0, %s69
      %s71 = sphi 0, %s69
      %s72 = sphi 0, %s71
      %s86 = sphi 0, %s72
      %s90 = sphi 0, %s90
      %s92 = sphi 0, %s90
      %s93 = sphi 0, %s92
      %s107 = sphi 0, %s93
      %s113 = sphi 0, %s115
      %s116 = sphi 0, %s113
      %s117 = sphi 0, %s116
      %s133 = sphi 0, %s117
      %s139 = sphi 0, %s141
      %s142 = sphi 0, %s139
      %s143 = sphi 0, %s142
      %s159 = sphi 0, %s143
    $region4: #{affine_coupling.6} parent=1 // loop_header_branch
      %17 = sbr.rel (%p15) target = $region8
    $region5: #{affine_coupling.6} parent=1 // loop_body
      %s19 = ssub.s32 %s14, 1
      %s20 = ssub.s32 %s14, 2
      %s21 = sadd.s32 %s14, 1
      %s22 = ssub.s32 %s14, %s21
      %p23 = scmp.eq.s32.totalorder %s22, 0
      %s25 = sadd.s32 %s24, 1
      %s26 = scalar_select %p23, %s24, %s25
      %p29 = pneg %p23
      %p30 = scmp.eq.s32.totalorder %s14, 2
      %p31 = por %p29, %p30
      %p32 = scmp.ne.s32.totalorder %s24, %s27
      %p33 = scmp.eq.s32.totalorder %s14, 0
      %p34 = por %p32, %p33
      %p35 = scmp.ne.s32.totalorder %s24, %s27
      %p36 = scmp.eq.s32.totalorder %s19, 2
      %p37 = por %p35, %p36
      %p38 = scmp.ne.s32.totalorder %s27, %s28
      %p39 = scmp.eq.s32.totalorder %s19, 0
      %p40 = por %p38, %p39
      %p41 = scmp.ne.s32.totalorder %s27, %s28
      %p42 = scmp.eq.s32.totalorder %s20, 2
      %p43 = por %p41, %p42
      %p45 = scmp.ne.s32.totalorder %s28, %s44
      %p46 = scmp.eq.s32.totalorder %s20, 0
      %p47 = por %p45, %p46
      %s49 = sadd.s32 %s48, 1
      %p52 = scmp.eq.s32.totalorder %s14, 2
      %p53 = scmp.ne.s32.totalorder %s48, %s50
      %p54 = scmp.eq.s32.totalorder %s14, 0
      %p55 = por %p53, %p54
      %p56 = scmp.ne.s32.totalorder %s48, %s50
      %p57 = scmp.eq.s32.totalorder %s19, 2
      %p58 = por %p56, %p57
      %p59 = scmp.ne.s32.totalorder %s50, %s51
      %p60 = scmp.eq.s32.totalorder %s19, 0
      %p61 = por %p59, %p60
      %p62 = scmp.ne.s32.totalorder %s50, %s51
      %p63 = scmp.eq.s32.totalorder %s20, 2
      %p64 = por %p62, %p63
      %p66 = scmp.ne.s32.totalorder %s51, %s65
      %p67 = scmp.eq.s32.totalorder %s20, 0
      %p68 = por %p66, %p67
      %s70 = sadd.s32 %s69, 1
      %p73 = scmp.eq.s32.totalorder %s14, 2
      %p74 = scmp.ne.s32.totalorder %s69, %s71
      %p75 = scmp.eq.s32.totalorder %s14, 0
      %p76 = por %p74, %p75
      %p77 = scmp.ne.s32.totalorder %s69, %s71
      %p78 = scmp.eq.s32.totalorder %s19, 2
      %p79 = por %p77, %p78
      %p80 = scmp.ne.s32.totalorder %s71, %s72
      %p81 = scmp.eq.s32.totalorder %s19, 0
      %p82 = por %p80, %p81
      %p83 = scmp.ne.s32.totalorder %s71, %s72
      %p84 = scmp.eq.s32.totalorder %s20, 2
      %p85 = por %p83, %p84
      %p87 = scmp.ne.s32.totalorder %s72, %s86
      %p88 = scmp.eq.s32.totalorder %s20, 0
      %p89 = por %p87, %p88
      %s91 = sadd.s32 %s90, 1
      %p94 = scmp.eq.s32.totalorder %s14, 2
      %p95 = scmp.ne.s32.totalorder %s90, %s92
      %p96 = scmp.eq.s32.totalorder %s14, 0
      %p97 = por %p95, %p96
      %p98 = scmp.ne.s32.totalorder %s90, %s92
      %p99 = scmp.eq.s32.totalorder %s19, 2
      %p100 = por %p98, %p99
      %p101 = scmp.ne.s32.totalorder %s92, %s93
      %p102 = scmp.eq.s32.totalorder %s19, 0
      %p103 = por %p101, %p102
      %p104 = scmp.ne.s32.totalorder %s92, %s93
      %p105 = scmp.eq.s32.totalorder %s20, 2
      %p106 = por %p104, %p105
      %p108 = scmp.ne.s32.totalorder %s93, %s107
      %p109 = scmp.eq.s32.totalorder %s20, 0
      %p110 = por %p108, %p109
      %s111 = ssub.s32 %s14, %s21
      %p112 = scmp.eq.s32.totalorder %s111, 0
      %s114 = sadd.s32 %s113, 1
      %s115 = scalar_select %p112, %s113, %s114
      %p118 = pneg %p112
      %p119 = scmp.eq.s32.totalorder %s14, 2
      %p120 = por %p118, %p119
      %p121 = scmp.ne.s32.totalorder %s113, %s116
      %p122 = scmp.eq.s32.totalorder %s14, 0
      %p123 = por %p121, %p122
      %p124 = scmp.ne.s32.totalorder %s113, %s116
      %p125 = scmp.eq.s32.totalorder %s19, 2
      %p126 = por %p124, %p125
      %p127 = scmp.ne.s32.totalorder %s116, %s117
      %p128 = scmp.eq.s32.totalorder %s19, 0
      %p129 = por %p127, %p128
      %p130 = scmp.ne.s32.totalorder %s116, %s117
      %p131 = scmp.eq.s32.totalorder %s20, 2
      %p132 = por %p130, %p131
      %p134 = scmp.ne.s32.totalorder %s117, %s133
      %p135 = scmp.eq.s32.totalorder %s20, 0
      %p136 = por %p134, %p135
      %s137 = ssub.s32 %s14, %s21
      %p138 = scmp.eq.s32.totalorder %s137, 0
      %s140 = sadd.s32 %s139, 1
      %s141 = scalar_select %p138, %s139, %s140
      %p144 = pneg %p138
      %p145 = scmp.eq.s32.totalorder %s14, 2
      %p146 = por %p144, %p145
      %p147 = scmp.ne.s32.totalorder %s139, %s142
      %p148 = scmp.eq.s32.totalorder %s14, 0
      %p149 = por %p147, %p148
      %p150 = scmp.ne.s32.totalorder %s139, %s142
      %p151 = scmp.eq.s32.totalorder %s19, 2
      %p152 = por %p150, %p151
      %p153 = scmp.ne.s32.totalorder %s142, %s143
      %p154 = scmp.eq.s32.totalorder %s19, 0
      %p155 = por %p153, %p154
      %p156 = scmp.ne.s32.totalorder %s142, %s143
      %p157 = scmp.eq.s32.totalorder %s20, 2
      %p158 = por %p156, %p157
      %p160 = scmp.ne.s32.totalorder %s143, %s159
      %p161 = scmp.eq.s32.totalorder %s20, 0
      %p162 = por %p160, %p161
      %p163 = scmp.le.s32.totalorder 1, %s14
      %p164 = scmp.lt.s32.totalorder %s14, 4
      %p165 = pnand %p163, %p164
      %p166 = pneg %p165
      // Predicated region
      $region9: #{affine_coupling.6} parent=5 // pred_check
        _
      $region10: #{affine_coupling.6} parent=5 // pred_check_branch
        %168 = sbr.rel (%p165) target = $region12
      $region11: #{affine_coupling.6} parent=5 // pred_region
        %s169 = ssub.s32 %s14, 1
        // Predicated region
        $region13: #{affine_coupling.6} parent=11 // pred_check
          %p170 = pneg %p61
        $region14: #{affine_coupling.6} parent=11 // pred_check_branch
          %172 = sbr.rel (%p170) target = $region16
        $region15: #{affine_coupling.6} parent=11 // pred_region
          %174 = vsyncadd [#allocation3], 0
          %s175 = sshll.u32 %s1, 4
          %s176 = int_to_ptr.hbm [resolvable:$true] %s175
          %s177 = sshll.u32 [#allocation2], 4
          %s178 = int_to_ptr.vmem [resolvable:$true] %s177
          %183 = dma.hbm_to_vmem [thread:$0]  %s176, 1024, %s178, [#allocation3], 64, 64, 4
        $region16: #{affine_coupling.6} parent=11 // pred_fallthru
          _
        // Predicated region
        $region17: #{affine_coupling.6} parent=11 // pred_check
          %p184 = pneg %p82
        $region18: #{affine_coupling.6} parent=11 // pred_check_branch
          %186 = sbr.rel (%p184) target = $region20
        $region19: #{affine_coupling.6} parent=11 // pred_region
          %188 = vsyncadd [#allocation5], 0
          %s189 = sshll.u32 %s2, 4
          %s190 = int_to_ptr.hbm [resolvable:$true] %s189
          %s191 = sshll.u32 [#allocation4], 4
          %s192 = int_to_ptr.vmem [resolvable:$true] %s191
          %197 = dma.hbm_to_vmem [thread:$0]  %s190, 1024, %s192, [#allocation5], 64, 64, 4
        $region20: #{affine_coupling.6} parent=11 // pred_fallthru
          _
        // Predicated region
        $region21: #{affine_coupling.6} parent=11 // pred_check
          %p198 = pneg %p103
        $region22: #{affine_coupling.6} parent=11 // pred_check_branch
          %200 = sbr.rel (%p198) target = $region24
        $region23: #{affine_coupling.6} parent=11 // pred_region
          _
        $region24: #{affine_coupling.6} parent=11 // pred_fallthru
          _
      $region12: #{affine_coupling.6} parent=5 // pred_fallthru
        _
      %p201 = scmp.lt.s32.totalorder %s14, 3
      // Predicated region
      $region25: #{affine_coupling.6} parent=5 // pred_check
        %p202 = pneg %p201
      $region26: #{affine_coupling.6} parent=5 // pred_check_branch
        %204 = sbr.rel (%p202) target = $region28
      $region27: #{affine_coupling.6} parent=5 // pred_region
        // Predicated region
        $region29: #{affine_coupling.6} parent=27 // pred_check
          %p205 = pneg %p34
        $region30: #{affine_coupling.6} parent=27 // pred_check_branch
          %207 = sbr.rel (%p205) target = $region32
        $region31: #{affine_coupling.6} parent=27 // pred_region
          %s208 = smul.u32 2, %s14
          %p209 = scmp.lt.s32.totalorder %s208, 5
          %s210 = scalar_select %p209, %s208, 5
          %s211 = smul.addr %s210, 2
          %s212 = smul.addr %s211, 8
          %s213 = scalar_lea.vmem %s0, %s212
          %s214 = smul.u32 2, %s14
        $region32: #{affine_coupling.6} parent=27 // pred_fallthru
          _
      $region28: #{affine_coupling.6} parent=5 // pred_fallthru
        _
      %p215 = scmp.le.s32.totalorder 1, %s14
      %p216 = scmp.lt.s32.totalorder %s14, 4
      %p217 = pnand %p215, %p216
      %p218 = pneg %p217
      // Predicated region
      $region33: #{affine_coupling.6} parent=5 // pred_check
        _
      $region34: #{affine_coupling.6} parent=5 // pred_check_branch
        %220 = sbr.rel (%p217) target = $region36
      $region35: #{affine_coupling.6} parent=5 // pred_region
        %s221 = ssub.s32 %s14, 1
        // Predicated region
        $region37: #{affine_coupling.6} parent=35 // pred_check
          %p222 = pneg %p61
        $region38: #{affine_coupling.6} parent=35 // pred_check_branch
          %224 = sbr.rel (%p222) target = $region40
        $region39: #{affine_coupling.6} parent=35 // pred_region
          %226 = dma.done [#allocation3], 1024
        $region40: #{affine_coupling.6} parent=35 // pred_fallthru
          _
        // Predicated region
        $region41: #{affine_coupling.6} parent=35 // pred_check
          %p227 = pneg %p82
        $region42: #{affine_coupling.6} parent=35 // pred_check_branch
          %229 = sbr.rel (%p227) target = $region44
        $region43: #{affine_coupling.6} parent=35 // pred_region
          %231 = dma.done [#allocation5], 1024
        $region44: #{affine_coupling.6} parent=35 // pred_fallthru
          _
        %s232 = smul.u32 2, %s19
        %p233 = scmp.lt.s32.totalorder %s232, 5
        %s234 = scalar_select %p233, %s232, 5
        %s235 = smul.addr %s234, 2
        %s236 = smul.addr %s235, 8
        %s237 = scalar_lea.vmem %s0, %s236
        %p238 = pneg %p40
        %p239 = pneg %p37
        %p240 = pneg %p61
        %p241 = pneg %p58
        %p242 = pneg %p82
        %p243 = pneg %p79
        %p244 = pneg %p103
        %p245 = pneg %p100
        %p246 = pneg %p129
        %p247 = pneg %p126
        %s248 = smul.u32 2, %s19
        %p249 = scmp.lt.s32.totalorder %s248, 5
        %s250 = scalar_select %p249, %s248, 5
        %s251 = smul.addr %s250, 2
        %s252 = smul.addr %s251, 8
        %s253 = scalar_lea.vmem %s4, %s252
        %p254 = pneg %p155
        %p255 = pneg %p152
        %p256 = scmp.lt.s32.totalorder %s19, 2
        %s257 = scalar_select %p256, %s19, 2
        %s258 = smul.addr %s257, 2
        %s259 = smul.addr %s258, 2
        %s260 = scalar_lea.vmem %s5, %s259
        %s261 = smul.u32 2, %s19
        %p262 = scmp.lt.s32.totalorder %s261, 5
        %s263 = scalar_select %p262, %s261, 5
        %s264 = smul.addr %s263, 2
        %s265 = smul.addr %s264, 8
        %s266 = scalar_lea.vmem %s0, %s265
        %s267 = smul.u32 2, %s19
        %s268 = smul.u32 2, %s19
        %p269 = scmp.lt.s32.totalorder %s268, 5
        %s270 = scalar_select %p269, %s268, 5
        %s271 = smul.addr %s270, 2
        %s272 = smul.addr %s271, 8
        %s273 = scalar_lea.vmem %s4, %s272
        %s274 = smul.u32 2, %s19
        %p275 = scmp.lt.s32.totalorder %s19, 2
        %s276 = scalar_select %p275, %s19, 2
        %s277 = smul.addr %s276, 2
        %s278 = smul.addr %s277, 2
        %s279 = scalar_lea.vmem %s5, %s278
        %v280 = vld [vmem:[%s266] sm:$0xff]
        %v281 = vld [vmem:[%s266 + $0x8] sm:$0xff]
        %v282 = vld [vmem:[%s266 + $0x10] sm:$0xff]
        %v283 = vld [vmem:[%s266 + $0x18] sm:$0xff]
        %v284 = vpack.c.bf16 %v281, %v280
        %v285 = vpack.c.bf16 %v283, %v282
        %v286 = vld [vmem:[#allocation2] sm:$0xf]
        %v287 = vld [vmem:[#allocation2 + $0x4] sm:$0xf]
        %v288 = vld [vmem:[#allocation2 + $0x8] sm:$0xf]
        %v289 = vld [vmem:[#allocation2 + $0xc] sm:$0xf]
        %v290 = vld [vmem:[#allocation2 + $0x10] sm:$0xf]
        %v291 = vld [vmem:[#allocation2 + $0x14] sm:$0xf]
        %v292 = vld [vmem:[#allocation2 + $0x18] sm:$0xf]
        %v293 = vld [vmem:[#allocation2 + $0x1c] sm:$0xf]
        %v294 = vld [vmem:[#allocation2 + $0x20] sm:$0xf]
        %v295 = vld [vmem:[#allocation2 + $0x24] sm:$0xf]
        %v296 = vld [vmem:[#allocation2 + $0x28] sm:$0xf]
        %v297 = vld [vmem:[#allocation2 + $0x2c] sm:$0xf]
        %v298 = vld [vmem:[#allocation2 + $0x30] sm:$0xf]
        %v299 = vld [vmem:[#allocation2 + $0x34] sm:$0xf]
        %v300 = vld [vmem:[#allocation2 + $0x38] sm:$0xf]
        %v301 = vld [vmem:[#allocation2 + $0x3c] sm:$0xf]
        %v304 = vunpack.c.l.b16 %v284
        %v305 = vunpack.c.l.b16 %v285
        %v306 = vpack.c.b16 %v305, %v304
        %v324 = vunpack.c.l.b16 %v286
        %v325 = vunpack.c.l.b16 %v287
        %v326 = vunpack.c.l.b16 %v288
        %v327 = vunpack.c.l.b16 %v289
        %v328 = vunpack.c.l.b16 %v290
        %v329 = vunpack.c.l.b16 %v291
        %v330 = vunpack.c.l.b16 %v292
        %v331 = vunpack.c.l.b16 %v293
        %v332 = vunpack.c.l.b16 %v294
        %v333 = vunpack.c.l.b16 %v295
        %v334 = vunpack.c.l.b16 %v296
        %v335 = vunpack.c.l.b16 %v297
        %v336 = vunpack.c.l.b16 %v298
        %v337 = vunpack.c.l.b16 %v299
        %v338 = vunpack.c.l.b16 %v300
        %v339 = vunpack.c.l.b16 %v301
        %v340 = vpack.c.b16 %v325, %v324
        %v341 = vpack.c.b16 %v327, %v326
        %v342 = vpack.c.b16 %v329, %v328
        %v343 = vpack.c.b16 %v331, %v330
        %v344 = vpack.c.b16 %v333, %v332
        %v345 = vpack.c.b16 %v335, %v334
        %v346 = vpack.c.b16 %v337, %v336
        %v347 = vpack.c.b16 %v339, %v338
        %356 = vmatpush.bf16.msra.mxu0 %v347
        %357 = vmatpush.bf16.msra.mxu0 %v346
        %358 = vmatpush.bf16.msra.mxu0 %v345
        %359 = vmatpush.bf16.msra.mxu0 %v344
        %360 = vmatpush.bf16.msra.mxu0 %v343
        %361 = vmatpush.bf16.msra.mxu0 %v342
        %362 = vmatpush.bf16.msra.mxu0 %v341
        %363 = vmatpush.bf16.msra.mxu0 %v340
        %364 = vmatmul.bf16.gmra.mxu0 %v306
        %v365 = vpop.f32.mrf.mxu0
        %v366 = vadd.f32 0.0, %v365
        %v367 = vpop.f32.mrf.mxu0
        %v368 = vadd.f32 0.0, %v367
        %369 = vdwg.mxu0
        %v370 = vld [vmem:[#allocation4] sm:$0xf]
        %v371 = vld [vmem:[#allocation4 + $0x4] sm:$0xf]
        %v372 = vld [vmem:[#allocation4 + $0x8] sm:$0xf]
        %v373 = vld [vmem:[#allocation4 + $0xc] sm:$0xf]
        %v374 = vld [vmem:[#allocation4 + $0x10] sm:$0xf]
        %v375 = vld [vmem:[#allocation4 + $0x14] sm:$0xf]
        %v376 = vld [vmem:[#allocation4 + $0x18] sm:$0xf]
        %v377 = vld [vmem:[#allocation4 + $0x1c] sm:$0xf]
        %v378 = vld [vmem:[#allocation4 + $0x20] sm:$0xf]
        %v379 = vld [vmem:[#allocation4 + $0x24] sm:$0xf]
        %v380 = vld [vmem:[#allocation4 + $0x28] sm:$0xf]
        %v381 = vld [vmem:[#allocation4 + $0x2c] sm:$0xf]
        %v382 = vld [vmem:[#allocation4 + $0x30] sm:$0xf]
        %v383 = vld [vmem:[#allocation4 + $0x34] sm:$0xf]
        %v384 = vld [vmem:[#allocation4 + $0x38] sm:$0xf]
        %v385 = vld [vmem:[#allocation4 + $0x3c] sm:$0xf]
        %v386 = vunpack.c.h.b16 %v284
        %v387 = vunpack.c.h.b16 %v285
        %v388 = vpack.c.b16 %v387, %v386
        %v406 = vunpack.c.l.b16 %v370
        %v407 = vunpack.c.l.b16 %v371
        %v408 = vunpack.c.l.b16 %v372
        %v409 = vunpack.c.l.b16 %v373
        %v410 = vunpack.c.l.b16 %v374
        %v411 = vunpack.c.l.b16 %v375
        %v412 = vunpack.c.l.b16 %v376
        %v413 = vunpack.c.l.b16 %v377
        %v414 = vunpack.c.l.b16 %v378
        %v415 = vunpack.c.l.b16 %v379
        %v416 = vunpack.c.l.b16 %v380
        %v417 = vunpack.c.l.b16 %v381
        %v418 = vunpack.c.l.b16 %v382
        %v419 = vunpack.c.l.b16 %v383
        %v420 = vunpack.c.l.b16 %v384
        %v421 = vunpack.c.l.b16 %v385
        %v422 = vpack.c.b16 %v407, %v406
        %v423 = vpack.c.b16 %v409, %v408
        %v424 = vpack.c.b16 %v411, %v410
        %v425 = vpack.c.b16 %v413, %v412
        %v426 = vpack.c.b16 %v415, %v414
        %v427 = vpack.c.b16 %v417, %v416
        %v428 = vpack.c.b16 %v419, %v418
        %v429 = vpack.c.b16 %v421, %v420
        %438 = vmatpush.bf16.msra.mxu0 %v429
        %439 = vmatpush.bf16.msra.mxu0 %v428
        %440 = vmatpush.bf16.msra.mxu0 %v427
        %441 = vmatpush.bf16.msra.mxu0 %v426
        %442 = vmatpush.bf16.msra.mxu0 %v425
        %443 = vmatpush.bf16.msra.mxu0 %v424
        %444 = vmatpush.bf16.msra.mxu0 %v423
        %445 = vmatpush.bf16.msra.mxu0 %v422
        %446 = vmatmul.bf16.gmra.mxu0 %v388
        %v447 = vpop.f32.mrf.mxu0
        %v448 = vadd.f32 0.0, %v447
        %v449 = vpop.f32.mrf.mxu0
        %v450 = vadd.f32 0.0, %v449
        %451 = vdwg.mxu0
        %v452 = vld [vmem:[%s3] sm:$0x3]
        %v454 = vperm.slane %v452, 0
        %v455 = vperm.slane %v452, 1
        %v458 = vadd.f32 %v366, %v454
        %v459 = vadd.f32 %v448, %v455
        %v460 = vadd.f32 %v368, %v454
        %v461 = vadd.f32 %v450, %v455
        %vm462 = vcmp.ge.f32.partialorder %v458, 0.0
        %vm463 = vcmp.ge.f32.partialorder %v459, 0.0
        %vm464 = vcmp.ge.f32.partialorder %v460, 0.0
        %vm465 = vcmp.ge.f32.partialorder %v461, 0.0
        %v466 = vmul.f32 %v458, 0.05
        %v467 = vmul.f32 %v459, 0.05
        %v468 = vmul.f32 %v460, 0.05
        %v469 = vmul.f32 %v461, 0.05
        %v470 = vsel %vm462, %v458, %v466
        %v471 = vsel %vm463, %v459, %v467
        %v472 = vsel %vm464, %v460, %v468
        %v473 = vsel %vm465, %v461, %v469
        %474 = vst [vmem:[%s273] sm:$0xff] %v470
        %475 = vst [vmem:[%s273 + $0x8] sm:$0xff] %v471
        %476 = vst [vmem:[%s273 + $0x10] sm:$0xff] %v472
        %477 = vst [vmem:[%s273 + $0x18] sm:$0xff] %v473
        %v478 = vlaneseq
        %v479 = vshrl.u32 %v478, 7
        %v480 = vadd.s32 %v479, 8
        %s481 = smul.u32 %s19, 16
        %v482 = vstv %s481
        %v483 = vadd.s32 %v479, %v482
        %v484 = vadd.s32 %v480, %v482
        %vm485 = vcmp.lt.s32.totalorder %v483, 40
        %vm486 = vcmp.lt.s32.totalorder %v484, 40
        %v487 = vsel %vm485, %v470, 0.0
        %v488 = vsel %vm485, %v471, 0.0
        %v489 = vsel %vm486, %v472, 0.0
        %v490 = vsel %vm486, %v473, 0.0
        %v491 = vadd.f32 %v487, %v489
        %v492 = vrot.slane %v491, 4
        %v493 = vadd.f32 %v491, %v492
        %v494 = vrot.slane %v493, 2
        %v495 = vadd.f32 %v493, %v494
        %v496 = vrot.slane %v495, 1
        %v497 = vadd.f32 %v495, %v496
        %v498 = vadd.f32 %v488, %v490
        %v499 = vrot.slane %v498, 4
        %v500 = vadd.f32 %v498, %v499
        %v501 = vrot.slane %v500, 2
        %v502 = vadd.f32 %v500, %v501
        %v503 = vrot.slane %v502, 1
        %v504 = vadd.f32 %v502, %v503
        %v505 = vmul.f32 %v470, %v487
        %v506 = vmul.f32 %v471, %v488
        %v507 = vmul.f32 %v472, %v489
        %v508 = vmul.f32 %v473, %v490
        %v509 = vadd.f32 %v505, %v507
        %v510 = vrot.slane %v509, 4
        %v511 = vadd.f32 %v509, %v510
        %v512 = vrot.slane %v511, 2
        %v513 = vadd.f32 %v511, %v512
        %v514 = vrot.slane %v513, 1
        %v515 = vadd.f32 %v513, %v514
        %v516 = vadd.f32 %v506, %v508
        %v517 = vrot.slane %v516, 4
        %v518 = vadd.f32 %v516, %v517
        %v519 = vrot.slane %v518, 2
        %v520 = vadd.f32 %v518, %v519
        %v521 = vrot.slane %v520, 1
        %v522 = vadd.f32 %v520, %v521
        %vm523 = vcmask 1040384
        %v524 = vsel %vm523, %v497, %v515
        %v525 = vsel %vm523, %v504, %v522
        %v528 = vrot.slane %v525, 6
        %vm529 = vcmask 1041408
        %v530 = vsel %vm529, %v524, %v528
        %532 = vst [vmem:[%s279] sm:$0xf] %v530
        %s533 = smul.u32 2, %s19
        %p534 = scmp.lt.s32.totalorder %s533, 5
        %s535 = scalar_select %p534, %s533, 5
        %s536 = smul.addr %s535, 2
        %s537 = smul.addr %s536, 8
        %s538 = scalar_lea.vmem %s4, %s537
        %p539 = scmp.lt.s32.totalorder %s19, 2
        %s540 = scalar_select %p539, %s19, 2
        %s541 = smul.addr %s540, 2
        %s542 = smul.addr %s541, 2
        %s543 = scalar_lea.vmem %s5, %s542
        // Predicated region
        $region45: #{affine_coupling.6} parent=35 // pred_check
          %p544 = pneg %p126
        $region46: #{affine_coupling.6} parent=35 // pred_check_branch
          %546 = sbr.rel (%p544) target = $region48
        $region47: #{affine_coupling.6} parent=35 // pred_region
          %s547 = smul.u32 2, %s19
        $region48: #{affine_coupling.6} parent=35 // pred_fallthru
          _
        // Predicated region
        $region49: #{affine_coupling.6} parent=35 // pred_check
          %p548 = pneg %p152
        $region50: #{affine_coupling.6} parent=35 // pred_check_branch
          %550 = sbr.rel (%p548) target = $region52
        $region51: #{affine_coupling.6} parent=35 // pred_region
          _
        $region52: #{affine_coupling.6} parent=35 // pred_fallthru
          _
      $region36: #{affine_coupling.6} parent=5 // pred_fallthru
        _
      %p551 = scmp.le.s32.totalorder 2, %s14
      // Predicated region
      $region53: #{affine_coupling.6} parent=5 // pred_check
        %p552 = pneg %p551
      $region54: #{affine_coupling.6} parent=5 // pred_check_branch
        %554 = sbr.rel (%p552) target = $region56
      $region55: #{affine_coupling.6} parent=5 // pred_region
        %s555 = ssub.s32 %s14, 2
        // Predicated region
        $region57: #{affine_coupling.6} parent=55 // pred_check
          %p556 = pneg %p132
        $region58: #{affine_coupling.6} parent=55 // pred_check_branch
          %558 = sbr.rel (%p556) target = $region60
        $region59: #{affine_coupling.6} parent=55 // pred_region
          %s559 = smul.u32 2, %s20
          %p560 = scmp.lt.s32.totalorder %s559, 5
          %s561 = scalar_select %p560, %s559, 5
          %s562 = smul.addr %s561, 2
          %s563 = smul.addr %s562, 8
          %s564 = scalar_lea.vmem %s4, %s563
        $region60: #{affine_coupling.6} parent=55 // pred_fallthru
          _
        // Predicated region
        $region61: #{affine_coupling.6} parent=55 // pred_check
          %p565 = pneg %p158
        $region62: #{affine_coupling.6} parent=55 // pred_check_branch
          %567 = sbr.rel (%p565) target = $region64
        $region63: #{affine_coupling.6} parent=55 // pred_region
          %p568 = scmp.lt.s32.totalorder %s20, 2
          %s569 = scalar_select %p568, %s20, 2
          %s570 = smul.addr %s569, 2
          %s571 = smul.addr %s570, 2
          %s572 = scalar_lea.vmem %s5, %s571
        $region64: #{affine_coupling.6} parent=55 // pred_fallthru
          _
      $region56: #{affine_coupling.6} parent=5 // pred_fallthru
        _
    $region6: #{affine_coupling.6} parent=1 // loop_footer
      %s18 = sadd.s32 1, %s14
    $region7: #{affine_coupling.6} parent=1 // loop_footer_branch
      %13 = sbr.rel target = $region3
    $region8: #{affine_coupling.6} parent=1 // loop_exit
      _
    %573 = vsyncpa [#allocation3], 1
    %s574 = scalar_lea.sflag [#allocation3], 1
    %575 = vsyncpa %s574, 1
    %576 = vsyncpa [#allocation5], 1

// kernel: affine_coupling.7
$region0: #{affine_coupling.7}
  #allocation0 [shape = 'u32[]', space=smem, size = 0x4, offset = 0x4, fixed_abs, tag = 'smem constant byte address 0x4 - core index']
  #allocation1 [shape = 'u32[72,128]{1,0:T(1,128)}', space=vmem, size = 0x9000, scoped, tag = 'internal scratch']
  %s0 = inlined_call_operand.vmem [shape: f32[48,256], index: 0, kind: input, shape index: {}]
  %s1 = inlined_call_operand.vmem [shape: f32[3,2,256], index: 1, kind: input, shape index: {}]
  %s2 = inlined_call_operand.vmem [shape: f32[1,256], index: 2, kind: input, shape index: {}]
  %s3 = inlined_call_operand.vmem [shape: f32[1,256], index: 3, kind: input, shape index: {}]
  %s4 = inlined_call_operand.hbm [shape: bf16[128,128], index: 4, kind: input, shape index: {}]
  %s5 = inlined_call_operand.hbm [shape: bf16[128,128], index: 5, kind: input, shape index: {}]
  %s6 = inlined_call_operand.vmem [shape: f32[1,256], index: 6, kind: input, shape index: {}]
  %s7 = inlined_call_operand.vmem [shape: f32[48,256], index: 7, kind: output, shape index: {0}]
  %s8 = inlined_call_operand.vmem [shape: f32[3,2,256], index: 8, kind: output, shape index: {1}]
  %9 = xla_tuple %s7, %s8
  %s10 = sld [smem:[#allocation0]]
  $region77: #{affine_coupling.7} parent=0
    _
  %s12 = ssub.s32 1, %s10
  %s13 = scalar_select 0, %s12, %s10
  $region1: #{affine_coupling.7} parent=0
    #allocation2 [shape = 'u8[32768]{0}', space=vmem, size = 0x8000, scoped, tag = 'input window, operand 4, single buffered']
    #allocation3 [shape = 's32[2]{0}', space=sflag, size = 0x8, scoped, tag = 'scoped memory for affine_coupling.7']
    #allocation4 [shape = 'u8[32768]{0}', space=vmem, size = 0x8000, scoped, tag = 'input window, operand 5, single buffered']
    #allocation5 [shape = 's32[1]{0}', space=sflag, size = 0x4, scoped, tag = 'scoped memory for affine_coupling.7']
    %14 = vsyncpa [#allocation3], 0
    %15 = vsyncpa [#allocation5], 0
    loop: start=0, step=1, limit=5
    $region2: #{affine_coupling.7} parent=1 // loop_pre_header
      _
    $region3: #{affine_coupling.7} parent=1 // loop_header
      %s17 = sphi 0, %s21
      %p18 = scmp.ge.s32.totalorder %s17, 5
      %s27 = sphi 0, %s29
      %s30 = sphi 0, %s27
      %s31 = sphi 0, %s30
      %s47 = sphi 0, %s31
      %s51 = sphi 0, %s51
      %s53 = sphi 0, %s51
      %s54 = sphi 0, %s53
      %s68 = sphi 0, %s54
      %s72 = sphi 0, %s72
      %s74 = sphi 0, %s72
      %s75 = sphi 0, %s74
      %s89 = sphi 0, %s75
      %s93 = sphi 0, %s93
      %s95 = sphi 0, %s93
      %s96 = sphi 0, %s95
      %s110 = sphi 0, %s96
      %s114 = sphi 0, %s114
      %s116 = sphi 0, %s114
      %s117 = sphi 0, %s116
      %s131 = sphi 0, %s117
      %s135 = sphi 0, %s135
      %s137 = sphi 0, %s135
      %s138 = sphi 0, %s137
      %s152 = sphi 0, %s138
      %s156 = sphi 0, %s156
      %s158 = sphi 0, %s156
      %s159 = sphi 0, %s158
      %s173 = sphi 0, %s159
      %s179 = sphi 0, %s181
      %s182 = sphi 0, %s179
      %s183 = sphi 0, %s182
      %s199 = sphi 0, %s183
      %s205 = sphi 0, %s207
      %s208 = sphi 0, %s205
      %s209 = sphi 0, %s208
      %s225 = sphi 0, %s209
    $region4: #{affine_coupling.7} parent=1 // loop_header_branch
      %20 = sbr.rel (%p18) target = $region8
    $region5: #{affine_coupling.7} parent=1 // loop_body
      %s22 = ssub.s32 %s17, 1
      %s23 = ssub.s32 %s17, 2
      %s24 = sadd.s32 %s17, 1
      %s25 = ssub.s32 %s17, %s24
      %p26 = scmp.eq.s32.totalorder %s25, 0
      %s28 = sadd.s32 %s27, 1
      %s29 = scalar_select %p26, %s27, %s28
      %p32 = pneg %p26
      %p33 = scmp.eq.s32.totalorder %s17, 2
      %p34 = por %p32, %p33
      %p35 = scmp.ne.s32.totalorder %s27, %s30
      %p36 = scmp.eq.s32.totalorder %s17, 0
      %p37 = por %p35, %p36
      %p38 = scmp.ne.s32.totalorder %s27, %s30
      %p39 = scmp.eq.s32.totalorder %s22, 2
      %p40 = por %p38, %p39
      %p41 = scmp.ne.s32.totalorder %s30, %s31
      %p42 = scmp.eq.s32.totalorder %s22, 0
      %p43 = por %p41, %p42
      %p44 = scmp.ne.s32.totalorder %s30, %s31
      %p45 = scmp.eq.s32.totalorder %s23, 2
      %p46 = por %p44, %p45
      %p48 = scmp.ne.s32.totalorder %s31, %s47
      %p49 = scmp.eq.s32.totalorder %s23, 0
      %p50 = por %p48, %p49
      %s52 = sadd.s32 %s51, 1
      %p55 = scmp.eq.s32.totalorder %s17, 2
      %p56 = scmp.ne.s32.totalorder %s51, %s53
      %p57 = scmp.eq.s32.totalorder %s17, 0
      %p58 = por %p56, %p57
      %p59 = scmp.ne.s32.totalorder %s51, %s53
      %p60 = scmp.eq.s32.totalorder %s22, 2
      %p61 = por %p59, %p60
      %p62 = scmp.ne.s32.totalorder %s53, %s54
      %p63 = scmp.eq.s32.totalorder %s22, 0
      %p64 = por %p62, %p63
      %p65 = scmp.ne.s32.totalorder %s53, %s54
      %p66 = scmp.eq.s32.totalorder %s23, 2
      %p67 = por %p65, %p66
      %p69 = scmp.ne.s32.totalorder %s54, %s68
      %p70 = scmp.eq.s32.totalorder %s23, 0
      %p71 = por %p69, %p70
      %s73 = sadd.s32 %s72, 1
      %p76 = scmp.eq.s32.totalorder %s17, 2
      %p77 = scmp.ne.s32.totalorder %s72, %s74
      %p78 = scmp.eq.s32.totalorder %s17, 0
      %p79 = por %p77, %p78
      %p80 = scmp.ne.s32.totalorder %s72, %s74
      %p81 = scmp.eq.s32.totalorder %s22, 2
      %p82 = por %p80, %p81
      %p83 = scmp.ne.s32.totalorder %s74, %s75
      %p84 = scmp.eq.s32.totalorder %s22, 0
      %p85 = por %p83, %p84
      %p86 = scmp.ne.s32.totalorder %s74, %s75
      %p87 = scmp.eq.s32.totalorder %s23, 2
      %p88 = por %p86, %p87
      %p90 = scmp.ne.s32.totalorder %s75, %s89
      %p91 = scmp.eq.s32.totalorder %s23, 0
      %p92 = por %p90, %p91
      %s94 = sadd.s32 %s93, 1
      %p97 = scmp.eq.s32.totalorder %s17, 2
      %p98 = scmp.ne.s32.totalorder %s93, %s95
      %p99 = scmp.eq.s32.totalorder %s17, 0
      %p100 = por %p98, %p99
      %p101 = scmp.ne.s32.totalorder %s93, %s95
      %p102 = scmp.eq.s32.totalorder %s22, 2
      %p103 = por %p101, %p102
      %p104 = scmp.ne.s32.totalorder %s95, %s96
      %p105 = scmp.eq.s32.totalorder %s22, 0
      %p106 = por %p104, %p105
      %p107 = scmp.ne.s32.totalorder %s95, %s96
      %p108 = scmp.eq.s32.totalorder %s23, 2
      %p109 = por %p107, %p108
      %p111 = scmp.ne.s32.totalorder %s96, %s110
      %p112 = scmp.eq.s32.totalorder %s23, 0
      %p113 = por %p111, %p112
      %s115 = sadd.s32 %s114, 1
      %p118 = scmp.eq.s32.totalorder %s17, 2
      %p119 = scmp.ne.s32.totalorder %s114, %s116
      %p120 = scmp.eq.s32.totalorder %s17, 0
      %p121 = por %p119, %p120
      %p122 = scmp.ne.s32.totalorder %s114, %s116
      %p123 = scmp.eq.s32.totalorder %s22, 2
      %p124 = por %p122, %p123
      %p125 = scmp.ne.s32.totalorder %s116, %s117
      %p126 = scmp.eq.s32.totalorder %s22, 0
      %p127 = por %p125, %p126
      %p128 = scmp.ne.s32.totalorder %s116, %s117
      %p129 = scmp.eq.s32.totalorder %s23, 2
      %p130 = por %p128, %p129
      %p132 = scmp.ne.s32.totalorder %s117, %s131
      %p133 = scmp.eq.s32.totalorder %s23, 0
      %p134 = por %p132, %p133
      %s136 = sadd.s32 %s135, 1
      %p139 = scmp.eq.s32.totalorder %s17, 2
      %p140 = scmp.ne.s32.totalorder %s135, %s137
      %p141 = scmp.eq.s32.totalorder %s17, 0
      %p142 = por %p140, %p141
      %p143 = scmp.ne.s32.totalorder %s135, %s137
      %p144 = scmp.eq.s32.totalorder %s22, 2
      %p145 = por %p143, %p144
      %p146 = scmp.ne.s32.totalorder %s137, %s138
      %p147 = scmp.eq.s32.totalorder %s22, 0
      %p148 = por %p146, %p147
      %p149 = scmp.ne.s32.totalorder %s137, %s138
      %p150 = scmp.eq.s32.totalorder %s23, 2
      %p151 = por %p149, %p150
      %p153 = scmp.ne.s32.totalorder %s138, %s152
      %p154 = scmp.eq.s32.totalorder %s23, 0
      %p155 = por %p153, %p154
      %s157 = sadd.s32 %s156, 1
      %p160 = scmp.eq.s32.totalorder %s17, 2
      %p161 = scmp.ne.s32.totalorder %s156, %s158
      %p162 = scmp.eq.s32.totalorder %s17, 0
      %p163 = por %p161, %p162
      %p164 = scmp.ne.s32.totalorder %s156, %s158
      %p165 = scmp.eq.s32.totalorder %s22, 2
      %p166 = por %p164, %p165
      %p167 = scmp.ne.s32.totalorder %s158, %s159
      %p168 = scmp.eq.s32.totalorder %s22, 0
      %p169 = por %p167, %p168
      %p170 = scmp.ne.s32.totalorder %s158, %s159
      %p171 = scmp.eq.s32.totalorder %s23, 2
      %p172 = por %p170, %p171
      %p174 = scmp.ne.s32.totalorder %s159, %s173
      %p175 = scmp.eq.s32.totalorder %s23, 0
      %p176 = por %p174, %p175
      %s177 = ssub.s32 %s17, %s24
      %p178 = scmp.eq.s32.totalorder %s177, 0
      %s180 = sadd.s32 %s179, 1
      %s181 = scalar_select %p178, %s179, %s180
      %p184 = pneg %p178
      %p185 = scmp.eq.s32.totalorder %s17, 2
      %p186 = por %p184, %p185
      %p187 = scmp.ne.s32.totalorder %s179, %s182
      %p188 = scmp.eq.s32.totalorder %s17, 0
      %p189 = por %p187, %p188
      %p190 = scmp.ne.s32.totalorder %s179, %s182
      %p191 = scmp.eq.s32.totalorder %s22, 2
      %p192 = por %p190, %p191
      %p193 = scmp.ne.s32.totalorder %s182, %s183
      %p194 = scmp.eq.s32.totalorder %s22, 0
      %p195 = por %p193, %p194
      %p196 = scmp.ne.s32.totalorder %s182, %s183
      %p197 = scmp.eq.s32.totalorder %s23, 2
      %p198 = por %p196, %p197
      %p200 = scmp.ne.s32.totalorder %s183, %s199
      %p201 = scmp.eq.s32.totalorder %s23, 0
      %p202 = por %p200, %p201
      %s203 = ssub.s32 %s17, %s24
      %p204 = scmp.eq.s32.totalorder %s203, 0
      %s206 = sadd.s32 %s205, 1
      %s207 = scalar_select %p204, %s205, %s206
      %p210 = pneg %p204
      %p211 = scmp.eq.s32.totalorder %s17, 2
      %p212 = por %p210, %p211
      %p213 = scmp.ne.s32.totalorder %s205, %s208
      %p214 = scmp.eq.s32.totalorder %s17, 0
      %p215 = por %p213, %p214
      %p216 = scmp.ne.s32.totalorder %s205, %s208
      %p217 = scmp.eq.s32.totalorder %s22, 2
      %p218 = por %p216, %p217
      %p219 = scmp.ne.s32.totalorder %s208, %s209
      %p220 = scmp.eq.s32.totalorder %s22, 0
      %p221 = por %p219, %p220
      %p222 = scmp.ne.s32.totalorder %s208, %s209
      %p223 = scmp.eq.s32.totalorder %s23, 2
      %p224 = por %p222, %p223
      %p226 = scmp.ne.s32.totalorder %s209, %s225
      %p227 = scmp.eq.s32.totalorder %s23, 0
      %p228 = por %p226, %p227
      %p229 = scmp.le.s32.totalorder 1, %s17
      %p230 = scmp.lt.s32.totalorder %s17, 4
      %p231 = pnand %p229, %p230
      %p232 = pneg %p231
      // Predicated region
      $region9: #{affine_coupling.7} parent=5 // pred_check
        _
      $region10: #{affine_coupling.7} parent=5 // pred_check_branch
        %234 = sbr.rel (%p231) target = $region12
      $region11: #{affine_coupling.7} parent=5 // pred_region
        %s235 = ssub.s32 %s17, 1
        // Predicated region
        $region13: #{affine_coupling.7} parent=11 // pred_check
          %p236 = pneg %p64
        $region14: #{affine_coupling.7} parent=11 // pred_check_branch
          %238 = sbr.rel (%p236) target = $region16
        $region15: #{affine_coupling.7} parent=11 // pred_region
          _
        $region16: #{affine_coupling.7} parent=11 // pred_fallthru
          _
        // Predicated region
        $region17: #{affine_coupling.7} parent=11 // pred_check
          %p239 = pneg %p85
        $region18: #{affine_coupling.7} parent=11 // pred_check_branch
          %241 = sbr.rel (%p239) target = $region20
        $region19: #{affine_coupling.7} parent=11 // pred_region
          _
        $region20: #{affine_coupling.7} parent=11 // pred_fallthru
          _
        // Predicated region
        $region21: #{affine_coupling.7} parent=11 // pred_check
          %p242 = pneg %p106
        $region22: #{affine_coupling.7} parent=11 // pred_check_branch
          %244 = sbr.rel (%p242) target = $region24
        $region23: #{affine_coupling.7} parent=11 // pred_region
          _
        $region24: #{affine_coupling.7} parent=11 // pred_fallthru
          _
        // Predicated region
        $region25: #{affine_coupling.7} parent=11 // pred_check
          %p245 = pneg %p127
        $region26: #{affine_coupling.7} parent=11 // pred_check_branch
          %247 = sbr.rel (%p245) target = $region28
        $region27: #{affine_coupling.7} parent=11 // pred_region
          %249 = vsyncadd [#allocation3], 0
          %s250 = sshll.u32 %s4, 4
          %s251 = int_to_ptr.hbm [resolvable:$true] %s250
          %s252 = sshll.u32 [#allocation2], 4
          %s253 = int_to_ptr.vmem [resolvable:$true] %s252
          %258 = dma.hbm_to_vmem [thread:$0]  %s251, 1024, %s253, [#allocation3], 64, 64, 4
        $region28: #{affine_coupling.7} parent=11 // pred_fallthru
          _
        // Predicated region
        $region29: #{affine_coupling.7} parent=11 // pred_check
          %p259 = pneg %p148
        $region30: #{affine_coupling.7} parent=11 // pred_check_branch
          %261 = sbr.rel (%p259) target = $region32
        $region31: #{affine_coupling.7} parent=11 // pred_region
          %263 = vsyncadd [#allocation5], 0
          %s264 = sshll.u32 %s5, 4
          %s265 = int_to_ptr.hbm [resolvable:$true] %s264
          %s266 = sshll.u32 [#allocation4], 4
          %s267 = int_to_ptr.vmem [resolvable:$true] %s266
          %272 = dma.hbm_to_vmem [thread:$0]  %s265, 1024, %s267, [#allocation5], 64, 64, 4
        $region32: #{affine_coupling.7} parent=11 // pred_fallthru
          _
        // Predicated region
        $region33: #{affine_coupling.7} parent=11 // pred_check
          %p273 = pneg %p169
        $region34: #{affine_coupling.7} parent=11 // pred_check_branch
          %275 = sbr.rel (%p273) target = $region36
        $region35: #{affine_coupling.7} parent=11 // pred_region
          _
        $region36: #{affine_coupling.7} parent=11 // pred_fallthru
          _
      $region12: #{affine_coupling.7} parent=5 // pred_fallthru
        _
      %p276 = scmp.lt.s32.totalorder %s17, 3
      // Predicated region
      $region37: #{affine_coupling.7} parent=5 // pred_check
        %p277 = pneg %p276
      $region38: #{affine_coupling.7} parent=5 // pred_check_branch
        %279 = sbr.rel (%p277) target = $region40
      $region39: #{affine_coupling.7} parent=5 // pred_region
        // Predicated region
        $region41: #{affine_coupling.7} parent=39 // pred_check
          %p280 = pneg %p37
        $region42: #{affine_coupling.7} parent=39 // pred_check_branch
          %282 = sbr.rel (%p280) target = $region44
        $region43: #{affine_coupling.7} parent=39 // pred_region
          %s283 = smul.u32 2, %s17
          %p284 = scmp.lt.s32.totalorder %s283, 5
          %s285 = scalar_select %p284, %s283, 5
          %s286 = smul.addr %s285, 2
          %s287 = smul.addr %s286, 8
          %s288 = scalar_lea.vmem %s0, %s287
          %s289 = smul.u32 2, %s17
        $region44: #{affine_coupling.7} parent=39 // pred_fallthru
          _
      $region40: #{affine_coupling.7} parent=5 // pred_fallthru
        _
      %p290 = scmp.le.s32.totalorder 1, %s17
      %p291 = scmp.lt.s32.totalorder %s17, 4
      %p292 = pnand %p290, %p291
      %p293 = pneg %p292
      // Predicated region
      $region45: #{affine_coupling.7} parent=5 // pred_check
        _
      $region46: #{affine_coupling.7} parent=5 // pred_check_branch
        %295 = sbr.rel (%p292) target = $region48
      $region47: #{affine_coupling.7} parent=5 // pred_region
        %s296 = ssub.s32 %s17, 1
        // Predicated region
        $region49: #{affine_coupling.7} parent=47 // pred_check
          %p297 = pneg %p127
        $region50: #{affine_coupling.7} parent=47 // pred_check_branch
          %299 = sbr.rel (%p297) target = $region52
        $region51: #{affine_coupling.7} parent=47 // pred_region
          %301 = dma.done [#allocation3], 1024
        $region52: #{affine_coupling.7} parent=47 // pred_fallthru
          _
        // Predicated region
        $region53: #{affine_coupling.7} parent=47 // pred_check
          %p302 = pneg %p148
        $region54: #{affine_coupling.7} parent=47 // pred_check_branch
          %304 = sbr.rel (%p302) target = $region56
        $region55: #{affine_coupling.7} parent=47 // pred_region
          %306 = dma.done [#allocation5], 1024
        $region56: #{affine_coupling.7} parent=47 // pred_fallthru
          _
        %s307 = smul.u32 2, %s22
        %p308 = scmp.lt.s32.totalorder %s307, 5
        %s309 = scalar_select %p308, %s307, 5
        %s310 = smul.addr %s309, 2
        %s311 = smul.addr %s310, 8
        %s312 = scalar_lea.vmem %s0, %s311
        %p313 = pneg %p43
        %p314 = pneg %p40
        %p315 = pneg %p64
        %p316 = pneg %p61
        %p317 = pneg %p85
        %p318 = pneg %p82
        %p319 = pneg %p106
        %p320 = pneg %p103
        %p321 = pneg %p127
        %p322 = pneg %p124
        %p323 = pneg %p148
        %p324 = pneg %p145
        %p325 = pneg %p169
        %p326 = pneg %p166
        %p327 = pneg %p195
        %p328 = pneg %p192
        %s329 = smul.u32 2, %s22
        %p330 = scmp.lt.s32.totalorder %s329, 5
        %s331 = scalar_select %p330, %s329, 5
        %s332 = smul.addr %s331, 2
        %s333 = smul.addr %s332, 8
        %s334 = scalar_lea.vmem %s7, %s333
        %p335 = pneg %p221
        %p336 = pneg %p218
        %p337 = scmp.lt.s32.totalorder %s22, 2
        %s338 = scalar_select %p337, %s22, 2
        %s339 = smul.addr %s338, 2
        %s340 = smul.addr %s339, 2
        %s341 = scalar_lea.vmem %s8, %s340
        %s342 = smul.u32 2, %s22
        %p343 = scmp.lt.s32.totalorder %s342, 5
        %s344 = scalar_select %p343, %s342, 5
        %s345 = smul.addr %s344, 2
        %s346 = smul.addr %s345, 8
        %s347 = scalar_lea.vmem %s0, %s346
        %s348 = smul.u32 2, %s22
        %s349 = smul.u32 2, %s22
        %p350 = scmp.lt.s32.totalorder %s349, 5
        %s351 = scalar_select %p350, %s349, 5
        %s352 = smul.addr %s351, 2
        %s353 = smul.addr %s352, 8
        %s354 = scalar_lea.vmem %s7, %s353
        %s355 = smul.u32 2, %s22
        %p356 = scmp.lt.s32.totalorder %s22, 2
        %s357 = scalar_select %p356, %s22, 2
        %s358 = smul.addr %s357, 2
        %s359 = smul.addr %s358, 2
        %s360 = scalar_lea.vmem %s8, %s359
        %v361 = vld [vmem:[%s347] sm:$0xff]
        %v362 = vld [vmem:[%s347 + $0x8] sm:$0xff]
        %v363 = vld [vmem:[%s347 + $0x10] sm:$0xff]
        %v364 = vld [vmem:[%s347 + $0x18] sm:$0xff]
        %v365 = vld [vmem:[%s1] sm:$0xf]
        %v366 = vld [vmem:[%s1 + $0x4] sm:$0xf]
        %v367 = vld [vmem:[%s1 + $0x8] sm:$0xf]
        %371 = vst [vmem:[#allocation1] ss:$4 sm:$0xff] %v365
        %v372 = vld.sshfl [vmem:[#allocation1] sm:$0xff pattern:$0x73625140]
        %v373 = vld.sshfl [vmem:[#allocation1 + $0x8] sm:$0xff pattern:$0x73625140]
        %s374 = scalar_lea.vmem [#allocation1], 32
        %375 = vst [vmem:[%s374] ss:$4 sm:$0xff] %v366
        %v376 = vld.sshfl [vmem:[#allocation1 + $0x20] sm:$0xff pattern:$0x73625140]
        %v377 = vld.sshfl [vmem:[#allocation1 + $0x28] sm:$0xff pattern:$0x73625140]
        %378 = vst [vmem:[#allocation1] ss:$4 sm:$0xff] %v367
        %v379 = vld.sshfl [vmem:[#allocation1] sm:$0xff pattern:$0x73625140]
        %v380 = vld.sshfl [vmem:[#allocation1 + $0x8] sm:$0xff pattern:$0x73625140]
        %vm387 = vcmask 1041408
        %v388 = vsel %vm387, %v372, 0.0
        %v389 = vsel %vm387, %v376, 0.0
        %v390 = vadd.f32 %v388, %v389
        %v391 = vsel %vm387, %v379, 0.0
        %v392 = vadd.f32 %v390, %v391
        %v393 = vsel %vm387, %v373, 0.0
        %v394 = vsel %vm387, %v377, 0.0
        %v395 = vadd.f32 %v393, %v394
        %v396 = vsel %vm387, %v380, 0.0
        %v397 = vadd.f32 %v395, %v396
        %v398 = vmul.f32 %v392, 0.025
        %v399 = vmul.f32 %v397, 0.025
        %v400 = vmul.f32 %v398, %v398
        %v401 = vmul.f32 %v399, %v399
        %v404 = vrot.slane %v400, 7
        %v405 = vrot.slane %v401, 7
        %v408 = vsub.f32 %v398, %v404
        %v409 = vsub.f32 %v399, %v405
        %v410 = vadd.f32 %v408, 1e-05
        %v411 = vadd.f32 %v409, 1e-05
        %v412 = vrsqrt.pop %v410
        %v413 = vmul.f32 %v412, %v410
        %v414 = vmul.f32 %v413, %v412
        %v415 = vmul.f32 0.5, %v414
        %v416 = vsub.f32 1.5, %v415
        %v417 = vmul.f32 %v412, %v416
        %vm418 = vweird.f32 %v410
        %vm419 = vweird.f32 %v412
        %vm420 = vmor %vm418, %vm419
        %v421 = vsel %vm420, %v412, %v417
        %v422 = vrsqrt.pop %v411
        %v423 = vmul.f32 %v422, %v411
        %v424 = vmul.f32 %v423, %v422
        %v425 = vmul.f32 0.5, %v424
        %v426 = vsub.f32 1.5, %v425
        %v427 = vmul.f32 %v422, %v426
        %vm428 = vweird.f32 %v411
        %vm429 = vweird.f32 %v422
        %vm430 = vmor %vm428, %vm429
        %v431 = vsel %vm430, %v422, %v427
        %v432 = vperm.slane %v398, 0
        %v433 = vperm.slane %v399, 0
        %v434 = vsub.f32 %v361, %v432
        %v435 = vsub.f32 %v362, %v433
        %v436 = vsub.f32 %v363, %v432
        %v437 = vsub.f32 %v364, %v433
        %v438 = vperm.slane %v421, 1
        %v439 = vperm.slane %v431, 1
        %v440 = vmul.f32 %v434, %v438
        %v441 = vmul.f32 %v435, %v439
        %v442 = vmul.f32 %v436, %v438
        %v443 = vmul.f32 %v437, %v439
        %v444 = vld [vmem:[%s2] sm:$0x3]
        %v446 = vperm.slane %v444, 0
        %v447 = vperm.slane %v444, 1
        %v450 = vmul.f32 %v440, %v446
        %v451 = vmul.f32 %v441, %v447
        %v452 = vmul.f32 %v442, %v446
        %v453 = vmul.f32 %v443, %v447
        %v454 = vld [vmem:[%s3] sm:$0x3]
        %v456 = vperm.slane %v454, 0
        %v457 = vperm.slane %v454, 1
        %v460 = vadd.f32 %v450, %v456
        %v461 = vadd.f32 %v451, %v457
        %v462 = vadd.f32 %v452, %v456
        %v463 = vadd.f32 %v453, %v457
        %v464 = vpack.c.bf16 %v461, %v460
        %v465 = vpack.c.bf16 %v463, %v462
        %v466 = vld [vmem:[#allocation2] sm:$0xf]
        %v467 = vld [vmem:[#allocation2 + $0x4] sm:$0xf]
        %v468 = vld [vmem:[#allocation2 + $0x8] sm:$0xf]
        %v469 = vld [vmem:[#allocation2 + $0xc] sm:$0xf]
        %v470 = vld [vmem:[#allocation2 + $0x10] sm:$0xf]
        %v471 = vld [vmem:[#allocation2 + $0x14] sm:$0xf]
        %v472 = vld [vmem:[#allocation2 + $0x18] sm:$0xf]
        %v473 = vld [vmem:[#allocation2 + $0x1c] sm:$0xf]
        %v474 = vld [vmem:[#allocation2 + $0x20] sm:$0xf]
        %v475 = vld [vmem:[#allocation2 + $0x24] sm:$0xf]
        %v476 = vld [vmem:[#allocation2 + $0x28] sm:$0xf]
        %v477 = vld [vmem:[#allocation2 + $0x2c] sm:$0xf]
        %v478 = vld [vmem:[#allocation2 + $0x30] sm:$0xf]
        %v479 = vld [vmem:[#allocation2 + $0x34] sm:$0xf]
        %v480 = vld [vmem:[#allocation2 + $0x38] sm:$0xf]
        %v481 = vld [vmem:[#allocation2 + $0x3c] sm:$0xf]
        %v484 = vunpack.c.l.b16 %v464
        %v485 = vunpack.c.l.b16 %v465
        %v486 = vpack.c.b16 %v485, %v484
        %v504 = vunpack.c.l.b16 %v466
        %v505 = vunpack.c.l.b16 %v467
        %v506 = vunpack.c.l.b16 %v468
        %v507 = vunpack.c.l.b16 %v469
        %v508 = vunpack.c.l.b16 %v470
        %v509 = vunpack.c.l.b16 %v471
        %v510 = vunpack.c.l.b16 %v472
        %v511 = vunpack.c.l.b16 %v473
        %v512 = vunpack.c.l.b16 %v474
        %v513 = vunpack.c.l.b16 %v475
        %v514 = vunpack.c.l.b16 %v476
        %v515 = vunpack.c.l.b16 %v477
        %v516 = vunpack.c.l.b16 %v478
        %v517 = vunpack.c.l.b16 %v479
        %v518 = vunpack.c.l.b16 %v480
        %v519 = vunpack.c.l.b16 %v481
        %v520 = vpack.c.b16 %v505, %v504
        %v521 = vpack.c.b16 %v507, %v506
        %v522 = vpack.c.b16 %v509, %v508
        %v523 = vpack.c.b16 %v511, %v510
        %v524 = vpack.c.b16 %v513, %v512
        %v525 = vpack.c.b16 %v515, %v514
        %v526 = vpack.c.b16 %v517, %v516
        %v527 = vpack.c.b16 %v519, %v518
        %536 = vmatpush.bf16.msra.mxu0 %v527
        %537 = vmatpush.bf16.msra.mxu0 %v526
        %538 = vmatpush.bf16.msra.mxu0 %v525
        %539 = vmatpush.bf16.msra.mxu0 %v524
        %540 = vmatpush.bf16.msra.mxu0 %v523
        %541 = vmatpush.bf16.msra.mxu0 %v522
        %542 = vmatpush.bf16.msra.mxu0 %v521
        %543 = vmatpush.bf16.msra.mxu0 %v520
        %544 = vmatmul.bf16.gmra.mxu0 %v486
        %v545 = vpop.f32.mrf.mxu0
        %v546 = vadd.f32 0.0, %v545
        %v547 = vpop.f32.mrf.mxu0
        %v548 = vadd.f32 0.0, %v547
        %549 = vdwg.mxu0
        %v550 = vld [vmem:[#allocation4] sm:$0xf]
        %v551 = vld [vmem:[#allocation4 + $0x4] sm:$0xf]
        %v552 = vld [vmem:[#allocation4 + $0x8] sm:$0xf]
        %v553 = vld [vmem:[#allocation4 + $0xc] sm:$0xf]
        %v554 = vld [vmem:[#allocation4 + $0x10] sm:$0xf]
        %v555 = vld [vmem:[#allocation4 + $0x14] sm:$0xf]
        %v556 = vld [vmem:[#allocation4 + $0x18] sm:$0xf]
        %v557 = vld [vmem:[#allocation4 + $0x1c] sm:$0xf]
        %v558 = vld [vmem:[#allocation4 + $0x20] sm:$0xf]
        %v559 = vld [vmem:[#allocation4 + $0x24] sm:$0xf]
        %v560 = vld [vmem:[#allocation4 + $0x28] sm:$0xf]
        %v561 = vld [vmem:[#allocation4 + $0x2c] sm:$0xf]
        %v562 = vld [vmem:[#allocation4 + $0x30] sm:$0xf]
        %v563 = vld [vmem:[#allocation4 + $0x34] sm:$0xf]
        %v564 = vld [vmem:[#allocation4 + $0x38] sm:$0xf]
        %v565 = vld [vmem:[#allocation4 + $0x3c] sm:$0xf]
        %v566 = vunpack.c.h.b16 %v464
        %v567 = vunpack.c.h.b16 %v465
        %v568 = vpack.c.b16 %v567, %v566
        %v586 = vunpack.c.l.b16 %v550
        %v587 = vunpack.c.l.b16 %v551
        %v588 = vunpack.c.l.b16 %v552
        %v589 = vunpack.c.l.b16 %v553
        %v590 = vunpack.c.l.b16 %v554
        %v591 = vunpack.c.l.b16 %v555
        %v592 = vunpack.c.l.b16 %v556
        %v593 = vunpack.c.l.b16 %v557
        %v594 = vunpack.c.l.b16 %v558
        %v595 = vunpack.c.l.b16 %v559
        %v596 = vunpack.c.l.b16 %v560
        %v597 = vunpack.c.l.b16 %v561
        %v598 = vunpack.c.l.b16 %v562
        %v599 = vunpack.c.l.b16 %v563
        %v600 = vunpack.c.l.b16 %v564
        %v601 = vunpack.c.l.b16 %v565
        %v602 = vpack.c.b16 %v587, %v586
        %v603 = vpack.c.b16 %v589, %v588
        %v604 = vpack.c.b16 %v591, %v590
        %v605 = vpack.c.b16 %v593, %v592
        %v606 = vpack.c.b16 %v595, %v594
        %v607 = vpack.c.b16 %v597, %v596
        %v608 = vpack.c.b16 %v599, %v598
        %v609 = vpack.c.b16 %v601, %v600
        %618 = vmatpush.bf16.msra.mxu0 %v609
        %619 = vmatpush.bf16.msra.mxu0 %v608
        %620 = vmatpush.bf16.msra.mxu0 %v607
        %621 = vmatpush.bf16.msra.mxu0 %v606
        %622 = vmatpush.bf16.msra.mxu0 %v605
        %623 = vmatpush.bf16.msra.mxu0 %v604
        %624 = vmatpush.bf16.msra.mxu0 %v603
        %625 = vmatpush.bf16.msra.mxu0 %v602
        %626 = vmatmul.bf16.gmra.mxu0 %v568
        %v627 = vpop.f32.mrf.mxu0
        %v628 = vadd.f32 0.0, %v627
        %v629 = vpop.f32.mrf.mxu0
        %v630 = vadd.f32 0.0, %v629
        %631 = vdwg.mxu0
        %v632 = vld [vmem:[%s6] sm:$0x3]
        %v634 = vperm.slane %v632, 0
        %v635 = vperm.slane %v632, 1
        %v638 = vadd.f32 %v546, %v634
        %v639 = vadd.f32 %v628, %v635
        %v640 = vadd.f32 %v548, %v634
        %v641 = vadd.f32 %v630, %v635
        %vm642 = vcmp.ge.f32.partialorder %v638, 0.0
        %vm643 = vcmp.ge.f32.partialorder %v639, 0.0
        %vm644 = vcmp.ge.f32.partialorder %v640, 0.0
        %vm645 = vcmp.ge.f32.partialorder %v641, 0.0
        %v646 = vmul.f32 %v638, 0.05
        %v647 = vmul.f32 %v639, 0.05
        %v648 = vmul.f32 %v640, 0.05
        %v649 = vmul.f32 %v641, 0.05
        %v650 = vsel %vm642, %v638, %v646
        %v651 = vsel %vm643, %v639, %v647
        %v652 = vsel %vm644, %v640, %v648
        %v653 = vsel %vm645, %v641, %v649
        %654 = vst [vmem:[%s354] sm:$0xff] %v650
        %655 = vst [vmem:[%s354 + $0x8] sm:$0xff] %v651
        %656 = vst [vmem:[%s354 + $0x10] sm:$0xff] %v652
        %657 = vst [vmem:[%s354 + $0x18] sm:$0xff] %v653
        %v658 = vlaneseq
        %v659 = vshrl.u32 %v658, 7
        %v660 = vadd.s32 %v659, 8
        %s661 = smul.u32 %s22, 16
        %v662 = vstv %s661
        %v663 = vadd.s32 %v659, %v662
        %v664 = vadd.s32 %v660, %v662
        %vm665 = vcmp.lt.s32.totalorder %v663, 40
        %vm666 = vcmp.lt.s32.totalorder %v664, 40
        %v667 = vsel %vm665, %v650, 0.0
        %v668 = vsel %vm665, %v651, 0.0
        %v669 = vsel %vm666, %v652, 0.0
        %v670 = vsel %vm666, %v653, 0.0
        %v671 = vadd.f32 %v667, %v669
        %v672 = vrot.slane %v671, 4
        %v673 = vadd.f32 %v671, %v672
        %v674 = vrot.slane %v673, 2
        %v675 = vadd.f32 %v673, %v674
        %v676 = vrot.slane %v675, 1
        %v677 = vadd.f32 %v675, %v676
        %v678 = vadd.f32 %v668, %v670
        %v679 = vrot.slane %v678, 4
        %v680 = vadd.f32 %v678, %v679
        %v681 = vrot.slane %v680, 2
        %v682 = vadd.f32 %v680, %v681
        %v683 = vrot.slane %v682, 1
        %v684 = vadd.f32 %v682, %v683
        %v685 = vmul.f32 %v650, %v667
        %v686 = vmul.f32 %v651, %v668
        %v687 = vmul.f32 %v652, %v669
        %v688 = vmul.f32 %v653, %v670
        %v689 = vadd.f32 %v685, %v687
        %v690 = vrot.slane %v689, 4
        %v691 = vadd.f32 %v689, %v690
        %v692 = vrot.slane %v691, 2
        %v693 = vadd.f32 %v691, %v692
        %v694 = vrot.slane %v693, 1
        %v695 = vadd.f32 %v693, %v694
        %v696 = vadd.f32 %v686, %v688
        %v697 = vrot.slane %v696, 4
        %v698 = vadd.f32 %v696, %v697
        %v699 = vrot.slane %v698, 2
        %v700 = vadd.f32 %v698, %v699
        %v701 = vrot.slane %v700, 1
        %v702 = vadd.f32 %v700, %v701
        %vm703 = vcmask 1040384
        %v704 = vsel %vm703, %v677, %v695
        %v705 = vsel %vm703, %v684, %v702
        %v708 = vrot.slane %v705, 6
        %v709 = vsel %vm387, %v704, %v708
        %711 = vst [vmem:[%s360] sm:$0xf] %v709
        %s712 = smul.u32 2, %s22
        %p713 = scmp.lt.s32.totalorder %s712, 5
        %s714 = scalar_select %p713, %s712, 5
        %s715 = smul.addr %s714, 2
        %s716 = smul.addr %s715, 8
        %s717 = scalar_lea.vmem %s7, %s716
        %p718 = scmp.lt.s32.totalorder %s22, 2
        %s719 = scalar_select %p718, %s22, 2
        %s720 = smul.addr %s719, 2
        %s721 = smul.addr %s720, 2
        %s722 = scalar_lea.vmem %s8, %s721
        // Predicated region
        $region57: #{affine_coupling.7} parent=47 // pred_check
          %p723 = pneg %p192
        $region58: #{affine_coupling.7} parent=47 // pred_check_branch
          %725 = sbr.rel (%p723) target = $region60
        $region59: #{affine_coupling.7} parent=47 // pred_region
          %s726 = smul.u32 2, %s22
        $region60: #{affine_coupling.7} parent=47 // pred_fallthru
          _
        // Predicated region
        $region61: #{affine_coupling.7} parent=47 // pred_check
          %p727 = pneg %p218
        $region62: #{affine_coupling.7} parent=47 // pred_check_branch
          %729 = sbr.rel (%p727) target = $region64
        $region63: #{affine_coupling.7} parent=47 // pred_region
          _
        $region64: #{affine_coupling.7} parent=47 // pred_fallthru
          _
      $region48: #{affine_coupling.7} parent=5 // pred_fallthru
        _
      %p730 = scmp.le.s32.totalorder 2, %s17
      // Predicated region
      $region65: #{affine_coupling.7} parent=5 // pred_check
        %p731 = pneg %p730
      $region66: #{affine_coupling.7} parent=5 // pred_check_branch
        %733 = sbr.rel (%p731) target = $region68
      $region67: #{affine_coupling.7} parent=5 // pred_region
        %s734 = ssub.s32 %s17, 2
        // Predicated region
        $region69: #{affine_coupling.7} parent=67 // pred_check
          %p735 = pneg %p198
        $region70: #{affine_coupling.7} parent=67 // pred_check_branch
          %737 = sbr.rel (%p735) target = $region72
        $region71: #{affine_coupling.7} parent=67 // pred_region
          %s738 = smul.u32 2, %s23
          %p739 = scmp.lt.s32.totalorder %s738, 5
          %s740 = scalar_select %p739, %s738, 5
          %s741 = smul.addr %s740, 2
          %s742 = smul.addr %s741, 8
          %s743 = scalar_lea.vmem %s7, %s742
        $region72: #{affine_coupling.7} parent=67 // pred_fallthru
          _
        // Predicated region
        $region73: #{affine_coupling.7} parent=67 // pred_check
          %p744 = pneg %p224
        $region74: #{affine_coupling.7} parent=67 // pred_check_branch
          %746 = sbr.rel (%p744) target = $region76
        $region75: #{affine_coupling.7} parent=67 // pred_region
          %p747 = scmp.lt.s32.totalorder %s23, 2
          %s748 = scalar_select %p747, %s23, 2
          %s749 = smul.addr %s748, 2
          %s750 = smul.addr %s749, 2
          %s751 = scalar_lea.vmem %s8, %s750
        $region76: #{affine_coupling.7} parent=67 // pred_fallthru
          _
      $region68: #{affine_coupling.7} parent=5 // pred_fallthru
        _
    $region6: #{affine_coupling.7} parent=1 // loop_footer
      %s21 = sadd.s32 1, %s17
    $region7: #{affine_coupling.7} parent=1 // loop_footer_branch
      %16 = sbr.rel target = $region3
    $region8: #{affine_coupling.7} parent=1 // loop_exit
      _
    %752 = vsyncpa [#allocation3], 1
    %s753 = scalar_lea.sflag [#allocation3], 1
    %754 = vsyncpa %s753, 1
    %755 = vsyncpa [#allocation5], 1

// kernel: affine_coupling.8
$region0: #{affine_coupling.8}
  #allocation0 [shape = 'u32[]', space=smem, size = 0x4, offset = 0x4, fixed_abs, tag = 'smem constant byte address 0x4 - core index']
  #allocation1 [shape = 'u32[72,128]{1,0:T(1,128)}', space=vmem, size = 0x9000, scoped, tag = 'internal scratch']
  %s0 = inlined_call_operand.vmem [shape: f32[48,256], index: 0, kind: input, shape index: {}]
  %s1 = inlined_call_operand.vmem [shape: f32[3,2,256], index: 1, kind: input, shape index: {}]
  %s2 = inlined_call_operand.vmem [shape: f32[1,256], index: 2, kind: input, shape index: {}]
  %s3 = inlined_call_operand.vmem [shape: f32[1,256], index: 3, kind: input, shape index: {}]
  %s4 = inlined_call_operand.hbm [shape: bf16[128,128], index: 4, kind: input, shape index: {}]
  %s5 = inlined_call_operand.hbm [shape: bf16[128,128], index: 5, kind: input, shape index: {}]
  %s6 = inlined_call_operand.vmem [shape: f32[48,256], index: 6, kind: output, shape index: {0}]
  %s7 = inlined_call_operand.vmem [shape: f32[3,2,256], index: 7, kind: output, shape index: {1}]
  %8 = xla_tuple %s6, %s7
  %s9 = sld [smem:[#allocation0]]
  $region73: #{affine_coupling.8} parent=0
    _
  %s11 = ssub.s32 1, %s9
  %s12 = scalar_select 0, %s11, %s9
  $region1: #{affine_coupling.8} parent=0
    #allocation2 [shape = 'u8[32768]{0}', space=vmem, size = 0x8000, scoped, tag = 'input window, operand 4, single buffered']
    #allocation3 [shape = 's32[2]{0}', space=sflag, size = 0x8, scoped, tag = 'scoped memory for affine_coupling.8']
    #allocation4 [shape = 'u8[32768]{0}', space=vmem, size = 0x8000, scoped, tag = 'input window, operand 5, single buffered']
    #allocation5 [shape = 's32[1]{0}', space=sflag, size = 0x4, scoped, tag = 'scoped memory for affine_coupling.8']
    %13 = vsyncpa [#allocation3], 0
    %14 = vsyncpa [#allocation5], 0
    loop: start=0, step=1, limit=5
    $region2: #{affine_coupling.8} parent=1 // loop_pre_header
      _
    $region3: #{affine_coupling.8} parent=1 // loop_header
      %s16 = sphi 0, %s20
      %p17 = scmp.ge.s32.totalorder %s16, 5
      %s26 = sphi 0, %s28
      %s29 = sphi 0, %s26
      %s30 = sphi 0, %s29
      %s46 = sphi 0, %s30
      %s50 = sphi 0, %s50
      %s52 = sphi 0, %s50
      %s53 = sphi 0, %s52
      %s67 = sphi 0, %s53
      %s71 = sphi 0, %s71
      %s73 = sphi 0, %s71
      %s74 = sphi 0, %s73
      %s88 = sphi 0, %s74
      %s92 = sphi 0, %s92
      %s94 = sphi 0, %s92
      %s95 = sphi 0, %s94
      %s109 = sphi 0, %s95
      %s113 = sphi 0, %s113
      %s115 = sphi 0, %s113
      %s116 = sphi 0, %s115
      %s130 = sphi 0, %s116
      %s134 = sphi 0, %s134
      %s136 = sphi 0, %s134
      %s137 = sphi 0, %s136
      %s151 = sphi 0, %s137
      %s157 = sphi 0, %s159
      %s160 = sphi 0, %s157
      %s161 = sphi 0, %s160
      %s177 = sphi 0, %s161
      %s183 = sphi 0, %s185
      %s186 = sphi 0, %s183
      %s187 = sphi 0, %s186
      %s203 = sphi 0, %s187
    $region4: #{affine_coupling.8} parent=1 // loop_header_branch
      %19 = sbr.rel (%p17) target = $region8
    $region5: #{affine_coupling.8} parent=1 // loop_body
      %s21 = ssub.s32 %s16, 1
      %s22 = ssub.s32 %s16, 2
      %s23 = sadd.s32 %s16, 1
      %s24 = ssub.s32 %s16, %s23
      %p25 = scmp.eq.s32.totalorder %s24, 0
      %s27 = sadd.s32 %s26, 1
      %s28 = scalar_select %p25, %s26, %s27
      %p31 = pneg %p25
      %p32 = scmp.eq.s32.totalorder %s16, 2
      %p33 = por %p31, %p32
      %p34 = scmp.ne.s32.totalorder %s26, %s29
      %p35 = scmp.eq.s32.totalorder %s16, 0
      %p36 = por %p34, %p35
      %p37 = scmp.ne.s32.totalorder %s26, %s29
      %p38 = scmp.eq.s32.totalorder %s21, 2
      %p39 = por %p37, %p38
      %p40 = scmp.ne.s32.totalorder %s29, %s30
      %p41 = scmp.eq.s32.totalorder %s21, 0
      %p42 = por %p40, %p41
      %p43 = scmp.ne.s32.totalorder %s29, %s30
      %p44 = scmp.eq.s32.totalorder %s22, 2
      %p45 = por %p43, %p44
      %p47 = scmp.ne.s32.totalorder %s30, %s46
      %p48 = scmp.eq.s32.totalorder %s22, 0
      %p49 = por %p47, %p48
      %s51 = sadd.s32 %s50, 1
      %p54 = scmp.eq.s32.totalorder %s16, 2
      %p55 = scmp.ne.s32.totalorder %s50, %s52
      %p56 = scmp.eq.s32.totalorder %s16, 0
      %p57 = por %p55, %p56
      %p58 = scmp.ne.s32.totalorder %s50, %s52
      %p59 = scmp.eq.s32.totalorder %s21, 2
      %p60 = por %p58, %p59
      %p61 = scmp.ne.s32.totalorder %s52, %s53
      %p62 = scmp.eq.s32.totalorder %s21, 0
      %p63 = por %p61, %p62
      %p64 = scmp.ne.s32.totalorder %s52, %s53
      %p65 = scmp.eq.s32.totalorder %s22, 2
      %p66 = por %p64, %p65
      %p68 = scmp.ne.s32.totalorder %s53, %s67
      %p69 = scmp.eq.s32.totalorder %s22, 0
      %p70 = por %p68, %p69
      %s72 = sadd.s32 %s71, 1
      %p75 = scmp.eq.s32.totalorder %s16, 2
      %p76 = scmp.ne.s32.totalorder %s71, %s73
      %p77 = scmp.eq.s32.totalorder %s16, 0
      %p78 = por %p76, %p77
      %p79 = scmp.ne.s32.totalorder %s71, %s73
      %p80 = scmp.eq.s32.totalorder %s21, 2
      %p81 = por %p79, %p80
      %p82 = scmp.ne.s32.totalorder %s73, %s74
      %p83 = scmp.eq.s32.totalorder %s21, 0
      %p84 = por %p82, %p83
      %p85 = scmp.ne.s32.totalorder %s73, %s74
      %p86 = scmp.eq.s32.totalorder %s22, 2
      %p87 = por %p85, %p86
      %p89 = scmp.ne.s32.totalorder %s74, %s88
      %p90 = scmp.eq.s32.totalorder %s22, 0
      %p91 = por %p89, %p90
      %s93 = sadd.s32 %s92, 1
      %p96 = scmp.eq.s32.totalorder %s16, 2
      %p97 = scmp.ne.s32.totalorder %s92, %s94
      %p98 = scmp.eq.s32.totalorder %s16, 0
      %p99 = por %p97, %p98
      %p100 = scmp.ne.s32.totalorder %s92, %s94
      %p101 = scmp.eq.s32.totalorder %s21, 2
      %p102 = por %p100, %p101
      %p103 = scmp.ne.s32.totalorder %s94, %s95
      %p104 = scmp.eq.s32.totalorder %s21, 0
      %p105 = por %p103, %p104
      %p106 = scmp.ne.s32.totalorder %s94, %s95
      %p107 = scmp.eq.s32.totalorder %s22, 2
      %p108 = por %p106, %p107
      %p110 = scmp.ne.s32.totalorder %s95, %s109
      %p111 = scmp.eq.s32.totalorder %s22, 0
      %p112 = por %p110, %p111
      %s114 = sadd.s32 %s113, 1
      %p117 = scmp.eq.s32.totalorder %s16, 2
      %p118 = scmp.ne.s32.totalorder %s113, %s115
      %p119 = scmp.eq.s32.totalorder %s16, 0
      %p120 = por %p118, %p119
      %p121 = scmp.ne.s32.totalorder %s113, %s115
      %p122 = scmp.eq.s32.totalorder %s21, 2
      %p123 = por %p121, %p122
      %p124 = scmp.ne.s32.totalorder %s115, %s116
      %p125 = scmp.eq.s32.totalorder %s21, 0
      %p126 = por %p124, %p125
      %p127 = scmp.ne.s32.totalorder %s115, %s116
      %p128 = scmp.eq.s32.totalorder %s22, 2
      %p129 = por %p127, %p128
      %p131 = scmp.ne.s32.totalorder %s116, %s130
      %p132 = scmp.eq.s32.totalorder %s22, 0
      %p133 = por %p131, %p132
      %s135 = sadd.s32 %s134, 1
      %p138 = scmp.eq.s32.totalorder %s16, 2
      %p139 = scmp.ne.s32.totalorder %s134, %s136
      %p140 = scmp.eq.s32.totalorder %s16, 0
      %p141 = por %p139, %p140
      %p142 = scmp.ne.s32.totalorder %s134, %s136
      %p143 = scmp.eq.s32.totalorder %s21, 2
      %p144 = por %p142, %p143
      %p145 = scmp.ne.s32.totalorder %s136, %s137
      %p146 = scmp.eq.s32.totalorder %s21, 0
      %p147 = por %p145, %p146
      %p148 = scmp.ne.s32.totalorder %s136, %s137
      %p149 = scmp.eq.s32.totalorder %s22, 2
      %p150 = por %p148, %p149
      %p152 = scmp.ne.s32.totalorder %s137, %s151
      %p153 = scmp.eq.s32.totalorder %s22, 0
      %p154 = por %p152, %p153
      %s155 = ssub.s32 %s16, %s23
      %p156 = scmp.eq.s32.totalorder %s155, 0
      %s158 = sadd.s32 %s157, 1
      %s159 = scalar_select %p156, %s157, %s158
      %p162 = pneg %p156
      %p163 = scmp.eq.s32.totalorder %s16, 2
      %p164 = por %p162, %p163
      %p165 = scmp.ne.s32.totalorder %s157, %s160
      %p166 = scmp.eq.s32.totalorder %s16, 0
      %p167 = por %p165, %p166
      %p168 = scmp.ne.s32.totalorder %s157, %s160
      %p169 = scmp.eq.s32.totalorder %s21, 2
      %p170 = por %p168, %p169
      %p171 = scmp.ne.s32.totalorder %s160, %s161
      %p172 = scmp.eq.s32.totalorder %s21, 0
      %p173 = por %p171, %p172
      %p174 = scmp.ne.s32.totalorder %s160, %s161
      %p175 = scmp.eq.s32.totalorder %s22, 2
      %p176 = por %p174, %p175
      %p178 = scmp.ne.s32.totalorder %s161, %s177
      %p179 = scmp.eq.s32.totalorder %s22, 0
      %p180 = por %p178, %p179
      %s181 = ssub.s32 %s16, %s23
      %p182 = scmp.eq.s32.totalorder %s181, 0
      %s184 = sadd.s32 %s183, 1
      %s185 = scalar_select %p182, %s183, %s184
      %p188 = pneg %p182
      %p189 = scmp.eq.s32.totalorder %s16, 2
      %p190 = por %p188, %p189
      %p191 = scmp.ne.s32.totalorder %s183, %s186
      %p192 = scmp.eq.s32.totalorder %s16, 0
      %p193 = por %p191, %p192
      %p194 = scmp.ne.s32.totalorder %s183, %s186
      %p195 = scmp.eq.s32.totalorder %s21, 2
      %p196 = por %p194, %p195
      %p197 = scmp.ne.s32.totalorder %s186, %s187
      %p198 = scmp.eq.s32.totalorder %s21, 0
      %p199 = por %p197, %p198
      %p200 = scmp.ne.s32.totalorder %s186, %s187
      %p201 = scmp.eq.s32.totalorder %s22, 2
      %p202 = por %p200, %p201
      %p204 = scmp.ne.s32.totalorder %s187, %s203
      %p205 = scmp.eq.s32.totalorder %s22, 0
      %p206 = por %p204, %p205
      %p207 = scmp.le.s32.totalorder 1, %s16
      %p208 = scmp.lt.s32.totalorder %s16, 4
      %p209 = pnand %p207, %p208
      %p210 = pneg %p209
      // Predicated region
      $region9: #{affine_coupling.8} parent=5 // pred_check
        _
      $region10: #{affine_coupling.8} parent=5 // pred_check_branch
        %212 = sbr.rel (%p209) target = $region12
      $region11: #{affine_coupling.8} parent=5 // pred_region
        %s213 = ssub.s32 %s16, 1
        // Predicated region
        $region13: #{affine_coupling.8} parent=11 // pred_check
          %p214 = pneg %p63
        $region14: #{affine_coupling.8} parent=11 // pred_check_branch
          %216 = sbr.rel (%p214) target = $region16
        $region15: #{affine_coupling.8} parent=11 // pred_region
          _
        $region16: #{affine_coupling.8} parent=11 // pred_fallthru
          _
        // Predicated region
        $region17: #{affine_coupling.8} parent=11 // pred_check
          %p217 = pneg %p84
        $region18: #{affine_coupling.8} parent=11 // pred_check_branch
          %219 = sbr.rel (%p217) target = $region20
        $region19: #{affine_coupling.8} parent=11 // pred_region
          _
        $region20: #{affine_coupling.8} parent=11 // pred_fallthru
          _
        // Predicated region
        $region21: #{affine_coupling.8} parent=11 // pred_check
          %p220 = pneg %p105
        $region22: #{affine_coupling.8} parent=11 // pred_check_branch
          %222 = sbr.rel (%p220) target = $region24
        $region23: #{affine_coupling.8} parent=11 // pred_region
          _
        $region24: #{affine_coupling.8} parent=11 // pred_fallthru
          _
        // Predicated region
        $region25: #{affine_coupling.8} parent=11 // pred_check
          %p223 = pneg %p126
        $region26: #{affine_coupling.8} parent=11 // pred_check_branch
          %225 = sbr.rel (%p223) target = $region28
        $region27: #{affine_coupling.8} parent=11 // pred_region
          %227 = vsyncadd [#allocation3], 0
          %s228 = sshll.u32 %s4, 4
          %s229 = int_to_ptr.hbm [resolvable:$true] %s228
          %s230 = sshll.u32 [#allocation2], 4
          %s231 = int_to_ptr.vmem [resolvable:$true] %s230
          %236 = dma.hbm_to_vmem [thread:$0]  %s229, 1024, %s231, [#allocation3], 64, 64, 4
        $region28: #{affine_coupling.8} parent=11 // pred_fallthru
          _
        // Predicated region
        $region29: #{affine_coupling.8} parent=11 // pred_check
          %p237 = pneg %p147
        $region30: #{affine_coupling.8} parent=11 // pred_check_branch
          %239 = sbr.rel (%p237) target = $region32
        $region31: #{affine_coupling.8} parent=11 // pred_region
          %241 = vsyncadd [#allocation5], 0
          %s242 = sshll.u32 %s5, 4
          %s243 = int_to_ptr.hbm [resolvable:$true] %s242
          %s244 = sshll.u32 [#allocation4], 4
          %s245 = int_to_ptr.vmem [resolvable:$true] %s244
          %250 = dma.hbm_to_vmem [thread:$0]  %s243, 1024, %s245, [#allocation5], 64, 64, 4
        $region32: #{affine_coupling.8} parent=11 // pred_fallthru
          _
      $region12: #{affine_coupling.8} parent=5 // pred_fallthru
        _
      %p251 = scmp.lt.s32.totalorder %s16, 3
      // Predicated region
      $region33: #{affine_coupling.8} parent=5 // pred_check
        %p252 = pneg %p251
      $region34: #{affine_coupling.8} parent=5 // pred_check_branch
        %254 = sbr.rel (%p252) target = $region36
      $region35: #{affine_coupling.8} parent=5 // pred_region
        // Predicated region
        $region37: #{affine_coupling.8} parent=35 // pred_check
          %p255 = pneg %p36
        $region38: #{affine_coupling.8} parent=35 // pred_check_branch
          %257 = sbr.rel (%p255) target = $region40
        $region39: #{affine_coupling.8} parent=35 // pred_region
          %s258 = smul.u32 2, %s16
          %p259 = scmp.lt.s32.totalorder %s258, 5
          %s260 = scalar_select %p259, %s258, 5
          %s261 = smul.addr %s260, 2
          %s262 = smul.addr %s261, 8
          %s263 = scalar_lea.vmem %s0, %s262
          %s264 = smul.u32 2, %s16
        $region40: #{affine_coupling.8} parent=35 // pred_fallthru
          _
      $region36: #{affine_coupling.8} parent=5 // pred_fallthru
        _
      %p265 = scmp.le.s32.totalorder 1, %s16
      %p266 = scmp.lt.s32.totalorder %s16, 4
      %p267 = pnand %p265, %p266
      %p268 = pneg %p267
      // Predicated region
      $region41: #{affine_coupling.8} parent=5 // pred_check
        _
      $region42: #{affine_coupling.8} parent=5 // pred_check_branch
        %270 = sbr.rel (%p267) target = $region44
      $region43: #{affine_coupling.8} parent=5 // pred_region
        %s271 = ssub.s32 %s16, 1
        // Predicated region
        $region45: #{affine_coupling.8} parent=43 // pred_check
          %p272 = pneg %p126
        $region46: #{affine_coupling.8} parent=43 // pred_check_branch
          %274 = sbr.rel (%p272) target = $region48
        $region47: #{affine_coupling.8} parent=43 // pred_region
          %276 = dma.done [#allocation3], 1024
        $region48: #{affine_coupling.8} parent=43 // pred_fallthru
          _
        // Predicated region
        $region49: #{affine_coupling.8} parent=43 // pred_check
          %p277 = pneg %p147
        $region50: #{affine_coupling.8} parent=43 // pred_check_branch
          %279 = sbr.rel (%p277) target = $region52
        $region51: #{affine_coupling.8} parent=43 // pred_region
          %281 = dma.done [#allocation5], 1024
        $region52: #{affine_coupling.8} parent=43 // pred_fallthru
          _
        %s282 = smul.u32 2, %s21
        %p283 = scmp.lt.s32.totalorder %s282, 5
        %s284 = scalar_select %p283, %s282, 5
        %s285 = smul.addr %s284, 2
        %s286 = smul.addr %s285, 8
        %s287 = scalar_lea.vmem %s0, %s286
        %p288 = pneg %p42
        %p289 = pneg %p39
        %p290 = pneg %p63
        %p291 = pneg %p60
        %p292 = pneg %p84
        %p293 = pneg %p81
        %p294 = pneg %p105
        %p295 = pneg %p102
        %p296 = pneg %p126
        %p297 = pneg %p123
        %p298 = pneg %p147
        %p299 = pneg %p144
        %p300 = pneg %p173
        %p301 = pneg %p170
        %s302 = smul.u32 2, %s21
        %p303 = scmp.lt.s32.totalorder %s302, 5
        %s304 = scalar_select %p303, %s302, 5
        %s305 = smul.addr %s304, 2
        %s306 = smul.addr %s305, 8
        %s307 = scalar_lea.vmem %s6, %s306
        %p308 = pneg %p199
        %p309 = pneg %p196
        %p310 = scmp.lt.s32.totalorder %s21, 2
        %s311 = scalar_select %p310, %s21, 2
        %s312 = smul.addr %s311, 2
        %s313 = smul.addr %s312, 2
        %s314 = scalar_lea.vmem %s7, %s313
        %s315 = smul.u32 2, %s21
        %p316 = scmp.lt.s32.totalorder %s315, 5
        %s317 = scalar_select %p316, %s315, 5
        %s318 = smul.addr %s317, 2
        %s319 = smul.addr %s318, 8
        %s320 = scalar_lea.vmem %s0, %s319
        %s321 = smul.u32 2, %s21
        %s322 = smul.u32 2, %s21
        %p323 = scmp.lt.s32.totalorder %s322, 5
        %s324 = scalar_select %p323, %s322, 5
        %s325 = smul.addr %s324, 2
        %s326 = smul.addr %s325, 8
        %s327 = scalar_lea.vmem %s6, %s326
        %s328 = smul.u32 2, %s21
        %p329 = scmp.lt.s32.totalorder %s21, 2
        %s330 = scalar_select %p329, %s21, 2
        %s331 = smul.addr %s330, 2
        %s332 = smul.addr %s331, 2
        %s333 = scalar_lea.vmem %s7, %s332
        %v334 = vld [vmem:[%s320] sm:$0xff]
        %v335 = vld [vmem:[%s320 + $0x8] sm:$0xff]
        %v336 = vld [vmem:[%s320 + $0x10] sm:$0xff]
        %v337 = vld [vmem:[%s320 + $0x18] sm:$0xff]
        %v338 = vld [vmem:[%s1] sm:$0xf]
        %v339 = vld [vmem:[%s1 + $0x4] sm:$0xf]
        %v340 = vld [vmem:[%s1 + $0x8] sm:$0xf]
        %344 = vst [vmem:[#allocation1] ss:$4 sm:$0xff] %v338
        %v345 = vld.sshfl [vmem:[#allocation1] sm:$0xff pattern:$0x73625140]
        %v346 = vld.sshfl [vmem:[#allocation1 + $0x8] sm:$0xff pattern:$0x73625140]
        %s347 = scalar_lea.vmem [#allocation1], 32
        %348 = vst [vmem:[%s347] ss:$4 sm:$0xff] %v339
        %v349 = vld.sshfl [vmem:[#allocation1 + $0x20] sm:$0xff pattern:$0x73625140]
        %v350 = vld.sshfl [vmem:[#allocation1 + $0x28] sm:$0xff pattern:$0x73625140]
        %351 = vst [vmem:[#allocation1] ss:$4 sm:$0xff] %v340
        %v352 = vld.sshfl [vmem:[#allocation1] sm:$0xff pattern:$0x73625140]
        %v353 = vld.sshfl [vmem:[#allocation1 + $0x8] sm:$0xff pattern:$0x73625140]
        %vm360 = vcmask 1041408
        %v361 = vsel %vm360, %v345, 0.0
        %v362 = vsel %vm360, %v349, 0.0
        %v363 = vadd.f32 %v361, %v362
        %v364 = vsel %vm360, %v352, 0.0
        %v365 = vadd.f32 %v363, %v364
        %v366 = vsel %vm360, %v346, 0.0
        %v367 = vsel %vm360, %v350, 0.0
        %v368 = vadd.f32 %v366, %v367
        %v369 = vsel %vm360, %v353, 0.0
        %v370 = vadd.f32 %v368, %v369
        %v371 = vmul.f32 %v365, 0.025
        %v372 = vmul.f32 %v370, 0.025
        %v373 = vmul.f32 %v371, %v371
        %v374 = vmul.f32 %v372, %v372
        %v377 = vrot.slane %v373, 7
        %v378 = vrot.slane %v374, 7
        %v381 = vsub.f32 %v371, %v377
        %v382 = vsub.f32 %v372, %v378
        %v383 = vadd.f32 %v381, 1e-05
        %v384 = vadd.f32 %v382, 1e-05
        %v385 = vrsqrt.pop %v383
        %v386 = vmul.f32 %v385, %v383
        %v387 = vmul.f32 %v386, %v385
        %v388 = vmul.f32 0.5, %v387
        %v389 = vsub.f32 1.5, %v388
        %v390 = vmul.f32 %v385, %v389
        %vm391 = vweird.f32 %v383
        %vm392 = vweird.f32 %v385
        %vm393 = vmor %vm391, %vm392
        %v394 = vsel %vm393, %v385, %v390
        %v395 = vrsqrt.pop %v384
        %v396 = vmul.f32 %v395, %v384
        %v397 = vmul.f32 %v396, %v395
        %v398 = vmul.f32 0.5, %v397
        %v399 = vsub.f32 1.5, %v398
        %v400 = vmul.f32 %v395, %v399
        %vm401 = vweird.f32 %v384
        %vm402 = vweird.f32 %v395
        %vm403 = vmor %vm401, %vm402
        %v404 = vsel %vm403, %v395, %v400
        %v405 = vperm.slane %v371, 0
        %v406 = vperm.slane %v372, 0
        %v407 = vsub.f32 %v334, %v405
        %v408 = vsub.f32 %v335, %v406
        %v409 = vsub.f32 %v336, %v405
        %v410 = vsub.f32 %v337, %v406
        %v411 = vperm.slane %v394, 1
        %v412 = vperm.slane %v404, 1
        %v413 = vmul.f32 %v407, %v411
        %v414 = vmul.f32 %v408, %v412
        %v415 = vmul.f32 %v409, %v411
        %v416 = vmul.f32 %v410, %v412
        %v417 = vld [vmem:[%s2] sm:$0x3]
        %v419 = vperm.slane %v417, 0
        %v420 = vperm.slane %v417, 1
        %v423 = vmul.f32 %v413, %v419
        %v424 = vmul.f32 %v414, %v420
        %v425 = vmul.f32 %v415, %v419
        %v426 = vmul.f32 %v416, %v420
        %v427 = vld [vmem:[%s3] sm:$0x3]
        %v429 = vperm.slane %v427, 0
        %v430 = vperm.slane %v427, 1
        %v433 = vadd.f32 %v423, %v429
        %v434 = vadd.f32 %v424, %v430
        %v435 = vadd.f32 %v425, %v429
        %v436 = vadd.f32 %v426, %v430
        %v437 = vpack.c.bf16 %v434, %v433
        %v438 = vpack.c.bf16 %v436, %v435
        %v439 = vld [vmem:[#allocation2] sm:$0xf]
        %v440 = vld [vmem:[#allocation2 + $0x4] sm:$0xf]
        %v441 = vld [vmem:[#allocation2 + $0x8] sm:$0xf]
        %v442 = vld [vmem:[#allocation2 + $0xc] sm:$0xf]
        %v443 = vld [vmem:[#allocation2 + $0x10] sm:$0xf]
        %v444 = vld [vmem:[#allocation2 + $0x14] sm:$0xf]
        %v445 = vld [vmem:[#allocation2 + $0x18] sm:$0xf]
        %v446 = vld [vmem:[#allocation2 + $0x1c] sm:$0xf]
        %v447 = vld [vmem:[#allocation2 + $0x20] sm:$0xf]
        %v448 = vld [vmem:[#allocation2 + $0x24] sm:$0xf]
        %v449 = vld [vmem:[#allocation2 + $0x28] sm:$0xf]
        %v450 = vld [vmem:[#allocation2 + $0x2c] sm:$0xf]
        %v451 = vld [vmem:[#allocation2 + $0x30] sm:$0xf]
        %v452 = vld [vmem:[#allocation2 + $0x34] sm:$0xf]
        %v453 = vld [vmem:[#allocation2 + $0x38] sm:$0xf]
        %v454 = vld [vmem:[#allocation2 + $0x3c] sm:$0xf]
        %v457 = vunpack.c.l.b16 %v437
        %v458 = vunpack.c.l.b16 %v438
        %v459 = vpack.c.b16 %v458, %v457
        %v477 = vunpack.c.l.b16 %v439
        %v478 = vunpack.c.l.b16 %v440
        %v479 = vunpack.c.l.b16 %v441
        %v480 = vunpack.c.l.b16 %v442
        %v481 = vunpack.c.l.b16 %v443
        %v482 = vunpack.c.l.b16 %v444
        %v483 = vunpack.c.l.b16 %v445
        %v484 = vunpack.c.l.b16 %v446
        %v485 = vunpack.c.l.b16 %v447
        %v486 = vunpack.c.l.b16 %v448
        %v487 = vunpack.c.l.b16 %v449
        %v488 = vunpack.c.l.b16 %v450
        %v489 = vunpack.c.l.b16 %v451
        %v490 = vunpack.c.l.b16 %v452
        %v491 = vunpack.c.l.b16 %v453
        %v492 = vunpack.c.l.b16 %v454
        %v493 = vpack.c.b16 %v478, %v477
        %v494 = vpack.c.b16 %v480, %v479
        %v495 = vpack.c.b16 %v482, %v481
        %v496 = vpack.c.b16 %v484, %v483
        %v497 = vpack.c.b16 %v486, %v485
        %v498 = vpack.c.b16 %v488, %v487
        %v499 = vpack.c.b16 %v490, %v489
        %v500 = vpack.c.b16 %v492, %v491
        %509 = vmatpush.bf16.msra.mxu0 %v500
        %510 = vmatpush.bf16.msra.mxu0 %v499
        %511 = vmatpush.bf16.msra.mxu0 %v498
        %512 = vmatpush.bf16.msra.mxu0 %v497
        %513 = vmatpush.bf16.msra.mxu0 %v496
        %514 = vmatpush.bf16.msra.mxu0 %v495
        %515 = vmatpush.bf16.msra.mxu0 %v494
        %516 = vmatpush.bf16.msra.mxu0 %v493
        %517 = vmatmul.bf16.gmra.mxu0 %v459
        %v518 = vpop.f32.mrf.mxu0
        %v519 = vadd.f32 0.0, %v518
        %v520 = vpop.f32.mrf.mxu0
        %v521 = vadd.f32 0.0, %v520
        %522 = vdwg.mxu0
        %v523 = vld [vmem:[#allocation4] sm:$0xf]
        %v524 = vld [vmem:[#allocation4 + $0x4] sm:$0xf]
        %v525 = vld [vmem:[#allocation4 + $0x8] sm:$0xf]
        %v526 = vld [vmem:[#allocation4 + $0xc] sm:$0xf]
        %v527 = vld [vmem:[#allocation4 + $0x10] sm:$0xf]
        %v528 = vld [vmem:[#allocation4 + $0x14] sm:$0xf]
        %v529 = vld [vmem:[#allocation4 + $0x18] sm:$0xf]
        %v530 = vld [vmem:[#allocation4 + $0x1c] sm:$0xf]
        %v531 = vld [vmem:[#allocation4 + $0x20] sm:$0xf]
        %v532 = vld [vmem:[#allocation4 + $0x24] sm:$0xf]
        %v533 = vld [vmem:[#allocation4 + $0x28] sm:$0xf]
        %v534 = vld [vmem:[#allocation4 + $0x2c] sm:$0xf]
        %v535 = vld [vmem:[#allocation4 + $0x30] sm:$0xf]
        %v536 = vld [vmem:[#allocation4 + $0x34] sm:$0xf]
        %v537 = vld [vmem:[#allocation4 + $0x38] sm:$0xf]
        %v538 = vld [vmem:[#allocation4 + $0x3c] sm:$0xf]
        %v539 = vunpack.c.h.b16 %v437
        %v540 = vunpack.c.h.b16 %v438
        %v541 = vpack.c.b16 %v540, %v539
        %v559 = vunpack.c.l.b16 %v523
        %v560 = vunpack.c.l.b16 %v524
        %v561 = vunpack.c.l.b16 %v525
        %v562 = vunpack.c.l.b16 %v526
        %v563 = vunpack.c.l.b16 %v527
        %v564 = vunpack.c.l.b16 %v528
        %v565 = vunpack.c.l.b16 %v529
        %v566 = vunpack.c.l.b16 %v530
        %v567 = vunpack.c.l.b16 %v531
        %v568 = vunpack.c.l.b16 %v532
        %v569 = vunpack.c.l.b16 %v533
        %v570 = vunpack.c.l.b16 %v534
        %v571 = vunpack.c.l.b16 %v535
        %v572 = vunpack.c.l.b16 %v536
        %v573 = vunpack.c.l.b16 %v537
        %v574 = vunpack.c.l.b16 %v538
        %v575 = vpack.c.b16 %v560, %v559
        %v576 = vpack.c.b16 %v562, %v561
        %v577 = vpack.c.b16 %v564, %v563
        %v578 = vpack.c.b16 %v566, %v565
        %v579 = vpack.c.b16 %v568, %v567
        %v580 = vpack.c.b16 %v570, %v569
        %v581 = vpack.c.b16 %v572, %v571
        %v582 = vpack.c.b16 %v574, %v573
        %591 = vmatpush.bf16.msra.mxu0 %v582
        %592 = vmatpush.bf16.msra.mxu0 %v581
        %593 = vmatpush.bf16.msra.mxu0 %v580
        %594 = vmatpush.bf16.msra.mxu0 %v579
        %595 = vmatpush.bf16.msra.mxu0 %v578
        %596 = vmatpush.bf16.msra.mxu0 %v577
        %597 = vmatpush.bf16.msra.mxu0 %v576
        %598 = vmatpush.bf16.msra.mxu0 %v575
        %599 = vmatmul.bf16.gmra.mxu0 %v541
        %v600 = vpop.f32.mrf.mxu0
        %v601 = vadd.f32 0.0, %v600
        %v602 = vpop.f32.mrf.mxu0
        %v603 = vadd.f32 0.0, %v602
        %604 = vdwg.mxu0
        %605 = vst [vmem:[%s327] sm:$0xff] %v519
        %606 = vst [vmem:[%s327 + $0x8] sm:$0xff] %v601
        %607 = vst [vmem:[%s327 + $0x10] sm:$0xff] %v521
        %608 = vst [vmem:[%s327 + $0x18] sm:$0xff] %v603
        %v609 = vlaneseq
        %v610 = vshrl.u32 %v609, 7
        %v611 = vadd.s32 %v610, 8
        %s612 = smul.u32 %s21, 16
        %v613 = vstv %s612
        %v614 = vadd.s32 %v610, %v613
        %v615 = vadd.s32 %v611, %v613
        %vm616 = vcmp.lt.s32.totalorder %v614, 40
        %vm617 = vcmp.lt.s32.totalorder %v615, 40
        %v618 = vsel %vm616, %v519, 0.0
        %v619 = vsel %vm616, %v601, 0.0
        %v620 = vsel %vm617, %v521, 0.0
        %v621 = vsel %vm617, %v603, 0.0
        %v622 = vadd.f32 %v618, %v620
        %v623 = vrot.slane %v622, 4
        %v624 = vadd.f32 %v622, %v623
        %v625 = vrot.slane %v624, 2
        %v626 = vadd.f32 %v624, %v625
        %v627 = vrot.slane %v626, 1
        %v628 = vadd.f32 %v626, %v627
        %v629 = vadd.f32 %v619, %v621
        %v630 = vrot.slane %v629, 4
        %v631 = vadd.f32 %v629, %v630
        %v632 = vrot.slane %v631, 2
        %v633 = vadd.f32 %v631, %v632
        %v634 = vrot.slane %v633, 1
        %v635 = vadd.f32 %v633, %v634
        %v636 = vmul.f32 %v519, %v618
        %v637 = vmul.f32 %v601, %v619
        %v638 = vmul.f32 %v521, %v620
        %v639 = vmul.f32 %v603, %v621
        %v640 = vadd.f32 %v636, %v638
        %v641 = vrot.slane %v640, 4
        %v642 = vadd.f32 %v640, %v641
        %v643 = vrot.slane %v642, 2
        %v644 = vadd.f32 %v642, %v643
        %v645 = vrot.slane %v644, 1
        %v646 = vadd.f32 %v644, %v645
        %v647 = vadd.f32 %v637, %v639
        %v648 = vrot.slane %v647, 4
        %v649 = vadd.f32 %v647, %v648
        %v650 = vrot.slane %v649, 2
        %v651 = vadd.f32 %v649, %v650
        %v652 = vrot.slane %v651, 1
        %v653 = vadd.f32 %v651, %v652
        %vm654 = vcmask 1040384
        %v655 = vsel %vm654, %v628, %v646
        %v656 = vsel %vm654, %v635, %v653
        %v659 = vrot.slane %v656, 6
        %v660 = vsel %vm360, %v655, %v659
        %662 = vst [vmem:[%s333] sm:$0xf] %v660
        %s663 = smul.u32 2, %s21
        %p664 = scmp.lt.s32.totalorder %s663, 5
        %s665 = scalar_select %p664, %s663, 5
        %s666 = smul.addr %s665, 2
        %s667 = smul.addr %s666, 8
        %s668 = scalar_lea.vmem %s6, %s667
        %p669 = scmp.lt.s32.totalorder %s21, 2
        %s670 = scalar_select %p669, %s21, 2
        %s671 = smul.addr %s670, 2
        %s672 = smul.addr %s671, 2
        %s673 = scalar_lea.vmem %s7, %s672
        // Predicated region
        $region53: #{affine_coupling.8} parent=43 // pred_check
          %p674 = pneg %p170
        $region54: #{affine_coupling.8} parent=43 // pred_check_branch
          %676 = sbr.rel (%p674) target = $region56
        $region55: #{affine_coupling.8} parent=43 // pred_region
          %s677 = smul.u32 2, %s21
        $region56: #{affine_coupling.8} parent=43 // pred_fallthru
          _
        // Predicated region
        $region57: #{affine_coupling.8} parent=43 // pred_check
          %p678 = pneg %p196
        $region58: #{affine_coupling.8} parent=43 // pred_check_branch
          %680 = sbr.rel (%p678) target = $region60
        $region59: #{affine_coupling.8} parent=43 // pred_region
          _
        $region60: #{affine_coupling.8} parent=43 // pred_fallthru
          _
      $region44: #{affine_coupling.8} parent=5 // pred_fallthru
        _
      %p681 = scmp.le.s32.totalorder 2, %s16
      // Predicated region
      $region61: #{affine_coupling.8} parent=5 // pred_check
        %p682 = pneg %p681
      $region62: #{affine_coupling.8} parent=5 // pred_check_branch
        %684 = sbr.rel (%p682) target = $region64
      $region63: #{affine_coupling.8} parent=5 // pred_region
        %s685 = ssub.s32 %s16, 2
        // Predicated region
        $region65: #{affine_coupling.8} parent=63 // pred_check
          %p686 = pneg %p176
        $region66: #{affine_coupling.8} parent=63 // pred_check_branch
          %688 = sbr.rel (%p686) target = $region68
        $region67: #{affine_coupling.8} parent=63 // pred_region
          %s689 = smul.u32 2, %s22
          %p690 = scmp.lt.s32.totalorder %s689, 5
          %s691 = scalar_select %p690, %s689, 5
          %s692 = smul.addr %s691, 2
          %s693 = smul.addr %s692, 8
          %s694 = scalar_lea.vmem %s6, %s693
        $region68: #{affine_coupling.8} parent=63 // pred_fallthru
          _
        // Predicated region
        $region69: #{affine_coupling.8} parent=63 // pred_check
          %p695 = pneg %p202
        $region70: #{affine_coupling.8} parent=63 // pred_check_branch
          %697 = sbr.rel (%p695) target = $region72
        $region71: #{affine_coupling.8} parent=63 // pred_region
          %p698 = scmp.lt.s32.totalorder %s22, 2
          %s699 = scalar_select %p698, %s22, 2
          %s700 = smul.addr %s699, 2
          %s701 = smul.addr %s700, 2
          %s702 = scalar_lea.vmem %s7, %s701
        $region72: #{affine_coupling.8} parent=63 // pred_fallthru
          _
      $region64: #{affine_coupling.8} parent=5 // pred_fallthru
        _
    $region6: #{affine_coupling.8} parent=1 // loop_footer
      %s20 = sadd.s32 1, %s16
    $region7: #{affine_coupling.8} parent=1 // loop_footer_branch
      %15 = sbr.rel target = $region3
    $region8: #{affine_coupling.8} parent=1 // loop_exit
      _
    %703 = vsyncpa [#allocation3], 1
    %s704 = scalar_lea.sflag [#allocation3], 1
    %705 = vsyncpa %s704, 1
    %706 = vsyncpa [#allocation5], 1

// kernel: affine_coupling.9
$region0: #{affine_coupling.9}
  #allocation0 [shape = 'u32[]', space=smem, size = 0x4, offset = 0x4, fixed_abs, tag = 'smem constant byte address 0x4 - core index']
  #allocation1 [shape = 'u32[72,128]{1,0:T(1,128)}', space=vmem, size = 0x9000, scoped, tag = 'internal scratch']
  %s0 = inlined_call_operand.vmem [shape: f32[48,128], index: 0, kind: input, shape index: {}]
  %s1 = inlined_call_operand.vmem [shape: f32[48,1], index: 1, kind: input, shape index: {}]
  %s2 = inlined_call_operand.vmem [shape: f32[1,128], index: 2, kind: input, shape index: {}]
  %s3 = inlined_call_operand.vmem [shape: f32[48,256], index: 3, kind: input, shape index: {}]
  %s4 = inlined_call_operand.vmem [shape: f32[3,2,256], index: 4, kind: input, shape index: {}]
  %s5 = inlined_call_operand.vmem [shape: f32[1,256], index: 5, kind: input, shape index: {}]
  %s6 = inlined_call_operand.vmem [shape: f32[1,256], index: 6, kind: input, shape index: {}]
  %s7 = inlined_call_operand.vmem [shape: f32[48,128], index: 7, kind: output, shape index: {0}]
  %s8 = inlined_call_operand.vmem [shape: f32[48,1], index: 8, kind: output, shape index: {1}]
  %9 = xla_tuple %s7, %s8
  %s10 = sld [smem:[#allocation0]]
  $region69: #{affine_coupling.9} parent=0
    _
  %s12 = ssub.s32 1, %s10
  %s13 = scalar_select 0, %s12, %s10
  loop: start=0, step=1, limit=5
  $region2: #{affine_coupling.9} parent=0 // loop_pre_header
    _
  $region3: #{affine_coupling.9} parent=0 // loop_header
    %s15 = sphi 0, %s19
    %p16 = scmp.ge.s32.totalorder %s15, 5
    %s25 = sphi 0, %s27
    %s28 = sphi 0, %s25
    %s29 = sphi 0, %s28
    %s45 = sphi 0, %s29
    %s51 = sphi 0, %s53
    %s54 = sphi 0, %s51
    %s55 = sphi 0, %s54
    %s71 = sphi 0, %s55
    %s75 = sphi 0, %s75
    %s77 = sphi 0, %s75
    %s78 = sphi 0, %s77
    %s92 = sphi 0, %s78
    %s98 = sphi 0, %s100
    %s101 = sphi 0, %s98
    %s102 = sphi 0, %s101
    %s118 = sphi 0, %s102
    %s122 = sphi 0, %s122
    %s124 = sphi 0, %s122
    %s125 = sphi 0, %s124
    %s139 = sphi 0, %s125
    %s143 = sphi 0, %s143
    %s145 = sphi 0, %s143
    %s146 = sphi 0, %s145
    %s160 = sphi 0, %s146
    %s164 = sphi 0, %s164
    %s166 = sphi 0, %s164
    %s167 = sphi 0, %s166
    %s181 = sphi 0, %s167
    %s187 = sphi 0, %s189
    %s190 = sphi 0, %s187
    %s191 = sphi 0, %s190
    %s207 = sphi 0, %s191
    %s213 = sphi 0, %s215
    %s216 = sphi 0, %s213
    %s217 = sphi 0, %s216
    %s233 = sphi 0, %s217
  $region4: #{affine_coupling.9} parent=0 // loop_header_branch
    %18 = sbr.rel (%p16) target = $region8
  $region5: #{affine_coupling.9} parent=0 // loop_body
    %s20 = ssub.s32 %s15, 1
    %s21 = ssub.s32 %s15, 2
    %s22 = sadd.s32 %s15, 1
    %s23 = ssub.s32 %s15, %s22
    %p24 = scmp.eq.s32.totalorder %s23, 0
    %s26 = sadd.s32 %s25, 1
    %s27 = scalar_select %p24, %s25, %s26
    %p30 = pneg %p24
    %p31 = scmp.eq.s32.totalorder %s15, 2
    %p32 = por %p30, %p31
    %p33 = scmp.ne.s32.totalorder %s25, %s28
    %p34 = scmp.eq.s32.totalorder %s15, 0
    %p35 = por %p33, %p34
    %p36 = scmp.ne.s32.totalorder %s25, %s28
    %p37 = scmp.eq.s32.totalorder %s20, 2
    %p38 = por %p36, %p37
    %p39 = scmp.ne.s32.totalorder %s28, %s29
    %p40 = scmp.eq.s32.totalorder %s20, 0
    %p41 = por %p39, %p40
    %p42 = scmp.ne.s32.totalorder %s28, %s29
    %p43 = scmp.eq.s32.totalorder %s21, 2
    %p44 = por %p42, %p43
    %p46 = scmp.ne.s32.totalorder %s29, %s45
    %p47 = scmp.eq.s32.totalorder %s21, 0
    %p48 = por %p46, %p47
    %s49 = ssub.s32 %s15, %s22
    %p50 = scmp.eq.s32.totalorder %s49, 0
    %s52 = sadd.s32 %s51, 1
    %s53 = scalar_select %p50, %s51, %s52
    %p56 = pneg %p50
    %p57 = scmp.eq.s32.totalorder %s15, 2
    %p58 = por %p56, %p57
    %p59 = scmp.ne.s32.totalorder %s51, %s54
    %p60 = scmp.eq.s32.totalorder %s15, 0
    %p61 = por %p59, %p60
    %p62 = scmp.ne.s32.totalorder %s51, %s54
    %p63 = scmp.eq.s32.totalorder %s20, 2
    %p64 = por %p62, %p63
    %p65 = scmp.ne.s32.totalorder %s54, %s55
    %p66 = scmp.eq.s32.totalorder %s20, 0
    %p67 = por %p65, %p66
    %p68 = scmp.ne.s32.totalorder %s54, %s55
    %p69 = scmp.eq.s32.totalorder %s21, 2
    %p70 = por %p68, %p69
    %p72 = scmp.ne.s32.totalorder %s55, %s71
    %p73 = scmp.eq.s32.totalorder %s21, 0
    %p74 = por %p72, %p73
    %s76 = sadd.s32 %s75, 1
    %p79 = scmp.eq.s32.totalorder %s15, 2
    %p80 = scmp.ne.s32.totalorder %s75, %s77
    %p81 = scmp.eq.s32.totalorder %s15, 0
    %p82 = por %p80, %p81
    %p83 = scmp.ne.s32.totalorder %s75, %s77
    %p84 = scmp.eq.s32.totalorder %s20, 2
    %p85 = por %p83, %p84
    %p86 = scmp.ne.s32.totalorder %s77, %s78
    %p87 = scmp.eq.s32.totalorder %s20, 0
    %p88 = por %p86, %p87
    %p89 = scmp.ne.s32.totalorder %s77, %s78
    %p90 = scmp.eq.s32.totalorder %s21, 2
    %p91 = por %p89, %p90
    %p93 = scmp.ne.s32.totalorder %s78, %s92
    %p94 = scmp.eq.s32.totalorder %s21, 0
    %p95 = por %p93, %p94
    %s96 = ssub.s32 %s15, %s22
    %p97 = scmp.eq.s32.totalorder %s96, 0
    %s99 = sadd.s32 %s98, 1
    %s100 = scalar_select %p97, %s98, %s99
    %p103 = pneg %p97
    %p104 = scmp.eq.s32.totalorder %s15, 2
    %p105 = por %p103, %p104
    %p106 = scmp.ne.s32.totalorder %s98, %s101
    %p107 = scmp.eq.s32.totalorder %s15, 0
    %p108 = por %p106, %p107
    %p109 = scmp.ne.s32.totalorder %s98, %s101
    %p110 = scmp.eq.s32.totalorder %s20, 2
    %p111 = por %p109, %p110
    %p112 = scmp.ne.s32.totalorder %s101, %s102
    %p113 = scmp.eq.s32.totalorder %s20, 0
    %p114 = por %p112, %p113
    %p115 = scmp.ne.s32.totalorder %s101, %s102
    %p116 = scmp.eq.s32.totalorder %s21, 2
    %p117 = por %p115, %p116
    %p119 = scmp.ne.s32.totalorder %s102, %s118
    %p120 = scmp.eq.s32.totalorder %s21, 0
    %p121 = por %p119, %p120
    %s123 = sadd.s32 %s122, 1
    %p126 = scmp.eq.s32.totalorder %s15, 2
    %p127 = scmp.ne.s32.totalorder %s122, %s124
    %p128 = scmp.eq.s32.totalorder %s15, 0
    %p129 = por %p127, %p128
    %p130 = scmp.ne.s32.totalorder %s122, %s124
    %p131 = scmp.eq.s32.totalorder %s20, 2
    %p132 = por %p130, %p131
    %p133 = scmp.ne.s32.totalorder %s124, %s125
    %p134 = scmp.eq.s32.totalorder %s20, 0
    %p135 = por %p133, %p134
    %p136 = scmp.ne.s32.totalorder %s124, %s125
    %p137 = scmp.eq.s32.totalorder %s21, 2
    %p138 = por %p136, %p137
    %p140 = scmp.ne.s32.totalorder %s125, %s139
    %p141 = scmp.eq.s32.totalorder %s21, 0
    %p142 = por %p140, %p141
    %s144 = sadd.s32 %s143, 1
    %p147 = scmp.eq.s32.totalorder %s15, 2
    %p148 = scmp.ne.s32.totalorder %s143, %s145
    %p149 = scmp.eq.s32.totalorder %s15, 0
    %p150 = por %p148, %p149
    %p151 = scmp.ne.s32.totalorder %s143, %s145
    %p152 = scmp.eq.s32.totalorder %s20, 2
    %p153 = por %p151, %p152
    %p154 = scmp.ne.s32.totalorder %s145, %s146
    %p155 = scmp.eq.s32.totalorder %s20, 0
    %p156 = por %p154, %p155
    %p157 = scmp.ne.s32.totalorder %s145, %s146
    %p158 = scmp.eq.s32.totalorder %s21, 2
    %p159 = por %p157, %p158
    %p161 = scmp.ne.s32.totalorder %s146, %s160
    %p162 = scmp.eq.s32.totalorder %s21, 0
    %p163 = por %p161, %p162
    %s165 = sadd.s32 %s164, 1
    %p168 = scmp.eq.s32.totalorder %s15, 2
    %p169 = scmp.ne.s32.totalorder %s164, %s166
    %p170 = scmp.eq.s32.totalorder %s15, 0
    %p171 = por %p169, %p170
    %p172 = scmp.ne.s32.totalorder %s164, %s166
    %p173 = scmp.eq.s32.totalorder %s20, 2
    %p174 = por %p172, %p173
    %p175 = scmp.ne.s32.totalorder %s166, %s167
    %p176 = scmp.eq.s32.totalorder %s20, 0
    %p177 = por %p175, %p176
    %p178 = scmp.ne.s32.totalorder %s166, %s167
    %p179 = scmp.eq.s32.totalorder %s21, 2
    %p180 = por %p178, %p179
    %p182 = scmp.ne.s32.totalorder %s167, %s181
    %p183 = scmp.eq.s32.totalorder %s21, 0
    %p184 = por %p182, %p183
    %s185 = ssub.s32 %s15, %s22
    %p186 = scmp.eq.s32.totalorder %s185, 0
    %s188 = sadd.s32 %s187, 1
    %s189 = scalar_select %p186, %s187, %s188
    %p192 = pneg %p186
    %p193 = scmp.eq.s32.totalorder %s15, 2
    %p194 = por %p192, %p193
    %p195 = scmp.ne.s32.totalorder %s187, %s190
    %p196 = scmp.eq.s32.totalorder %s15, 0
    %p197 = por %p195, %p196
    %p198 = scmp.ne.s32.totalorder %s187, %s190
    %p199 = scmp.eq.s32.totalorder %s20, 2
    %p200 = por %p198, %p199
    %p201 = scmp.ne.s32.totalorder %s190, %s191
    %p202 = scmp.eq.s32.totalorder %s20, 0
    %p203 = por %p201, %p202
    %p204 = scmp.ne.s32.totalorder %s190, %s191
    %p205 = scmp.eq.s32.totalorder %s21, 2
    %p206 = por %p204, %p205
    %p208 = scmp.ne.s32.totalorder %s191, %s207
    %p209 = scmp.eq.s32.totalorder %s21, 0
    %p210 = por %p208, %p209
    %s211 = ssub.s32 %s15, %s22
    %p212 = scmp.eq.s32.totalorder %s211, 0
    %s214 = sadd.s32 %s213, 1
    %s215 = scalar_select %p212, %s213, %s214
    %p218 = pneg %p212
    %p219 = scmp.eq.s32.totalorder %s15, 2
    %p220 = por %p218, %p219
    %p221 = scmp.ne.s32.totalorder %s213, %s216
    %p222 = scmp.eq.s32.totalorder %s15, 0
    %p223 = por %p221, %p222
    %p224 = scmp.ne.s32.totalorder %s213, %s216
    %p225 = scmp.eq.s32.totalorder %s20, 2
    %p226 = por %p224, %p225
    %p227 = scmp.ne.s32.totalorder %s216, %s217
    %p228 = scmp.eq.s32.totalorder %s20, 0
    %p229 = por %p227, %p228
    %p230 = scmp.ne.s32.totalorder %s216, %s217
    %p231 = scmp.eq.s32.totalorder %s21, 2
    %p232 = por %p230, %p231
    %p234 = scmp.ne.s32.totalorder %s217, %s233
    %p235 = scmp.eq.s32.totalorder %s21, 0
    %p236 = por %p234, %p235
    %p237 = scmp.le.s32.totalorder 1, %s15
    %p238 = scmp.lt.s32.totalorder %s15, 4
    %p239 = pnand %p237, %p238
    %p240 = pneg %p239
    // Predicated region
    $region9: #{affine_coupling.9} parent=5 // pred_check
      _
    $region10: #{affine_coupling.9} parent=5 // pred_check_branch
      %242 = sbr.rel (%p239) target = $region12
    $region11: #{affine_coupling.9} parent=5 // pred_region
      %s243 = ssub.s32 %s15, 1
      // Predicated region
      $region13: #{affine_coupling.9} parent=11 // pred_check
        %p244 = pneg %p88
      $region14: #{affine_coupling.9} parent=11 // pred_check_branch
        %246 = sbr.rel (%p244) target = $region16
      $region15: #{affine_coupling.9} parent=11 // pred_region
        _
      $region16: #{affine_coupling.9} parent=11 // pred_fallthru
        _
      // Predicated region
      $region17: #{affine_coupling.9} parent=11 // pred_check
        %p247 = pneg %p135
      $region18: #{affine_coupling.9} parent=11 // pred_check_branch
        %249 = sbr.rel (%p247) target = $region20
      $region19: #{affine_coupling.9} parent=11 // pred_region
        _
      $region20: #{affine_coupling.9} parent=11 // pred_fallthru
        _
      // Predicated region
      $region21: #{affine_coupling.9} parent=11 // pred_check
        %p250 = pneg %p156
      $region22: #{affine_coupling.9} parent=11 // pred_check_branch
        %252 = sbr.rel (%p250) target = $region24
      $region23: #{affine_coupling.9} parent=11 // pred_region
        _
      $region24: #{affine_coupling.9} parent=11 // pred_fallthru
        _
      // Predicated region
      $region25: #{affine_coupling.9} parent=11 // pred_check
        %p253 = pneg %p177
      $region26: #{affine_coupling.9} parent=11 // pred_check_branch
        %255 = sbr.rel (%p253) target = $region28
      $region27: #{affine_coupling.9} parent=11 // pred_region
        _
      $region28: #{affine_coupling.9} parent=11 // pred_fallthru
        _
    $region12: #{affine_coupling.9} parent=5 // pred_fallthru
      _
    %p256 = scmp.lt.s32.totalorder %s15, 3
    // Predicated region
    $region29: #{affine_coupling.9} parent=5 // pred_check
      %p257 = pneg %p256
    $region30: #{affine_coupling.9} parent=5 // pred_check_branch
      %259 = sbr.rel (%p257) target = $region32
    $region31: #{affine_coupling.9} parent=5 // pred_region
      // Predicated region
      $region33: #{affine_coupling.9} parent=31 // pred_check
        %p260 = pneg %p35
      $region34: #{affine_coupling.9} parent=31 // pred_check_branch
        %262 = sbr.rel (%p260) target = $region36
      $region35: #{affine_coupling.9} parent=31 // pred_region
        %s263 = smul.u32 2, %s15
        %p264 = scmp.lt.s32.totalorder %s263, 5
        %s265 = scalar_select %p264, %s263, 5
        %s266 = smul.addr %s265, 8
        %s267 = scalar_lea.vmem %s0, %s266
        %s268 = smul.u32 2, %s15
      $region36: #{affine_coupling.9} parent=31 // pred_fallthru
        _
      // Predicated region
      $region37: #{affine_coupling.9} parent=31 // pred_check
        %p269 = pneg %p61
      $region38: #{affine_coupling.9} parent=31 // pred_check_branch
        %271 = sbr.rel (%p269) target = $region40
      $region39: #{affine_coupling.9} parent=31 // pred_region
        %s272 = smul.u32 2, %s15
        %p273 = scmp.lt.s32.totalorder %s272, 5
        %s274 = scalar_select %p273, %s272, 5
        %s275 = smul.addr %s274, 8
        %s276 = scalar_lea.vmem %s1, %s275
        %s277 = smul.u32 2, %s15
      $region40: #{affine_coupling.9} parent=31 // pred_fallthru
        _
      // Predicated region
      $region41: #{affine_coupling.9} parent=31 // pred_check
        %p278 = pneg %p108
      $region42: #{affine_coupling.9} parent=31 // pred_check_branch
        %280 = sbr.rel (%p278) target = $region44
      $region43: #{affine_coupling.9} parent=31 // pred_region
        %s281 = smul.u32 2, %s15
        %p282 = scmp.lt.s32.totalorder %s281, 5
        %s283 = scalar_select %p282, %s281, 5
        %s284 = smul.addr %s283, 2
        %s285 = smul.addr %s284, 8
        %s286 = scalar_lea.vmem %s3, %s285
        %s287 = smul.u32 2, %s15
      $region44: #{affine_coupling.9} parent=31 // pred_fallthru
        _
    $region32: #{affine_coupling.9} parent=5 // pred_fallthru
      _
    %p288 = scmp.le.s32.totalorder 1, %s15
    %p289 = scmp.lt.s32.totalorder %s15, 4
    %p290 = pnand %p288, %p289
    %p291 = pneg %p290
    // Predicated region
    $region45: #{affine_coupling.9} parent=5 // pred_check
      _
    $region46: #{affine_coupling.9} parent=5 // pred_check_branch
      %293 = sbr.rel (%p290) target = $region48
    $region47: #{affine_coupling.9} parent=5 // pred_region
      %s294 = ssub.s32 %s15, 1
      %s295 = smul.u32 2, %s20
      %p296 = scmp.lt.s32.totalorder %s295, 5
      %s297 = scalar_select %p296, %s295, 5
      %s298 = smul.addr %s297, 8
      %s299 = scalar_lea.vmem %s0, %s298
      %p300 = pneg %p41
      %p301 = pneg %p38
      %s302 = smul.u32 2, %s20
      %p303 = scmp.lt.s32.totalorder %s302, 5
      %s304 = scalar_select %p303, %s302, 5
      %s305 = smul.addr %s304, 8
      %s306 = scalar_lea.vmem %s1, %s305
      %p307 = pneg %p67
      %p308 = pneg %p64
      %p309 = pneg %p88
      %p310 = pneg %p85
      %s311 = smul.u32 2, %s20
      %p312 = scmp.lt.s32.totalorder %s311, 5
      %s313 = scalar_select %p312, %s311, 5
      %s314 = smul.addr %s313, 2
      %s315 = smul.addr %s314, 8
      %s316 = scalar_lea.vmem %s3, %s315
      %p317 = pneg %p114
      %p318 = pneg %p111
      %p319 = pneg %p135
      %p320 = pneg %p132
      %p321 = pneg %p156
      %p322 = pneg %p153
      %p323 = pneg %p177
      %p324 = pneg %p174
      %p325 = pneg %p203
      %p326 = pneg %p200
      %s327 = smul.u32 2, %s20
      %p328 = scmp.lt.s32.totalorder %s327, 5
      %s329 = scalar_select %p328, %s327, 5
      %s330 = smul.addr %s329, 8
      %s331 = scalar_lea.vmem %s7, %s330
      %p332 = pneg %p229
      %p333 = pneg %p226
      %s334 = smul.u32 2, %s20
      %p335 = scmp.lt.s32.totalorder %s334, 5
      %s336 = scalar_select %p335, %s334, 5
      %s337 = smul.addr %s336, 8
      %s338 = scalar_lea.vmem %s8, %s337
      %s339 = smul.u32 2, %s20
      %p340 = scmp.lt.s32.totalorder %s339, 5
      %s341 = scalar_select %p340, %s339, 5
      %s342 = smul.addr %s341, 8
      %s343 = scalar_lea.vmem %s0, %s342
      %s344 = smul.u32 2, %s20
      %s345 = smul.u32 2, %s20
      %p346 = scmp.lt.s32.totalorder %s345, 5
      %s347 = scalar_select %p346, %s345, 5
      %s348 = smul.addr %s347, 8
      %s349 = scalar_lea.vmem %s1, %s348
      %s350 = smul.u32 2, %s20
      %s351 = smul.u32 2, %s20
      %p352 = scmp.lt.s32.totalorder %s351, 5
      %s353 = scalar_select %p352, %s351, 5
      %s354 = smul.addr %s353, 2
      %s355 = smul.addr %s354, 8
      %s356 = scalar_lea.vmem %s3, %s355
      %s357 = smul.u32 2, %s20
      %s358 = smul.u32 2, %s20
      %p359 = scmp.lt.s32.totalorder %s358, 5
      %s360 = scalar_select %p359, %s358, 5
      %s361 = smul.addr %s360, 8
      %s362 = scalar_lea.vmem %s7, %s361
      %s363 = smul.u32 2, %s20
      %s364 = smul.u32 2, %s20
      %p365 = scmp.lt.s32.totalorder %s364, 5
      %s366 = scalar_select %p365, %s364, 5
      %s367 = smul.addr %s366, 8
      %s368 = scalar_lea.vmem %s8, %s367
      %s369 = smul.u32 2, %s20
      %v370 = vld [vmem:[%s4] sm:$0xf]
      %v371 = vld [vmem:[%s4 + $0x4] sm:$0xf]
      %v372 = vld [vmem:[%s4 + $0x8] sm:$0xf]
      %376 = vst [vmem:[#allocation1] ss:$4 sm:$0xff] %v370
      %v377 = vld.sshfl [vmem:[#allocation1] sm:$0xff pattern:$0x73625140]
      %v378 = vld.sshfl [vmem:[#allocation1 + $0x8] sm:$0xff pattern:$0x73625140]
      %s379 = scalar_lea.vmem [#allocation1], 32
      %380 = vst [vmem:[%s379] ss:$4 sm:$0xff] %v371
      %v381 = vld.sshfl [vmem:[#allocation1 + $0x20] sm:$0xff pattern:$0x73625140]
      %v382 = vld.sshfl [vmem:[#allocation1 + $0x28] sm:$0xff pattern:$0x73625140]
      %383 = vst [vmem:[#allocation1] ss:$4 sm:$0xff] %v372
      %v384 = vld.sshfl [vmem:[#allocation1] sm:$0xff pattern:$0x73625140]
      %v385 = vld.sshfl [vmem:[#allocation1 + $0x8] sm:$0xff pattern:$0x73625140]
      %vm392 = vcmask 1041408
      %v393 = vsel %vm392, %v377, 0.0
      %v394 = vsel %vm392, %v381, 0.0
      %v395 = vadd.f32 %v393, %v394
      %v396 = vsel %vm392, %v384, 0.0
      %v397 = vadd.f32 %v395, %v396
      %v398 = vsel %vm392, %v378, 0.0
      %v399 = vsel %vm392, %v382, 0.0
      %v400 = vadd.f32 %v398, %v399
      %v401 = vsel %vm392, %v385, 0.0
      %v402 = vadd.f32 %v400, %v401
      %v403 = vmul.f32 %v397, 0.025
      %v404 = vmul.f32 %v402, 0.025
      %v405 = vmul.f32 %v403, %v403
      %v406 = vmul.f32 %v404, %v404
      %v409 = vrot.slane %v405, 7
      %v410 = vrot.slane %v406, 7
      %v413 = vsub.f32 %v403, %v409
      %v414 = vsub.f32 %v404, %v410
      %v415 = vadd.f32 %v413, 1e-05
      %v416 = vadd.f32 %v414, 1e-05
      %v417 = vrsqrt.pop %v415
      %v418 = vmul.f32 %v417, %v415
      %v419 = vmul.f32 %v418, %v417
      %v420 = vmul.f32 0.5, %v419
      %v421 = vsub.f32 1.5, %v420
      %v422 = vmul.f32 %v417, %v421
      %vm423 = vweird.f32 %v415
      %vm424 = vweird.f32 %v417
      %vm425 = vmor %vm423, %vm424
      %v426 = vsel %vm425, %v417, %v422
      %v427 = vrsqrt.pop %v416
      %v428 = vmul.f32 %v427, %v416
      %v429 = vmul.f32 %v428, %v427
      %v430 = vmul.f32 0.5, %v429
      %v431 = vsub.f32 1.5, %v430
      %v432 = vmul.f32 %v427, %v431
      %vm433 = vweird.f32 %v416
      %vm434 = vweird.f32 %v427
      %vm435 = vmor %vm433, %vm434
      %v436 = vsel %vm435, %v427, %v432
      %v437 = vld [vmem:[%s356] sm:$0xff]
      %v438 = vld [vmem:[%s356 + $0x8] sm:$0xff]
      %v439 = vld [vmem:[%s356 + $0x10] sm:$0xff]
      %v440 = vld [vmem:[%s356 + $0x18] sm:$0xff]
      %v441 = vperm.slane %v403, 0
      %v442 = vperm.slane %v404, 0
      %v443 = vsub.f32 %v437, %v441
      %v444 = vsub.f32 %v438, %v442
      %v445 = vsub.f32 %v439, %v441
      %v446 = vsub.f32 %v440, %v442
      %v447 = vperm.slane %v426, 1
      %v448 = vperm.slane %v436, 1
      %v449 = vmul.f32 %v443, %v447
      %v450 = vmul.f32 %v444, %v448
      %v451 = vmul.f32 %v445, %v447
      %v452 = vmul.f32 %v446, %v448
      %v453 = vld [vmem:[%s5] sm:$0x3]
      %v455 = vperm.slane %v453, 0
      %v456 = vperm.slane %v453, 1
      %v459 = vmul.f32 %v449, %v455
      %v460 = vmul.f32 %v450, %v456
      %v461 = vmul.f32 %v451, %v455
      %v462 = vmul.f32 %v452, %v456
      %v463 = vld [vmem:[%s6] sm:$0x3]
      %v465 = vperm.slane %v463, 0
      %v466 = vperm.slane %v463, 1
      %v469 = vadd.f32 %v459, %v465
      %v470 = vadd.f32 %v460, %v466
      %v471 = vadd.f32 %v461, %v465
      %v472 = vadd.f32 %v462, %v466
      %v473 = vtanh.pop %v469
      %v474 = vtanh.pop %v471
      %v475 = vld [vmem:[%s2] sm:$0x1]
      %v476 = vsub.f32 1.0, %v475
      %v477 = vld [vmem:[%s343] sm:$0xff]
      %v478 = vld [vmem:[%s343 + $0x8] sm:$0xff]
      %v480 = vperm.slane %v475, 0
      %v482 = vmul.f32 %v480, %v477
      %v483 = vmul.f32 %v480, %v478
      %v485 = vperm.slane %v476, 0
      %v487 = vmul.f32 %v485, %v477
      %v488 = vmul.f32 %v485, %v478
      %v489 = vmul.f32 %v473, 1.442695
      %v490 = vpow.pop %v489
      %v491 = vmul.f32 %v474, 1.442695
      %v492 = vpow.pop %v491
      %v493 = vmul.f32 %v487, %v490
      %v494 = vmul.f32 %v488, %v492
      %v495 = vadd.f32 %v482, %v493
      %v496 = vadd.f32 %v483, %v494
      %v497 = vmul.f32 %v470, %v485
      %v498 = vmul.f32 %v472, %v485
      %v499 = vadd.f32 %v495, %v497
      %v500 = vadd.f32 %v496, %v498
      %501 = vst [vmem:[%s362] sm:$0xff] %v499
      %502 = vst [vmem:[%s362 + $0x8] sm:$0xff] %v500
      %v503 = vld [vmem:[%s349] sm:$0xff]
      %v504 = vld [vmem:[%s349 + $0x8] sm:$0xff]
      %505 = vadd.xlane.f32.xlu0 %v473
      %v506 = vpop.xlane.xlu0 %505
      %507 = vadd.xlane.f32.xlu0 %v474
      %v508 = vpop.xlane.xlu0 %507
      %v509 = vsub.f32 %v503, %v506
      %v510 = vsub.f32 %v504, %v508
      %vm511 = vcmask 7168
      %512 = vst.msk [vmem:[%s368] sm:$0xff] %vm511, %v509
      %513 = vst.msk [vmem:[%s368 + $0x8] sm:$0xff] %vm511, %v510
      %s514 = smul.u32 2, %s20
      %p515 = scmp.lt.s32.totalorder %s514, 5
      %s516 = scalar_select %p515, %s514, 5
      %s517 = smul.addr %s516, 8
      %s518 = scalar_lea.vmem %s7, %s517
      %s519 = smul.u32 2, %s20
      %p520 = scmp.lt.s32.totalorder %s519, 5
      %s521 = scalar_select %p520, %s519, 5
      %s522 = smul.addr %s521, 8
      %s523 = scalar_lea.vmem %s8, %s522
      // Predicated region
      $region49: #{affine_coupling.9} parent=47 // pred_check
        %p524 = pneg %p200
      $region50: #{affine_coupling.9} parent=47 // pred_check_branch
        %526 = sbr.rel (%p524) target = $region52
      $region51: #{affine_coupling.9} parent=47 // pred_region
        %s527 = smul.u32 2, %s20
      $region52: #{affine_coupling.9} parent=47 // pred_fallthru
        _
      // Predicated region
      $region53: #{affine_coupling.9} parent=47 // pred_check
        %p528 = pneg %p226
      $region54: #{affine_coupling.9} parent=47 // pred_check_branch
        %530 = sbr.rel (%p528) target = $region56
      $region55: #{affine_coupling.9} parent=47 // pred_region
        %s531 = smul.u32 2, %s20
      $region56: #{affine_coupling.9} parent=47 // pred_fallthru
        _
    $region48: #{affine_coupling.9} parent=5 // pred_fallthru
      _
    %p532 = scmp.le.s32.totalorder 2, %s15
    // Predicated region
    $region57: #{affine_coupling.9} parent=5 // pred_check
      %p533 = pneg %p532
    $region58: #{affine_coupling.9} parent=5 // pred_check_branch
      %535 = sbr.rel (%p533) target = $region60
    $region59: #{affine_coupling.9} parent=5 // pred_region
      %s536 = ssub.s32 %s15, 2
      // Predicated region
      $region61: #{affine_coupling.9} parent=59 // pred_check
        %p537 = pneg %p206
      $region62: #{affine_coupling.9} parent=59 // pred_check_branch
        %539 = sbr.rel (%p537) target = $region64
      $region63: #{affine_coupling.9} parent=59 // pred_region
        %s540 = smul.u32 2, %s21
        %p541 = scmp.lt.s32.totalorder %s540, 5
        %s542 = scalar_select %p541, %s540, 5
        %s543 = smul.addr %s542, 8
        %s544 = scalar_lea.vmem %s7, %s543
      $region64: #{affine_coupling.9} parent=59 // pred_fallthru
        _
      // Predicated region
      $region65: #{affine_coupling.9} parent=59 // pred_check
        %p545 = pneg %p232
      $region66: #{affine_coupling.9} parent=59 // pred_check_branch
        %547 = sbr.rel (%p545) target = $region68
      $region67: #{affine_coupling.9} parent=59 // pred_region
        %s548 = smul.u32 2, %s21
        %p549 = scmp.lt.s32.totalorder %s548, 5
        %s550 = scalar_select %p549, %s548, 5
        %s551 = smul.addr %s550, 8
        %s552 = scalar_lea.vmem %s8, %s551
      $region68: #{affine_coupling.9} parent=59 // pred_fallthru
        _
    $region60: #{affine_coupling.9} parent=5 // pred_fallthru
      _
  $region6: #{affine_coupling.9} parent=0 // loop_footer
    %s19 = sadd.s32 1, %s15
  $region7: #{affine_coupling.9} parent=0 // loop_footer_branch
    %14 = sbr.rel target = $region3
  $region8: #{affine_coupling.9} parent=0 // loop_exit
    _

</llo_original>
